<compile_context>
chip_gen: v5e
topology: v5e:2x2
jax: 0.10.0
libtpu: 0.0.40
codegen_flags: <defaults>
</compile_context>

<pallas_src>
import math
from functools import partial

import jax
import jax.numpy as jnp
from jax.experimental import pallas as pl
from jax.experimental.pallas import tpu as pltpu


_STACKED_ORDER = (
    "ln1_w", "ln1_b",
    "wqkv", "bqkv",
    "wo", "bo",
    "ln2_w", "ln2_b",
    "w1", "b1", "w2", "b2",
)

# MXU weight operands that get pre-cast to bf16 when use_bf16_matmul=True.
_MATMUL_WEIGHTS = ("wqkv", "wo", "w1", "w2")


def _layernorm(x, w, b, eps=1e-5):
    # x: (N, D), w/b: (1, D). Biased variance, matching torch.nn.LayerNorm.
    mu = jnp.mean(x, axis=-1, keepdims=True)
    xc = x - mu
    var = jnp.mean(xc * xc, axis=-1, keepdims=True)
    return xc * jax.lax.rsqrt(var + eps) * w + b


def _erf(x):
    # Abramowitz & Stegun 7.1.26 polynomial, max abs error 1.5e-7 in f32.
    # Only VPU ops + one EUP exp, so it always lowers on Mosaic.
    a1 = jnp.float32(0.254829592)
    a2 = jnp.float32(-0.284496736)
    a3 = jnp.float32(1.421413741)
    a4 = jnp.float32(-1.453152027)
    a5 = jnp.float32(1.061405429)
    p = jnp.float32(0.3275911)
    sgn = jnp.where(x < 0, jnp.float32(-1.0), jnp.float32(1.0))
    z = jnp.abs(x)
    t = 1.0 / (1.0 + p * z)
    poly = ((((a5 * t + a4) * t + a3) * t + a2) * t + a1) * t
    return sgn * (1.0 - poly * jnp.exp(-z * z))


def _gelu_exact(x):
    # torch.nn.GELU() default: 0.5 * x * (1 + erf(x / sqrt(2)))
    return 0.5 * x * (1.0 + _erf(x * jnp.float32(1.0 / math.sqrt(2.0))))


def cross_fusion_kernel(
    x_ref,
    ln1_w_ref, ln1_b_ref,
    wqkv_ref, bqkv_ref,
    wo_ref, bo_ref,
    ln2_w_ref, ln2_b_ref,
    w1_ref, b1_ref, w2_ref, b2_ref,
    proj_w_ref, proj_b_ref,
    cls_ref, *maybe_attn_ref,
    num_layers, num_heads, use_bf16_matmul, need_weights,
):
    attn_ref = maybe_attn_ref[0] if need_weights else None
    B, T, D = x_ref.shape
    H = num_heads
    dh = D // H

    def cast_in(a):
        # bf16 operands on the MXU (native on v5e/v6e/v7x); accumulation stays f32.
        return a.astype(jnp.bfloat16) if use_bf16_matmul else a

    def mm(a, b):
        return jnp.dot(cast_in(a), cast_in(b), preferred_element_type=jnp.float32)

    def to_heads(a):
        # (B*T, H*dh) -> (H*B, T, dh): regroup heads into the batch dim of the
        # score/PV dots.  The relayout is spelled as static lane slices + a
        # leading-axis stack (ops guaranteed to lower on Mosaic); it moves exactly
        # the same data a (B,T,H,dh)->(B,H,T,dh) transpose would.
        ah = jnp.stack([a[:, h * dh:(h + 1) * dh] for h in range(H)], axis=0)
        return ah.reshape(H * B, T, dh)            # rows ordered (head, batch)

    # Fold batch into the matmul M dimension: (B, T, D) -> (B*T, D).
    x = x_ref[...].astype(jnp.float32).reshape(B * T, D)

    attn_maps = []
    for l in range(num_layers):                    # static layer loop (L small)
        # ---- self-attention branch (pre-LN) ----
        xn = _layernorm(x, ln1_w_ref[l], ln1_b_ref[l])

        # Lane-aligned Q/K/V: three (D, D) matmuls (weights stacked (L, 3, D, D)),
        # no misaligned column split of a (B*T, 3D) result.  The 1/sqrt(dh) scale
        # is already folded into wqkv[:, 0] / bqkv[:, 0] (see init_params).
        q = mm(xn, wqkv_ref[l, 0]) + bqkv_ref[l, 0]
        k = mm(xn, wqkv_ref[l, 1]) + bqkv_ref[l, 1]
        v = mm(xn, wqkv_ref[l, 2]) + bqkv_ref[l, 2]

        qh = to_heads(q)                            # (H*B, T, dh)
        kh = to_heads(k)
        vh = to_heads(v)

        # One batched dot over all H*B heads for the scores and one for the PV
        # product (single batch dim), instead of a per-head loop of tiny einsums.
        s = jnp.einsum('ntd,nsd->nts', cast_in(qh), cast_in(kh),
                       preferred_element_type=jnp.float32)           # (H*B, T, T)
        s = s - jnp.max(s, axis=-1, keepdims=True)
        e = jnp.exp(s)
        denom = jnp.sum(e, axis=-1, keepdims=True)
        inv = pl.reciprocal(denom, approx=True)                       # EUP slot
        inv = inv * (2.0 - denom * inv)   # one Newton step -> probs sum to 1 in f32
        p = e * inv
        # NOTE: the softmax chain runs at T=8 of 128 lanes; packing heads onto the
        # lane axis ((B*T, H*T)) needs a sublane->lane relayout per layer that costs
        # more than the EUP/VPU cycles it saves at these toy shapes - revisit once
        # T approaches the 128-lane width.

        ctx = jnp.einsum('nts,nsd->ntd', cast_in(p), cast_in(vh),
                         preferred_element_type=jnp.float32)          # (H*B, T, dh)
        ctx4 = ctx.reshape(H, B, T, dh)
        ctx = jnp.concatenate([ctx4[h] for h in range(H)], axis=-1)   # (B, T, D)
        x = x + mm(ctx.reshape(B * T, D), wo_ref[l]) + bo_ref[l]

        # ---- feed-forward branch (pre-LN) ----
        xn2 = _layernorm(x, ln2_w_ref[l], ln2_b_ref[l])
        hmid = _gelu_exact(mm(xn2, w1_ref[l]) + b1_ref[l])            # (B*T, 4D)
        x = x + mm(hmid, w2_ref[l]) + b2_ref[l]

        if need_weights:
            # head-averaged map (average_attn_weights=True): reduction over the
            # leading head axis, unrolled (H is tiny), no accumulation interleaved
            # with the per-head math.
            p4 = p.reshape(H, B, T, T)
            attn_maps.append(sum(p4[h] for h in range(H)) * jnp.float32(1.0 / H))

    if need_weights:
        # Single deferred store of all L maps.
        # NOTE: a fully lane-dense (L, B*T*T) slab (last dim 128) would avoid the
        # masked 8-lane stores, but at T=8 the sublane->lane relayout of this 1 KiB
        # tensor costs more XLU work than the two masked stores it removes; switch
        # to the flat layout once T*T >= 128.
        attn_ref[...] = jnp.stack(attn_maps, axis=0).astype(attn_ref.dtype)

    # ---- CLS projection (fused into the same kernel) ----
    cls = x.reshape(B, T, D)[:, 0, :]                                 # (B, D)
    cls_ref[...] = (mm(cls, proj_w_ref[...]) + proj_b_ref[...]).astype(cls_ref.dtype)


def cross_fusion_forward(seq, stacked_params, proj_w, proj_b, num_heads,
                         use_bf16_matmul=True, need_weights=True):
    """seq: (B, T, D). stacked_params: per-block weights stacked on a leading L axis.

    Returns (cls_vec (B, 512), [per-block (B, T, T) head-averaged attention maps])."""
    B, T, D = seq.shape
    L = stacked_params["wqkv"].shape[0]
    P = proj_w.shape[1]

    params = dict(stacked_params)
    if use_bf16_matmul:
        # One-time cast of the MXU weight operands (halves weight bytes / VMEM and
        # removes per-layer VPU casts); biases, LN params and all accumulation stay
        # f32.  Under jit with constant weights this folds away; in production do
        # it at checkpoint-load time.
        for name in _MATMUL_WEIGHTS:
            params[name] = params[name].astype(jnp.bfloat16)
        proj_w = proj_w.astype(jnp.bfloat16)

    kernel = partial(cross_fusion_kernel,
                     num_layers=L, num_heads=num_heads,
                     use_bf16_matmul=use_bf16_matmul, need_weights=need_weights)

    if need_weights:
        out_shape = (jax.ShapeDtypeStruct((B, P), jnp.float32),
                     jax.ShapeDtypeStruct((L, B, T, T), jnp.float32))
    else:
        out_shape = jax.ShapeDtypeStruct((B, P), jnp.float32)

    # Single fused, grid-less call: all L blocks' weights plus the (B*T, D)
    # activation (~0.3 MiB at D=64 with bf16 weights) stay resident in VMEM for the
    # whole kernel; only the CLS vector and the attention maps go back to HBM.
    # TODO(synk): once B*T reaches a few hundred rows, add a 'parallel' row-tile
    # grid axis (BlockSpec over B*T rows, constant index_maps for the stacked
    # weights) so v7x's second TensorCore is used and weight/activation DMA
    # overlaps compute; re-derive the resident-weight VMEM budget against v7x's
    # 64 MiB (not v5e/v6e's 128 MiB) for scaled-up D/L.
    outs = pl.pallas_call(
        kernel,
        out_shape=out_shape,
        compiler_params=pltpu.CompilerParams(
            vmem_limit_bytes=32 * 1024 * 1024),
    )(seq, *[params[name] for name in _STACKED_ORDER], proj_w, proj_b)

    if need_weights:
        cls_vec, attn = outs
        return cls_vec, [attn[l] for l in range(L)]
    return outs, []


def init_params(key, L, d, num_heads, ffn_mult=4, proj_out=512):
    """Stacked (leading L axis) block parameters + final projection.

    wqkv is (L, 3, d, d) = [Wq, Wk, Wv], every Linear weight laid out (in, out)
    (i.e. nn.MultiheadAttention.in_proj_weight split into thirds and transposed);
    the 1/sqrt(d_head) attention scale is folded into Wq / bq at init time."""
    dh = d // num_heads
    scale = jnp.float32(1.0 / math.sqrt(dh))
    keys = jax.random.split(key, 4 * L + 1)
    s = jnp.float32(0.02)

    def w(k, shape):
        return s * jax.random.normal(k, shape, jnp.float32)

    wqkv = jnp.stack([w(keys[4 * i + 0], (3, d, d)) for i in range(L)])  # (L,3,d,d)
    bqkv = jnp.zeros((L, 3, 1, d), jnp.float32)
    wqkv = wqkv.at[:, 0].multiply(scale)     # fold 1/sqrt(dh) into the Q projection
    bqkv = bqkv.at[:, 0].multiply(scale)

    blocks = dict(
        ln1_w=jnp.ones((L, 1, d), jnp.float32),
        ln1_b=jnp.zeros((L, 1, d), jnp.float32),
        wqkv=wqkv, bqkv=bqkv,
        wo=jnp.stack([w(keys[4 * i + 1], (d, d)) for i in range(L)]),
        bo=jnp.zeros((L, 1, d), jnp.float32),
        ln2_w=jnp.ones((L, 1, d), jnp.float32),
        ln2_b=jnp.zeros((L, 1, d), jnp.float32),
        w1=jnp.stack([w(keys[4 * i + 2], (d, ffn_mult * d)) for i in range(L)]),
        b1=jnp.zeros((L, 1, ffn_mult * d), jnp.float32),
        w2=jnp.stack([w(keys[4 * i + 3], (ffn_mult * d, d)) for i in range(L)]),
        b2=jnp.zeros((L, 1, d), jnp.float32),
    )
    proj_w = w(keys[-1], (d, proj_out))
    proj_b = jnp.zeros((1, proj_out), jnp.float32)
    return blocks, proj_w, proj_b


if __name__ == "__main__":
    # small shapes consistent with the module: L=2 blocks, h=8 heads, proj -> 512
    B, T, D, H, L, P = 2, 8, 64, 8, 2, 512

    key = jax.random.PRNGKey(0)
    k_x, k_p = jax.random.split(key)

    seq = jax.random.normal(k_x, (B, T, D), jnp.float32)
    blocks, proj_w, proj_b = init_params(k_p, L, D, H, proj_out=P)

    # bf16 MXU operands / f32 accumulation (native on v5e, v6e and v7x).  Pass
    # use_bf16_matmul=False for strict f32 parity when validating against PyTorch.
    cls_vec, attn_maps = cross_fusion_forward(seq, blocks, proj_w, proj_b, H,
                                              use_bf16_matmul=True,
                                              need_weights=True)

    jax.block_until_ready((cls_vec, attn_maps))
    assert cls_vec.shape == (B, P)
    assert len(attn_maps) == L and all(a.shape == (B, T, T) for a in attn_maps)
    print("KERNEL_OK")
</pallas_src>

<mosaic_0001>
module attributes {stable_mosaic.version = 11 : i64} {
  func.func @cross_fusion_kernel(%arg0: memref<2x8x64xf32, #tpu.memory_space<vmem>>, %arg1: memref<2x1x64xf32, #tpu.memory_space<vmem>>, %arg2: memref<2x1x64xf32, #tpu.memory_space<vmem>>, %arg3: memref<2x3x64x64xbf16, #tpu.memory_space<vmem>>, %arg4: memref<2x3x1x64xf32, #tpu.memory_space<vmem>>, %arg5: memref<2x64x64xbf16, #tpu.memory_space<vmem>>, %arg6: memref<2x1x64xf32, #tpu.memory_space<vmem>>, %arg7: memref<2x1x64xf32, #tpu.memory_space<vmem>>, %arg8: memref<2x1x64xf32, #tpu.memory_space<vmem>>, %arg9: memref<2x64x256xbf16, #tpu.memory_space<vmem>>, %arg10: memref<2x1x256xf32, #tpu.memory_space<vmem>>, %arg11: memref<2x256x64xbf16, #tpu.memory_space<vmem>>, %arg12: memref<2x1x64xf32, #tpu.memory_space<vmem>>, %arg13: memref<64x512xbf16, #tpu.memory_space<vmem>>, %arg14: memref<1x512xf32, #tpu.memory_space<vmem>>, %arg15: memref<2x512xf32, #tpu.memory_space<vmem>>, %arg16: memref<2x2x8x8xf32, #tpu.memory_space<vmem>>) attributes {dimension_semantics = [], scalar_prefetch = 0 : i64, scratch_operands = 0 : i64, tpu.core_type = #tpu.core_type<tc>} {
    %c0 = arith.constant 0 : index
    %c0_0 = arith.constant 0 : index
    %c0_1 = arith.constant 0 : index
    %0 = vector.load %arg0[%c0, %c0_0, %c0_1] : memref<2x8x64xf32, #tpu.memory_space<vmem>>, vector<2x8x64xf32>
    %1 = vector.shape_cast %0 : vector<2x8x64xf32> to vector<16x64xf32>
    %c0_2 = arith.constant 0 : index
    %c0_3 = arith.constant 0 : index
    %c0_4 = arith.constant 0 : index
    %2 = vector.load %arg1[%c0_2, %c0_3, %c0_4] : memref<2x1x64xf32, #tpu.memory_space<vmem>>, vector<1x1x64xf32>
    %3 = vector.shape_cast %2 : vector<1x1x64xf32> to vector<1x64xf32>
    %c0_5 = arith.constant 0 : index
    %c0_6 = arith.constant 0 : index
    %c0_7 = arith.constant 0 : index
    %4 = vector.load %arg2[%c0_5, %c0_6, %c0_7] : memref<2x1x64xf32, #tpu.memory_space<vmem>>, vector<1x1x64xf32>
    %5 = vector.shape_cast %4 : vector<1x1x64xf32> to vector<1x64xf32>
    %cst = arith.constant dense<0.000000e+00> : vector<16xf32>
    %6 = vector.multi_reduction <add>, %1, %cst [1] : vector<16x64xf32> to vector<16xf32>
    %7 = vector.shape_cast %6 : vector<16xf32> to vector<16x1xf32>
    %cst_8 = arith.constant 6.400000e+01 : f32
    %8 = vector.broadcast %cst_8 : f32 to vector<16x1xf32>
    %9 = arith.divf %7, %8 : vector<16x1xf32>
    %10 = vector.broadcast %9 : vector<16x1xf32> to vector<16x64xf32>
    %11 = arith.subf %1, %10 : vector<16x64xf32>
    %12 = arith.mulf %11, %11 : vector<16x64xf32>
    %cst_9 = arith.constant dense<0.000000e+00> : vector<16xf32>
    %13 = vector.multi_reduction <add>, %12, %cst_9 [1] : vector<16x64xf32> to vector<16xf32>
    %14 = vector.shape_cast %13 : vector<16xf32> to vector<16x1xf32>
    %cst_10 = arith.constant 6.400000e+01 : f32
    %15 = vector.broadcast %cst_10 : f32 to vector<16x1xf32>
    %16 = arith.divf %14, %15 : vector<16x1xf32>
    %cst_11 = arith.constant 9.99999974E-6 : f32
    %17 = vector.broadcast %cst_11 : f32 to vector<16x1xf32>
    %18 = arith.addf %16, %17 : vector<16x1xf32>
    %19 = math.rsqrt %18 : vector<16x1xf32>
    %20 = vector.broadcast %19 : vector<16x1xf32> to vector<16x64xf32>
    %21 = arith.mulf %11, %20 : vector<16x64xf32>
    %22 = vector.broadcast %3 : vector<1x64xf32> to vector<16x64xf32>
    %23 = arith.mulf %21, %22 : vector<16x64xf32>
    %24 = vector.broadcast %5 : vector<1x64xf32> to vector<16x64xf32>
    %25 = arith.addf %23, %24 : vector<16x64xf32>
    %c0_12 = arith.constant 0 : index
    %c0_13 = arith.constant 0 : index
    %c0_14 = arith.constant 0 : index
    %c0_15 = arith.constant 0 : index
    %26 = vector.load %arg3[%c0_12, %c0_13, %c0_14, %c0_15] : memref<2x3x64x64xbf16, #tpu.memory_space<vmem>>, vector<1x1x64x64xbf16>
    %27 = vector.shape_cast %26 : vector<1x1x64x64xbf16> to vector<64x64xbf16>
    %28 = arith.truncf %25 : vector<16x64xf32> to vector<16x64xbf16>
    %cst_16 = arith.constant dense<0.000000e+00> : vector<16x64xf32>
    %29 = tpu.matmul %28, %27, %cst_16 {dimension_numbers = #tpu.dot_dimension_numbers<[1], [0], [0], [1], [0, 0, 1, 1], [], []>} : vector<16x64xbf16>, vector<64x64xbf16>, vector<16x64xf32> -> vector<16x64xf32>
    %c0_17 = arith.constant 0 : index
    %c0_18 = arith.constant 0 : index
    %c0_19 = arith.constant 0 : index
    %c0_20 = arith.constant 0 : index
    %30 = vector.load %arg4[%c0_17, %c0_18, %c0_19, %c0_20] : memref<2x3x1x64xf32, #tpu.memory_space<vmem>>, vector<1x1x1x64xf32>
    %31 = vector.shape_cast %30 : vector<1x1x1x64xf32> to vector<1x64xf32>
    %32 = vector.broadcast %31 : vector<1x64xf32> to vector<16x64xf32>
    %33 = arith.addf %29, %32 : vector<16x64xf32>
    %c0_21 = arith.constant 0 : index
    %c1 = arith.constant 1 : index
    %c0_22 = arith.constant 0 : index
    %c0_23 = arith.constant 0 : index
    %34 = vector.load %arg3[%c0_21, %c1, %c0_22, %c0_23] : memref<2x3x64x64xbf16, #tpu.memory_space<vmem>>, vector<1x1x64x64xbf16>
    %35 = vector.shape_cast %34 : vector<1x1x64x64xbf16> to vector<64x64xbf16>
    %36 = arith.truncf %25 : vector<16x64xf32> to vector<16x64xbf16>
    %cst_24 = arith.constant dense<0.000000e+00> : vector<16x64xf32>
    %37 = tpu.matmul %36, %35, %cst_24 {dimension_numbers = #tpu.dot_dimension_numbers<[1], [0], [0], [1], [0, 0, 1, 1], [], []>} : vector<16x64xbf16>, vector<64x64xbf16>, vector<16x64xf32> -> vector<16x64xf32>
    %c0_25 = arith.constant 0 : index
    %c1_26 = arith.constant 1 : index
    %c0_27 = arith.constant 0 : index
    %c0_28 = arith.constant 0 : index
    %38 = vector.load %arg4[%c0_25, %c1_26, %c0_27, %c0_28] : memref<2x3x1x64xf32, #tpu.memory_space<vmem>>, vector<1x1x1x64xf32>
    %39 = vector.shape_cast %38 : vector<1x1x1x64xf32> to vector<1x64xf32>
    %40 = vector.broadcast %39 : vector<1x64xf32> to vector<16x64xf32>
    %41 = arith.addf %37, %40 : vector<16x64xf32>
    %c0_29 = arith.constant 0 : index
    %c2 = arith.constant 2 : index
    %c0_30 = arith.constant 0 : index
    %c0_31 = arith.constant 0 : index
    %42 = vector.load %arg3[%c0_29, %c2, %c0_30, %c0_31] : memref<2x3x64x64xbf16, #tpu.memory_space<vmem>>, vector<1x1x64x64xbf16>
    %43 = vector.shape_cast %42 : vector<1x1x64x64xbf16> to vector<64x64xbf16>
    %44 = arith.truncf %25 : vector<16x64xf32> to vector<16x64xbf16>
    %cst_32 = arith.constant dense<0.000000e+00> : vector<16x64xf32>
    %45 = tpu.matmul %44, %43, %cst_32 {dimension_numbers = #tpu.dot_dimension_numbers<[1], [0], [0], [1], [0, 0, 1, 1], [], []>} : vector<16x64xbf16>, vector<64x64xbf16>, vector<16x64xf32> -> vector<16x64xf32>
    %c0_33 = arith.constant 0 : index
    %c2_34 = arith.constant 2 : index
    %c0_35 = arith.constant 0 : index
    %c0_36 = arith.constant 0 : index
    %46 = vector.load %arg4[%c0_33, %c2_34, %c0_35, %c0_36] : memref<2x3x1x64xf32, #tpu.memory_space<vmem>>, vector<1x1x1x64xf32>
    %47 = vector.shape_cast %46 : vector<1x1x1x64xf32> to vector<1x64xf32>
    %48 = vector.broadcast %47 : vector<1x64xf32> to vector<16x64xf32>
    %49 = arith.addf %45, %48 : vector<16x64xf32>
    %50 = vector.extract_strided_slice %33 {offsets = [0, 0], sizes = [16, 8], strides = [1, 1]} : vector<16x64xf32> to vector<16x8xf32>
    %51 = vector.extract_strided_slice %33 {offsets = [0, 8], sizes = [16, 8], strides = [1, 1]} : vector<16x64xf32> to vector<16x8xf32>
    %52 = vector.extract_strided_slice %33 {offsets = [0, 16], sizes = [16, 8], strides = [1, 1]} : vector<16x64xf32> to vector<16x8xf32>
    %53 = vector.extract_strided_slice %33 {offsets = [0, 24], sizes = [16, 8], strides = [1, 1]} : vector<16x64xf32> to vector<16x8xf32>
    %54 = vector.extract_strided_slice %33 {offsets = [0, 32], sizes = [16, 8], strides = [1, 1]} : vector<16x64xf32> to vector<16x8xf32>
    %55 = vector.extract_strided_slice %33 {offsets = [0, 40], sizes = [16, 8], strides = [1, 1]} : vector<16x64xf32> to vector<16x8xf32>
    %56 = vector.extract_strided_slice %33 {offsets = [0, 48], sizes = [16, 8], strides = [1, 1]} : vector<16x64xf32> to vector<16x8xf32>
    %57 = vector.extract_strided_slice %33 {offsets = [0, 56], sizes = [16, 8], strides = [1, 1]} : vector<16x64xf32> to vector<16x8xf32>
    %58 = vector.shape_cast %50 : vector<16x8xf32> to vector<1x16x8xf32>
    %59 = vector.shape_cast %51 : vector<16x8xf32> to vector<1x16x8xf32>
    %60 = vector.shape_cast %52 : vector<16x8xf32> to vector<1x16x8xf32>
    %61 = vector.shape_cast %53 : vector<16x8xf32> to vector<1x16x8xf32>
    %62 = vector.shape_cast %54 : vector<16x8xf32> to vector<1x16x8xf32>
    %63 = vector.shape_cast %55 : vector<16x8xf32> to vector<1x16x8xf32>
    %64 = vector.shape_cast %56 : vector<16x8xf32> to vector<1x16x8xf32>
    %65 = vector.shape_cast %57 : vector<16x8xf32> to vector<1x16x8xf32>
    %66 = tpu.concatenate %58, %59, %60, %61, %62, %63, %64, %65 in 0 : vector<1x16x8xf32>, vector<1x16x8xf32>, vector<1x16x8xf32>, vector<1x16x8xf32>, vector<1x16x8xf32>, vector<1x16x8xf32>, vector<1x16x8xf32>, vector<1x16x8xf32> -> vector<8x16x8xf32>
    %67 = vector.shape_cast %66 : vector<8x16x8xf32> to vector<16x8x8xf32>
    %68 = vector.extract_strided_slice %41 {offsets = [0, 0], sizes = [16, 8], strides = [1, 1]} : vector<16x64xf32> to vector<16x8xf32>
    %69 = vector.extract_strided_slice %41 {offsets = [0, 8], sizes = [16, 8], strides = [1, 1]} : vector<16x64xf32> to vector<16x8xf32>
    %70 = vector.extract_strided_slice %41 {offsets = [0, 16], sizes = [16, 8], strides = [1, 1]} : vector<16x64xf32> to vector<16x8xf32>
    %71 = vector.extract_strided_slice %41 {offsets = [0, 24], sizes = [16, 8], strides = [1, 1]} : vector<16x64xf32> to vector<16x8xf32>
    %72 = vector.extract_strided_slice %41 {offsets = [0, 32], sizes = [16, 8], strides = [1, 1]} : vector<16x64xf32> to vector<16x8xf32>
    %73 = vector.extract_strided_slice %41 {offsets = [0, 40], sizes = [16, 8], strides = [1, 1]} : vector<16x64xf32> to vector<16x8xf32>
    %74 = vector.extract_strided_slice %41 {offsets = [0, 48], sizes = [16, 8], strides = [1, 1]} : vector<16x64xf32> to vector<16x8xf32>
    %75 = vector.extract_strided_slice %41 {offsets = [0, 56], sizes = [16, 8], strides = [1, 1]} : vector<16x64xf32> to vector<16x8xf32>
    %76 = vector.shape_cast %68 : vector<16x8xf32> to vector<1x16x8xf32>
    %77 = vector.shape_cast %69 : vector<16x8xf32> to vector<1x16x8xf32>
    %78 = vector.shape_cast %70 : vector<16x8xf32> to vector<1x16x8xf32>
    %79 = vector.shape_cast %71 : vector<16x8xf32> to vector<1x16x8xf32>
    %80 = vector.shape_cast %72 : vector<16x8xf32> to vector<1x16x8xf32>
    %81 = vector.shape_cast %73 : vector<16x8xf32> to vector<1x16x8xf32>
    %82 = vector.shape_cast %74 : vector<16x8xf32> to vector<1x16x8xf32>
    %83 = vector.shape_cast %75 : vector<16x8xf32> to vector<1x16x8xf32>
    %84 = tpu.concatenate %76, %77, %78, %79, %80, %81, %82, %83 in 0 : vector<1x16x8xf32>, vector<1x16x8xf32>, vector<1x16x8xf32>, vector<1x16x8xf32>, vector<1x16x8xf32>, vector<1x16x8xf32>, vector<1x16x8xf32>, vector<1x16x8xf32> -> vector<8x16x8xf32>
    %85 = vector.shape_cast %84 : vector<8x16x8xf32> to vector<16x8x8xf32>
    %86 = vector.extract_strided_slice %49 {offsets = [0, 0], sizes = [16, 8], strides = [1, 1]} : vector<16x64xf32> to vector<16x8xf32>
    %87 = vector.extract_strided_slice %49 {offsets = [0, 8], sizes = [16, 8], strides = [1, 1]} : vector<16x64xf32> to vector<16x8xf32>
    %88 = vector.extract_strided_slice %49 {offsets = [0, 16], sizes = [16, 8], strides = [1, 1]} : vector<16x64xf32> to vector<16x8xf32>
    %89 = vector.extract_strided_slice %49 {offsets = [0, 24], sizes = [16, 8], strides = [1, 1]} : vector<16x64xf32> to vector<16x8xf32>
    %90 = vector.extract_strided_slice %49 {offsets = [0, 32], sizes = [16, 8], strides = [1, 1]} : vector<16x64xf32> to vector<16x8xf32>
    %91 = vector.extract_strided_slice %49 {offsets = [0, 40], sizes = [16, 8], strides = [1, 1]} : vector<16x64xf32> to vector<16x8xf32>
    %92 = vector.extract_strided_slice %49 {offsets = [0, 48], sizes = [16, 8], strides = [1, 1]} : vector<16x64xf32> to vector<16x8xf32>
    %93 = vector.extract_strided_slice %49 {offsets = [0, 56], sizes = [16, 8], strides = [1, 1]} : vector<16x64xf32> to vector<16x8xf32>
    %94 = vector.shape_cast %86 : vector<16x8xf32> to vector<1x16x8xf32>
    %95 = vector.shape_cast %87 : vector<16x8xf32> to vector<1x16x8xf32>
    %96 = vector.shape_cast %88 : vector<16x8xf32> to vector<1x16x8xf32>
    %97 = vector.shape_cast %89 : vector<16x8xf32> to vector<1x16x8xf32>
    %98 = vector.shape_cast %90 : vector<16x8xf32> to vector<1x16x8xf32>
    %99 = vector.shape_cast %91 : vector<16x8xf32> to vector<1x16x8xf32>
    %100 = vector.shape_cast %92 : vector<16x8xf32> to vector<1x16x8xf32>
    %101 = vector.shape_cast %93 : vector<16x8xf32> to vector<1x16x8xf32>
    %102 = tpu.concatenate %94, %95, %96, %97, %98, %99, %100, %101 in 0 : vector<1x16x8xf32>, vector<1x16x8xf32>, vector<1x16x8xf32>, vector<1x16x8xf32>, vector<1x16x8xf32>, vector<1x16x8xf32>, vector<1x16x8xf32>, vector<1x16x8xf32> -> vector<8x16x8xf32>
    %103 = vector.shape_cast %102 : vector<8x16x8xf32> to vector<16x8x8xf32>
    %104 = arith.truncf %67 : vector<16x8x8xf32> to vector<16x8x8xbf16>
    %105 = arith.truncf %85 : vector<16x8x8xf32> to vector<16x8x8xbf16>
    "tpu.trace_start"() <{level = 10 : i32, message = "ntd,nsd->nts"}> : () -> ()
    %cst_37 = arith.constant dense<0.000000e+00> : vector<16x8x8xf32>
    %106 = tpu.matmul %104, %105, %cst_37 {dimension_numbers = #tpu.dot_dimension_numbers<[2], [2], [1], [1], [0, 0, 0, 1, 1, 1], [0], [0]>} : vector<16x8x8xbf16>, vector<16x8x8xbf16>, vector<16x8x8xf32> -> vector<16x8x8xf32>
    "tpu.trace_stop"() : () -> ()
    %cst_38 = arith.constant dense<0xFF800000> : vector<16x8xf32>
    %107 = vector.multi_reduction <maximumf>, %106, %cst_38 [2] : vector<16x8x8xf32> to vector<16x8xf32>
    %108 = vector.shape_cast %107 : vector<16x8xf32> to vector<16x8x1xf32>
    %109 = vector.broadcast %108 : vector<16x8x1xf32> to vector<16x8x8xf32>
    %110 = arith.subf %106, %109 : vector<16x8x8xf32>
    %111 = math.exp %110 : vector<16x8x8xf32>
    %cst_39 = arith.constant dense<0.000000e+00> : vector<16x8xf32>
    %112 = vector.multi_reduction <add>, %111, %cst_39 [2] : vector<16x8x8xf32> to vector<16x8xf32>
    %113 = vector.shape_cast %112 : vector<16x8xf32> to vector<16x8x1xf32>
    %114 = tpu.reciprocal %113 {approx = true} : vector<16x8x1xf32> -> vector<16x8x1xf32>
    %115 = arith.mulf %113, %114 : vector<16x8x1xf32>
    %cst_40 = arith.constant 2.000000e+00 : f32
    %116 = vector.broadcast %cst_40 : f32 to vector<16x8x1xf32>
    %117 = arith.subf %116, %115 : vector<16x8x1xf32>
    %118 = arith.mulf %114, %117 : vector<16x8x1xf32>
    %119 = vector.broadcast %118 : vector<16x8x1xf32> to vector<16x8x8xf32>
    %120 = arith.mulf %111, %119 : vector<16x8x8xf32>
    %121 = arith.truncf %120 : vector<16x8x8xf32> to vector<16x8x8xbf16>
    %122 = arith.truncf %103 : vector<16x8x8xf32> to vector<16x8x8xbf16>
    "tpu.trace_start"() <{level = 10 : i32, message = "nts,nsd->ntd"}> : () -> ()
    %cst_41 = arith.constant dense<0.000000e+00> : vector<16x8x8xf32>
    %123 = tpu.matmul %121, %122, %cst_41 {dimension_numbers = #tpu.dot_dimension_numbers<[2], [1], [1], [2], [0, 0, 0, 1, 1, 2], [0], [0]>} : vector<16x8x8xbf16>, vector<16x8x8xbf16>, vector<16x8x8xf32> -> vector<16x8x8xf32>
    "tpu.trace_stop"() : () -> ()
    %124 = vector.shape_cast %123 : vector<16x8x8xf32> to vector<8x2x8x8xf32>
    %125 = vector.extract_strided_slice %124 {offsets = [0, 0, 0, 0], sizes = [1, 2, 8, 8], strides = [1, 1, 1, 1]} : vector<8x2x8x8xf32> to vector<1x2x8x8xf32>
    %126 = vector.shape_cast %125 : vector<1x2x8x8xf32> to vector<2x8x8xf32>
    %127 = vector.extract_strided_slice %124 {offsets = [1, 0, 0, 0], sizes = [1, 2, 8, 8], strides = [1, 1, 1, 1]} : vector<8x2x8x8xf32> to vector<1x2x8x8xf32>
    %128 = vector.shape_cast %127 : vector<1x2x8x8xf32> to vector<2x8x8xf32>
    %129 = vector.extract_strided_slice %124 {offsets = [2, 0, 0, 0], sizes = [1, 2, 8, 8], strides = [1, 1, 1, 1]} : vector<8x2x8x8xf32> to vector<1x2x8x8xf32>
    %130 = vector.shape_cast %129 : vector<1x2x8x8xf32> to vector<2x8x8xf32>
    %131 = vector.extract_strided_slice %124 {offsets = [3, 0, 0, 0], sizes = [1, 2, 8, 8], strides = [1, 1, 1, 1]} : vector<8x2x8x8xf32> to vector<1x2x8x8xf32>
    %132 = vector.shape_cast %131 : vector<1x2x8x8xf32> to vector<2x8x8xf32>
    %133 = vector.extract_strided_slice %124 {offsets = [4, 0, 0, 0], sizes = [1, 2, 8, 8], strides = [1, 1, 1, 1]} : vector<8x2x8x8xf32> to vector<1x2x8x8xf32>
    %134 = vector.shape_cast %133 : vector<1x2x8x8xf32> to vector<2x8x8xf32>
    %135 = vector.extract_strided_slice %124 {offsets = [5, 0, 0, 0], sizes = [1, 2, 8, 8], strides = [1, 1, 1, 1]} : vector<8x2x8x8xf32> to vector<1x2x8x8xf32>
    %136 = vector.shape_cast %135 : vector<1x2x8x8xf32> to vector<2x8x8xf32>
    %137 = vector.extract_strided_slice %124 {offsets = [6, 0, 0, 0], sizes = [1, 2, 8, 8], strides = [1, 1, 1, 1]} : vector<8x2x8x8xf32> to vector<1x2x8x8xf32>
    %138 = vector.shape_cast %137 : vector<1x2x8x8xf32> to vector<2x8x8xf32>
    %139 = vector.extract_strided_slice %124 {offsets = [7, 0, 0, 0], sizes = [1, 2, 8, 8], strides = [1, 1, 1, 1]} : vector<8x2x8x8xf32> to vector<1x2x8x8xf32>
    %140 = vector.shape_cast %139 : vector<1x2x8x8xf32> to vector<2x8x8xf32>
    %141 = tpu.concatenate %126, %128, %130, %132, %134, %136, %138, %140 in 2 : vector<2x8x8xf32>, vector<2x8x8xf32>, vector<2x8x8xf32>, vector<2x8x8xf32>, vector<2x8x8xf32>, vector<2x8x8xf32>, vector<2x8x8xf32>, vector<2x8x8xf32> -> vector<2x8x64xf32>
    %142 = vector.shape_cast %141 : vector<2x8x64xf32> to vector<16x64xf32>
    %c0_42 = arith.constant 0 : index
    %c0_43 = arith.constant 0 : index
    %c0_44 = arith.constant 0 : index
    %143 = vector.load %arg5[%c0_42, %c0_43, %c0_44] : memref<2x64x64xbf16, #tpu.memory_space<vmem>>, vector<1x64x64xbf16>
    %144 = vector.shape_cast %143 : vector<1x64x64xbf16> to vector<64x64xbf16>
    %145 = arith.truncf %142 : vector<16x64xf32> to vector<16x64xbf16>
    %cst_45 = arith.constant dense<0.000000e+00> : vector<16x64xf32>
    %146 = tpu.matmul %145, %144, %cst_45 {dimension_numbers = #tpu.dot_dimension_numbers<[1], [0], [0], [1], [0, 0, 1, 1], [], []>} : vector<16x64xbf16>, vector<64x64xbf16>, vector<16x64xf32> -> vector<16x64xf32>
    %147 = arith.addf %1, %146 : vector<16x64xf32>
    %c0_46 = arith.constant 0 : index
    %c0_47 = arith.constant 0 : index
    %c0_48 = arith.constant 0 : index
    %148 = vector.load %arg6[%c0_46, %c0_47, %c0_48] : memref<2x1x64xf32, #tpu.memory_space<vmem>>, vector<1x1x64xf32>
    %149 = vector.shape_cast %148 : vector<1x1x64xf32> to vector<1x64xf32>
    %150 = vector.broadcast %149 : vector<1x64xf32> to vector<16x64xf32>
    %151 = arith.addf %147, %150 : vector<16x64xf32>
    %c0_49 = arith.constant 0 : index
    %c0_50 = arith.constant 0 : index
    %c0_51 = arith.constant 0 : index
    %152 = vector.load %arg7[%c0_49, %c0_50, %c0_51] : memref<2x1x64xf32, #tpu.memory_space<vmem>>, vector<1x1x64xf32>
    %153 = vector.shape_cast %152 : vector<1x1x64xf32> to vector<1x64xf32>
    %c0_52 = arith.constant 0 : index
    %c0_53 = arith.constant 0 : index
    %c0_54 = arith.constant 0 : index
    %154 = vector.load %arg8[%c0_52, %c0_53, %c0_54] : memref<2x1x64xf32, #tpu.memory_space<vmem>>, vector<1x1x64xf32>
    %155 = vector.shape_cast %154 : vector<1x1x64xf32> to vector<1x64xf32>
    %cst_55 = arith.constant dense<0.000000e+00> : vector<16xf32>
    %156 = vector.multi_reduction <add>, %151, %cst_55 [1] : vector<16x64xf32> to vector<16xf32>
    %157 = vector.shape_cast %156 : vector<16xf32> to vector<16x1xf32>
    %cst_56 = arith.constant 6.400000e+01 : f32
    %158 = vector.broadcast %cst_56 : f32 to vector<16x1xf32>
    %159 = arith.divf %157, %158 : vector<16x1xf32>
    %160 = vector.broadcast %159 : vector<16x1xf32> to vector<16x64xf32>
    %161 = arith.subf %151, %160 : vector<16x64xf32>
    %162 = arith.mulf %161, %161 : vector<16x64xf32>
    %cst_57 = arith.constant dense<0.000000e+00> : vector<16xf32>
    %163 = vector.multi_reduction <add>, %162, %cst_57 [1] : vector<16x64xf32> to vector<16xf32>
    %164 = vector.shape_cast %163 : vector<16xf32> to vector<16x1xf32>
    %cst_58 = arith.constant 6.400000e+01 : f32
    %165 = vector.broadcast %cst_58 : f32 to vector<16x1xf32>
    %166 = arith.divf %164, %165 : vector<16x1xf32>
    %cst_59 = arith.constant 9.99999974E-6 : f32
    %167 = vector.broadcast %cst_59 : f32 to vector<16x1xf32>
    %168 = arith.addf %166, %167 : vector<16x1xf32>
    %169 = math.rsqrt %168 : vector<16x1xf32>
    %170 = vector.broadcast %169 : vector<16x1xf32> to vector<16x64xf32>
    %171 = arith.mulf %161, %170 : vector<16x64xf32>
    %172 = vector.broadcast %153 : vector<1x64xf32> to vector<16x64xf32>
    %173 = arith.mulf %171, %172 : vector<16x64xf32>
    %174 = vector.broadcast %155 : vector<1x64xf32> to vector<16x64xf32>
    %175 = arith.addf %173, %174 : vector<16x64xf32>
    %c0_60 = arith.constant 0 : index
    %c0_61 = arith.constant 0 : index
    %c0_62 = arith.constant 0 : index
    %176 = vector.load %arg9[%c0_60, %c0_61, %c0_62] : memref<2x64x256xbf16, #tpu.memory_space<vmem>>, vector<1x64x256xbf16>
    %177 = vector.shape_cast %176 : vector<1x64x256xbf16> to vector<64x256xbf16>
    %178 = arith.truncf %175 : vector<16x64xf32> to vector<16x64xbf16>
    %cst_63 = arith.constant dense<0.000000e+00> : vector<16x256xf32>
    %179 = tpu.matmul %178, %177, %cst_63 {dimension_numbers = #tpu.dot_dimension_numbers<[1], [0], [0], [1], [0, 0, 1, 1], [], []>} : vector<16x64xbf16>, vector<64x256xbf16>, vector<16x256xf32> -> vector<16x256xf32>
    %c0_64 = arith.constant 0 : index
    %c0_65 = arith.constant 0 : index
    %c0_66 = arith.constant 0 : index
    %180 = vector.load %arg10[%c0_64, %c0_65, %c0_66] : memref<2x1x256xf32, #tpu.memory_space<vmem>>, vector<1x1x256xf32>
    %181 = vector.shape_cast %180 : vector<1x1x256xf32> to vector<1x256xf32>
    %182 = vector.broadcast %181 : vector<1x256xf32> to vector<16x256xf32>
    %183 = arith.addf %179, %182 : vector<16x256xf32>
    %cst_67 = arith.constant 5.000000e-01 : f32
    %184 = vector.broadcast %cst_67 : f32 to vector<16x256xf32>
    %185 = arith.mulf %184, %183 : vector<16x256xf32>
    %cst_68 = arith.constant 0.707106769 : f32
    %186 = vector.broadcast %cst_68 : f32 to vector<16x256xf32>
    %187 = arith.mulf %183, %186 : vector<16x256xf32>
    %cst_69 = arith.constant 0.000000e+00 : f32
    %188 = vector.broadcast %cst_69 : f32 to vector<16x256xf32>
    %189 = arith.cmpf olt, %187, %188 : vector<16x256xf32>
    %cst_70 = arith.constant -1.000000e+00 : f32
    %cst_71 = arith.constant 1.000000e+00 : f32
    %190 = vector.broadcast %cst_70 : f32 to vector<16x256xf32>
    %191 = vector.broadcast %cst_71 : f32 to vector<16x256xf32>
    %192 = arith.select %189, %190, %191 : vector<16x256xi1>, vector<16x256xf32>
    %193 = math.absf %187 : vector<16x256xf32>
    %cst_72 = arith.constant 0.327591091 : f32
    %194 = vector.broadcast %cst_72 : f32 to vector<16x256xf32>
    %195 = arith.mulf %194, %193 : vector<16x256xf32>
    %cst_73 = arith.constant 1.000000e+00 : f32
    %196 = vector.broadcast %cst_73 : f32 to vector<16x256xf32>
    %197 = arith.addf %196, %195 : vector<16x256xf32>
    %cst_74 = arith.constant 1.000000e+00 : f32
    %198 = vector.broadcast %cst_74 : f32 to vector<16x256xf32>
    %199 = arith.divf %198, %197 : vector<16x256xf32>
    %cst_75 = arith.constant 1.06140542 : f32
    %200 = vector.broadcast %cst_75 : f32 to vector<16x256xf32>
    %201 = arith.mulf %200, %199 : vector<16x256xf32>
    %cst_76 = arith.constant -1.45315206 : f32
    %202 = vector.broadcast %cst_76 : f32 to vector<16x256xf32>
    %203 = arith.addf %201, %202 : vector<16x256xf32>
    %204 = arith.mulf %203, %199 : vector<16x256xf32>
    %cst_77 = arith.constant 1.42141378 : f32
    %205 = vector.broadcast %cst_77 : f32 to vector<16x256xf32>
    %206 = arith.addf %204, %205 : vector<16x256xf32>
    %207 = arith.mulf %206, %199 : vector<16x256xf32>
    %cst_78 = arith.constant -0.284496725 : f32
    %208 = vector.broadcast %cst_78 : f32 to vector<16x256xf32>
    %209 = arith.addf %207, %208 : vector<16x256xf32>
    %210 = arith.mulf %209, %199 : vector<16x256xf32>
    %cst_79 = arith.constant 0.254829586 : f32
    %211 = vector.broadcast %cst_79 : f32 to vector<16x256xf32>
    %212 = arith.addf %210, %211 : vector<16x256xf32>
    %213 = arith.mulf %212, %199 : vector<16x256xf32>
    %cst_80 = arith.constant 0.000000e+00 : f32
    %214 = vector.broadcast %cst_80 : f32 to vector<16x256xf32>
    %215 = arith.subf %214, %193 : vector<16x256xf32>
    %216 = arith.mulf %215, %193 : vector<16x256xf32>
    %217 = math.exp %216 : vector<16x256xf32>
    %218 = arith.mulf %213, %217 : vector<16x256xf32>
    %cst_81 = arith.constant 1.000000e+00 : f32
    %219 = vector.broadcast %cst_81 : f32 to vector<16x256xf32>
    %220 = arith.subf %219, %218 : vector<16x256xf32>
    %221 = arith.mulf %192, %220 : vector<16x256xf32>
    %cst_82 = arith.constant 1.000000e+00 : f32
    %222 = vector.broadcast %cst_82 : f32 to vector<16x256xf32>
    %223 = arith.addf %222, %221 : vector<16x256xf32>
    %224 = arith.mulf %185, %223 : vector<16x256xf32>
    %c0_83 = arith.constant 0 : index
    %c0_84 = arith.constant 0 : index
    %c0_85 = arith.constant 0 : index
    %225 = vector.load %arg11[%c0_83, %c0_84, %c0_85] : memref<2x256x64xbf16, #tpu.memory_space<vmem>>, vector<1x256x64xbf16>
    %226 = vector.shape_cast %225 : vector<1x256x64xbf16> to vector<256x64xbf16>
    %227 = arith.truncf %224 : vector<16x256xf32> to vector<16x256xbf16>
    %cst_86 = arith.constant dense<0.000000e+00> : vector<16x64xf32>
    %228 = tpu.matmul %227, %226, %cst_86 {dimension_numbers = #tpu.dot_dimension_numbers<[1], [0], [0], [1], [0, 0, 1, 1], [], []>} : vector<16x256xbf16>, vector<256x64xbf16>, vector<16x64xf32> -> vector<16x64xf32>
    %229 = arith.addf %151, %228 : vector<16x64xf32>
    %c0_87 = arith.constant 0 : index
    %c0_88 = arith.constant 0 : index
    %c0_89 = arith.constant 0 : index
    %230 = vector.load %arg12[%c0_87, %c0_88, %c0_89] : memref<2x1x64xf32, #tpu.memory_space<vmem>>, vector<1x1x64xf32>
    %231 = vector.shape_cast %230 : vector<1x1x64xf32> to vector<1x64xf32>
    %232 = vector.broadcast %231 : vector<1x64xf32> to vector<16x64xf32>
    %233 = arith.addf %229, %232 : vector<16x64xf32>
    %234 = vector.shape_cast %120 : vector<16x8x8xf32> to vector<8x2x8x8xf32>
    %235 = vector.extract_strided_slice %234 {offsets = [0, 0, 0, 0], sizes = [1, 2, 8, 8], strides = [1, 1, 1, 1]} : vector<8x2x8x8xf32> to vector<1x2x8x8xf32>
    %236 = vector.shape_cast %235 : vector<1x2x8x8xf32> to vector<2x8x8xf32>
    %cst_90 = arith.constant 0.000000e+00 : f32
    %237 = vector.broadcast %cst_90 : f32 to vector<2x8x8xf32>
    %238 = arith.addf %237, %236 : vector<2x8x8xf32>
    %239 = vector.extract_strided_slice %234 {offsets = [1, 0, 0, 0], sizes = [1, 2, 8, 8], strides = [1, 1, 1, 1]} : vector<8x2x8x8xf32> to vector<1x2x8x8xf32>
    %240 = vector.shape_cast %239 : vector<1x2x8x8xf32> to vector<2x8x8xf32>
    %241 = arith.addf %238, %240 : vector<2x8x8xf32>
    %242 = vector.extract_strided_slice %234 {offsets = [2, 0, 0, 0], sizes = [1, 2, 8, 8], strides = [1, 1, 1, 1]} : vector<8x2x8x8xf32> to vector<1x2x8x8xf32>
    %243 = vector.shape_cast %242 : vector<1x2x8x8xf32> to vector<2x8x8xf32>
    %244 = arith.addf %241, %243 : vector<2x8x8xf32>
    %245 = vector.extract_strided_slice %234 {offsets = [3, 0, 0, 0], sizes = [1, 2, 8, 8], strides = [1, 1, 1, 1]} : vector<8x2x8x8xf32> to vector<1x2x8x8xf32>
    %246 = vector.shape_cast %245 : vector<1x2x8x8xf32> to vector<2x8x8xf32>
    %247 = arith.addf %244, %246 : vector<2x8x8xf32>
    %248 = vector.extract_strided_slice %234 {offsets = [4, 0, 0, 0], sizes = [1, 2, 8, 8], strides = [1, 1, 1, 1]} : vector<8x2x8x8xf32> to vector<1x2x8x8xf32>
    %249 = vector.shape_cast %248 : vector<1x2x8x8xf32> to vector<2x8x8xf32>
    %250 = arith.addf %247, %249 : vector<2x8x8xf32>
    %251 = vector.extract_strided_slice %234 {offsets = [5, 0, 0, 0], sizes = [1, 2, 8, 8], strides = [1, 1, 1, 1]} : vector<8x2x8x8xf32> to vector<1x2x8x8xf32>
    %252 = vector.shape_cast %251 : vector<1x2x8x8xf32> to vector<2x8x8xf32>
    %253 = arith.addf %250, %252 : vector<2x8x8xf32>
    %254 = vector.extract_strided_slice %234 {offsets = [6, 0, 0, 0], sizes = [1, 2, 8, 8], strides = [1, 1, 1, 1]} : vector<8x2x8x8xf32> to vector<1x2x8x8xf32>
    %255 = vector.shape_cast %254 : vector<1x2x8x8xf32> to vector<2x8x8xf32>
    %256 = arith.addf %253, %255 : vector<2x8x8xf32>
    %257 = vector.extract_strided_slice %234 {offsets = [7, 0, 0, 0], sizes = [1, 2, 8, 8], strides = [1, 1, 1, 1]} : vector<8x2x8x8xf32> to vector<1x2x8x8xf32>
    %258 = vector.shape_cast %257 : vector<1x2x8x8xf32> to vector<2x8x8xf32>
    %259 = arith.addf %256, %258 : vector<2x8x8xf32>
    %cst_91 = arith.constant 1.250000e-01 : f32
    %260 = vector.broadcast %cst_91 : f32 to vector<2x8x8xf32>
    %261 = arith.mulf %259, %260 : vector<2x8x8xf32>
    %c1_92 = arith.constant 1 : index
    %c0_93 = arith.constant 0 : index
    %c0_94 = arith.constant 0 : index
    %262 = vector.load %arg1[%c1_92, %c0_93, %c0_94] : memref<2x1x64xf32, #tpu.memory_space<vmem>>, vector<1x1x64xf32>
    %263 = vector.shape_cast %262 : vector<1x1x64xf32> to vector<1x64xf32>
    %c1_95 = arith.constant 1 : index
    %c0_96 = arith.constant 0 : index
    %c0_97 = arith.constant 0 : index
    %264 = vector.load %arg2[%c1_95, %c0_96, %c0_97] : memref<2x1x64xf32, #tpu.memory_space<vmem>>, vector<1x1x64xf32>
    %265 = vector.shape_cast %264 : vector<1x1x64xf32> to vector<1x64xf32>
    %cst_98 = arith.constant dense<0.000000e+00> : vector<16xf32>
    %266 = vector.multi_reduction <add>, %233, %cst_98 [1] : vector<16x64xf32> to vector<16xf32>
    %267 = vector.shape_cast %266 : vector<16xf32> to vector<16x1xf32>
    %cst_99 = arith.constant 6.400000e+01 : f32
    %268 = vector.broadcast %cst_99 : f32 to vector<16x1xf32>
    %269 = arith.divf %267, %268 : vector<16x1xf32>
    %270 = vector.broadcast %269 : vector<16x1xf32> to vector<16x64xf32>
    %271 = arith.subf %233, %270 : vector<16x64xf32>
    %272 = arith.mulf %271, %271 : vector<16x64xf32>
    %cst_100 = arith.constant dense<0.000000e+00> : vector<16xf32>
    %273 = vector.multi_reduction <add>, %272, %cst_100 [1] : vector<16x64xf32> to vector<16xf32>
    %274 = vector.shape_cast %273 : vector<16xf32> to vector<16x1xf32>
    %cst_101 = arith.constant 6.400000e+01 : f32
    %275 = vector.broadcast %cst_101 : f32 to vector<16x1xf32>
    %276 = arith.divf %274, %275 : vector<16x1xf32>
    %cst_102 = arith.constant 9.99999974E-6 : f32
    %277 = vector.broadcast %cst_102 : f32 to vector<16x1xf32>
    %278 = arith.addf %276, %277 : vector<16x1xf32>
    %279 = math.rsqrt %278 : vector<16x1xf32>
    %280 = vector.broadcast %279 : vector<16x1xf32> to vector<16x64xf32>
    %281 = arith.mulf %271, %280 : vector<16x64xf32>
    %282 = vector.broadcast %263 : vector<1x64xf32> to vector<16x64xf32>
    %283 = arith.mulf %281, %282 : vector<16x64xf32>
    %284 = vector.broadcast %265 : vector<1x64xf32> to vector<16x64xf32>
    %285 = arith.addf %283, %284 : vector<16x64xf32>
    %c1_103 = arith.constant 1 : index
    %c0_104 = arith.constant 0 : index
    %c0_105 = arith.constant 0 : index
    %c0_106 = arith.constant 0 : index
    %286 = vector.load %arg3[%c1_103, %c0_104, %c0_105, %c0_106] : memref<2x3x64x64xbf16, #tpu.memory_space<vmem>>, vector<1x1x64x64xbf16>
    %287 = vector.shape_cast %286 : vector<1x1x64x64xbf16> to vector<64x64xbf16>
    %288 = arith.truncf %285 : vector<16x64xf32> to vector<16x64xbf16>
    %cst_107 = arith.constant dense<0.000000e+00> : vector<16x64xf32>
    %289 = tpu.matmul %288, %287, %cst_107 {dimension_numbers = #tpu.dot_dimension_numbers<[1], [0], [0], [1], [0, 0, 1, 1], [], []>} : vector<16x64xbf16>, vector<64x64xbf16>, vector<16x64xf32> -> vector<16x64xf32>
    %c1_108 = arith.constant 1 : index
    %c0_109 = arith.constant 0 : index
    %c0_110 = arith.constant 0 : index
    %c0_111 = arith.constant 0 : index
    %290 = vector.load %arg4[%c1_108, %c0_109, %c0_110, %c0_111] : memref<2x3x1x64xf32, #tpu.memory_space<vmem>>, vector<1x1x1x64xf32>
    %291 = vector.shape_cast %290 : vector<1x1x1x64xf32> to vector<1x64xf32>
    %292 = vector.broadcast %291 : vector<1x64xf32> to vector<16x64xf32>
    %293 = arith.addf %289, %292 : vector<16x64xf32>
    %c1_112 = arith.constant 1 : index
    %c1_113 = arith.constant 1 : index
    %c0_114 = arith.constant 0 : index
    %c0_115 = arith.constant 0 : index
    %294 = vector.load %arg3[%c1_112, %c1_113, %c0_114, %c0_115] : memref<2x3x64x64xbf16, #tpu.memory_space<vmem>>, vector<1x1x64x64xbf16>
    %295 = vector.shape_cast %294 : vector<1x1x64x64xbf16> to vector<64x64xbf16>
    %296 = arith.truncf %285 : vector<16x64xf32> to vector<16x64xbf16>
    %cst_116 = arith.constant dense<0.000000e+00> : vector<16x64xf32>
    %297 = tpu.matmul %296, %295, %cst_116 {dimension_numbers = #tpu.dot_dimension_numbers<[1], [0], [0], [1], [0, 0, 1, 1], [], []>} : vector<16x64xbf16>, vector<64x64xbf16>, vector<16x64xf32> -> vector<16x64xf32>
    %c1_117 = arith.constant 1 : index
    %c1_118 = arith.constant 1 : index
    %c0_119 = arith.constant 0 : index
    %c0_120 = arith.constant 0 : index
    %298 = vector.load %arg4[%c1_117, %c1_118, %c0_119, %c0_120] : memref<2x3x1x64xf32, #tpu.memory_space<vmem>>, vector<1x1x1x64xf32>
    %299 = vector.shape_cast %298 : vector<1x1x1x64xf32> to vector<1x64xf32>
    %300 = vector.broadcast %299 : vector<1x64xf32> to vector<16x64xf32>
    %301 = arith.addf %297, %300 : vector<16x64xf32>
    %c1_121 = arith.constant 1 : index
    %c2_122 = arith.constant 2 : index
    %c0_123 = arith.constant 0 : index
    %c0_124 = arith.constant 0 : index
    %302 = vector.load %arg3[%c1_121, %c2_122, %c0_123, %c0_124] : memref<2x3x64x64xbf16, #tpu.memory_space<vmem>>, vector<1x1x64x64xbf16>
    %303 = vector.shape_cast %302 : vector<1x1x64x64xbf16> to vector<64x64xbf16>
    %304 = arith.truncf %285 : vector<16x64xf32> to vector<16x64xbf16>
    %cst_125 = arith.constant dense<0.000000e+00> : vector<16x64xf32>
    %305 = tpu.matmul %304, %303, %cst_125 {dimension_numbers = #tpu.dot_dimension_numbers<[1], [0], [0], [1], [0, 0, 1, 1], [], []>} : vector<16x64xbf16>, vector<64x64xbf16>, vector<16x64xf32> -> vector<16x64xf32>
    %c1_126 = arith.constant 1 : index
    %c2_127 = arith.constant 2 : index
    %c0_128 = arith.constant 0 : index
    %c0_129 = arith.constant 0 : index
    %306 = vector.load %arg4[%c1_126, %c2_127, %c0_128, %c0_129] : memref<2x3x1x64xf32, #tpu.memory_space<vmem>>, vector<1x1x1x64xf32>
    %307 = vector.shape_cast %306 : vector<1x1x1x64xf32> to vector<1x64xf32>
    %308 = vector.broadcast %307 : vector<1x64xf32> to vector<16x64xf32>
    %309 = arith.addf %305, %308 : vector<16x64xf32>
    %310 = vector.extract_strided_slice %293 {offsets = [0, 0], sizes = [16, 8], strides = [1, 1]} : vector<16x64xf32> to vector<16x8xf32>
    %311 = vector.extract_strided_slice %293 {offsets = [0, 8], sizes = [16, 8], strides = [1, 1]} : vector<16x64xf32> to vector<16x8xf32>
    %312 = vector.extract_strided_slice %293 {offsets = [0, 16], sizes = [16, 8], strides = [1, 1]} : vector<16x64xf32> to vector<16x8xf32>
    %313 = vector.extract_strided_slice %293 {offsets = [0, 24], sizes = [16, 8], strides = [1, 1]} : vector<16x64xf32> to vector<16x8xf32>
    %314 = vector.extract_strided_slice %293 {offsets = [0, 32], sizes = [16, 8], strides = [1, 1]} : vector<16x64xf32> to vector<16x8xf32>
    %315 = vector.extract_strided_slice %293 {offsets = [0, 40], sizes = [16, 8], strides = [1, 1]} : vector<16x64xf32> to vector<16x8xf32>
    %316 = vector.extract_strided_slice %293 {offsets = [0, 48], sizes = [16, 8], strides = [1, 1]} : vector<16x64xf32> to vector<16x8xf32>
    %317 = vector.extract_strided_slice %293 {offsets = [0, 56], sizes = [16, 8], strides = [1, 1]} : vector<16x64xf32> to vector<16x8xf32>
    %318 = vector.shape_cast %310 : vector<16x8xf32> to vector<1x16x8xf32>
    %319 = vector.shape_cast %311 : vector<16x8xf32> to vector<1x16x8xf32>
    %320 = vector.shape_cast %312 : vector<16x8xf32> to vector<1x16x8xf32>
    %321 = vector.shape_cast %313 : vector<16x8xf32> to vector<1x16x8xf32>
    %322 = vector.shape_cast %314 : vector<16x8xf32> to vector<1x16x8xf32>
    %323 = vector.shape_cast %315 : vector<16x8xf32> to vector<1x16x8xf32>
    %324 = vector.shape_cast %316 : vector<16x8xf32> to vector<1x16x8xf32>
    %325 = vector.shape_cast %317 : vector<16x8xf32> to vector<1x16x8xf32>
    %326 = tpu.concatenate %318, %319, %320, %321, %322, %323, %324, %325 in 0 : vector<1x16x8xf32>, vector<1x16x8xf32>, vector<1x16x8xf32>, vector<1x16x8xf32>, vector<1x16x8xf32>, vector<1x16x8xf32>, vector<1x16x8xf32>, vector<1x16x8xf32> -> vector<8x16x8xf32>
    %327 = vector.shape_cast %326 : vector<8x16x8xf32> to vector<16x8x8xf32>
    %328 = vector.extract_strided_slice %301 {offsets = [0, 0], sizes = [16, 8], strides = [1, 1]} : vector<16x64xf32> to vector<16x8xf32>
    %329 = vector.extract_strided_slice %301 {offsets = [0, 8], sizes = [16, 8], strides = [1, 1]} : vector<16x64xf32> to vector<16x8xf32>
    %330 = vector.extract_strided_slice %301 {offsets = [0, 16], sizes = [16, 8], strides = [1, 1]} : vector<16x64xf32> to vector<16x8xf32>
    %331 = vector.extract_strided_slice %301 {offsets = [0, 24], sizes = [16, 8], strides = [1, 1]} : vector<16x64xf32> to vector<16x8xf32>
    %332 = vector.extract_strided_slice %301 {offsets = [0, 32], sizes = [16, 8], strides = [1, 1]} : vector<16x64xf32> to vector<16x8xf32>
    %333 = vector.extract_strided_slice %301 {offsets = [0, 40], sizes = [16, 8], strides = [1, 1]} : vector<16x64xf32> to vector<16x8xf32>
    %334 = vector.extract_strided_slice %301 {offsets = [0, 48], sizes = [16, 8], strides = [1, 1]} : vector<16x64xf32> to vector<16x8xf32>
    %335 = vector.extract_strided_slice %301 {offsets = [0, 56], sizes = [16, 8], strides = [1, 1]} : vector<16x64xf32> to vector<16x8xf32>
    %336 = vector.shape_cast %328 : vector<16x8xf32> to vector<1x16x8xf32>
    %337 = vector.shape_cast %329 : vector<16x8xf32> to vector<1x16x8xf32>
    %338 = vector.shape_cast %330 : vector<16x8xf32> to vector<1x16x8xf32>
    %339 = vector.shape_cast %331 : vector<16x8xf32> to vector<1x16x8xf32>
    %340 = vector.shape_cast %332 : vector<16x8xf32> to vector<1x16x8xf32>
    %341 = vector.shape_cast %333 : vector<16x8xf32> to vector<1x16x8xf32>
    %342 = vector.shape_cast %334 : vector<16x8xf32> to vector<1x16x8xf32>
    %343 = vector.shape_cast %335 : vector<16x8xf32> to vector<1x16x8xf32>
    %344 = tpu.concatenate %336, %337, %338, %339, %340, %341, %342, %343 in 0 : vector<1x16x8xf32>, vector<1x16x8xf32>, vector<1x16x8xf32>, vector<1x16x8xf32>, vector<1x16x8xf32>, vector<1x16x8xf32>, vector<1x16x8xf32>, vector<1x16x8xf32> -> vector<8x16x8xf32>
    %345 = vector.shape_cast %344 : vector<8x16x8xf32> to vector<16x8x8xf32>
    %346 = vector.extract_strided_slice %309 {offsets = [0, 0], sizes = [16, 8], strides = [1, 1]} : vector<16x64xf32> to vector<16x8xf32>
    %347 = vector.extract_strided_slice %309 {offsets = [0, 8], sizes = [16, 8], strides = [1, 1]} : vector<16x64xf32> to vector<16x8xf32>
    %348 = vector.extract_strided_slice %309 {offsets = [0, 16], sizes = [16, 8], strides = [1, 1]} : vector<16x64xf32> to vector<16x8xf32>
    %349 = vector.extract_strided_slice %309 {offsets = [0, 24], sizes = [16, 8], strides = [1, 1]} : vector<16x64xf32> to vector<16x8xf32>
    %350 = vector.extract_strided_slice %309 {offsets = [0, 32], sizes = [16, 8], strides = [1, 1]} : vector<16x64xf32> to vector<16x8xf32>
    %351 = vector.extract_strided_slice %309 {offsets = [0, 40], sizes = [16, 8], strides = [1, 1]} : vector<16x64xf32> to vector<16x8xf32>
    %352 = vector.extract_strided_slice %309 {offsets = [0, 48], sizes = [16, 8], strides = [1, 1]} : vector<16x64xf32> to vector<16x8xf32>
    %353 = vector.extract_strided_slice %309 {offsets = [0, 56], sizes = [16, 8], strides = [1, 1]} : vector<16x64xf32> to vector<16x8xf32>
    %354 = vector.shape_cast %346 : vector<16x8xf32> to vector<1x16x8xf32>
    %355 = vector.shape_cast %347 : vector<16x8xf32> to vector<1x16x8xf32>
    %356 = vector.shape_cast %348 : vector<16x8xf32> to vector<1x16x8xf32>
    %357 = vector.shape_cast %349 : vector<16x8xf32> to vector<1x16x8xf32>
    %358 = vector.shape_cast %350 : vector<16x8xf32> to vector<1x16x8xf32>
    %359 = vector.shape_cast %351 : vector<16x8xf32> to vector<1x16x8xf32>
    %360 = vector.shape_cast %352 : vector<16x8xf32> to vector<1x16x8xf32>
    %361 = vector.shape_cast %353 : vector<16x8xf32> to vector<1x16x8xf32>
    %362 = tpu.concatenate %354, %355, %356, %357, %358, %359, %360, %361 in 0 : vector<1x16x8xf32>, vector<1x16x8xf32>, vector<1x16x8xf32>, vector<1x16x8xf32>, vector<1x16x8xf32>, vector<1x16x8xf32>, vector<1x16x8xf32>, vector<1x16x8xf32> -> vector<8x16x8xf32>
    %363 = vector.shape_cast %362 : vector<8x16x8xf32> to vector<16x8x8xf32>
    %364 = arith.truncf %327 : vector<16x8x8xf32> to vector<16x8x8xbf16>
    %365 = arith.truncf %345 : vector<16x8x8xf32> to vector<16x8x8xbf16>
    "tpu.trace_start"() <{level = 10 : i32, message = "ntd,nsd->nts"}> : () -> ()
    %cst_130 = arith.constant dense<0.000000e+00> : vector<16x8x8xf32>
    %366 = tpu.matmul %364, %365, %cst_130 {dimension_numbers = #tpu.dot_dimension_numbers<[2], [2], [1], [1], [0, 0, 0, 1, 1, 1], [0], [0]>} : vector<16x8x8xbf16>, vector<16x8x8xbf16>, vector<16x8x8xf32> -> vector<16x8x8xf32>
    "tpu.trace_stop"() : () -> ()
    %cst_131 = arith.constant dense<0xFF800000> : vector<16x8xf32>
    %367 = vector.multi_reduction <maximumf>, %366, %cst_131 [2] : vector<16x8x8xf32> to vector<16x8xf32>
    %368 = vector.shape_cast %367 : vector<16x8xf32> to vector<16x8x1xf32>
    %369 = vector.broadcast %368 : vector<16x8x1xf32> to vector<16x8x8xf32>
    %370 = arith.subf %366, %369 : vector<16x8x8xf32>
    %371 = math.exp %370 : vector<16x8x8xf32>
    %cst_132 = arith.constant dense<0.000000e+00> : vector<16x8xf32>
    %372 = vector.multi_reduction <add>, %371, %cst_132 [2] : vector<16x8x8xf32> to vector<16x8xf32>
    %373 = vector.shape_cast %372 : vector<16x8xf32> to vector<16x8x1xf32>
    %374 = tpu.reciprocal %373 {approx = true} : vector<16x8x1xf32> -> vector<16x8x1xf32>
    %375 = arith.mulf %373, %374 : vector<16x8x1xf32>
    %cst_133 = arith.constant 2.000000e+00 : f32
    %376 = vector.broadcast %cst_133 : f32 to vector<16x8x1xf32>
    %377 = arith.subf %376, %375 : vector<16x8x1xf32>
    %378 = arith.mulf %374, %377 : vector<16x8x1xf32>
    %379 = vector.broadcast %378 : vector<16x8x1xf32> to vector<16x8x8xf32>
    %380 = arith.mulf %371, %379 : vector<16x8x8xf32>
    %381 = arith.truncf %380 : vector<16x8x8xf32> to vector<16x8x8xbf16>
    %382 = arith.truncf %363 : vector<16x8x8xf32> to vector<16x8x8xbf16>
    "tpu.trace_start"() <{level = 10 : i32, message = "nts,nsd->ntd"}> : () -> ()
    %cst_134 = arith.constant dense<0.000000e+00> : vector<16x8x8xf32>
    %383 = tpu.matmul %381, %382, %cst_134 {dimension_numbers = #tpu.dot_dimension_numbers<[2], [1], [1], [2], [0, 0, 0, 1, 1, 2], [0], [0]>} : vector<16x8x8xbf16>, vector<16x8x8xbf16>, vector<16x8x8xf32> -> vector<16x8x8xf32>
    "tpu.trace_stop"() : () -> ()
    %384 = vector.shape_cast %383 : vector<16x8x8xf32> to vector<8x2x8x8xf32>
    %385 = vector.extract_strided_slice %384 {offsets = [0, 0, 0, 0], sizes = [1, 2, 8, 8], strides = [1, 1, 1, 1]} : vector<8x2x8x8xf32> to vector<1x2x8x8xf32>
    %386 = vector.shape_cast %385 : vector<1x2x8x8xf32> to vector<2x8x8xf32>
    %387 = vector.extract_strided_slice %384 {offsets = [1, 0, 0, 0], sizes = [1, 2, 8, 8], strides = [1, 1, 1, 1]} : vector<8x2x8x8xf32> to vector<1x2x8x8xf32>
    %388 = vector.shape_cast %387 : vector<1x2x8x8xf32> to vector<2x8x8xf32>
    %389 = vector.extract_strided_slice %384 {offsets = [2, 0, 0, 0], sizes = [1, 2, 8, 8], strides = [1, 1, 1, 1]} : vector<8x2x8x8xf32> to vector<1x2x8x8xf32>
    %390 = vector.shape_cast %389 : vector<1x2x8x8xf32> to vector<2x8x8xf32>
    %391 = vector.extract_strided_slice %384 {offsets = [3, 0, 0, 0], sizes = [1, 2, 8, 8], strides = [1, 1, 1, 1]} : vector<8x2x8x8xf32> to vector<1x2x8x8xf32>
    %392 = vector.shape_cast %391 : vector<1x2x8x8xf32> to vector<2x8x8xf32>
    %393 = vector.extract_strided_slice %384 {offsets = [4, 0, 0, 0], sizes = [1, 2, 8, 8], strides = [1, 1, 1, 1]} : vector<8x2x8x8xf32> to vector<1x2x8x8xf32>
    %394 = vector.shape_cast %393 : vector<1x2x8x8xf32> to vector<2x8x8xf32>
    %395 = vector.extract_strided_slice %384 {offsets = [5, 0, 0, 0], sizes = [1, 2, 8, 8], strides = [1, 1, 1, 1]} : vector<8x2x8x8xf32> to vector<1x2x8x8xf32>
    %396 = vector.shape_cast %395 : vector<1x2x8x8xf32> to vector<2x8x8xf32>
    %397 = vector.extract_strided_slice %384 {offsets = [6, 0, 0, 0], sizes = [1, 2, 8, 8], strides = [1, 1, 1, 1]} : vector<8x2x8x8xf32> to vector<1x2x8x8xf32>
    %398 = vector.shape_cast %397 : vector<1x2x8x8xf32> to vector<2x8x8xf32>
    %399 = vector.extract_strided_slice %384 {offsets = [7, 0, 0, 0], sizes = [1, 2, 8, 8], strides = [1, 1, 1, 1]} : vector<8x2x8x8xf32> to vector<1x2x8x8xf32>
    %400 = vector.shape_cast %399 : vector<1x2x8x8xf32> to vector<2x8x8xf32>
    %401 = tpu.concatenate %386, %388, %390, %392, %394, %396, %398, %400 in 2 : vector<2x8x8xf32>, vector<2x8x8xf32>, vector<2x8x8xf32>, vector<2x8x8xf32>, vector<2x8x8xf32>, vector<2x8x8xf32>, vector<2x8x8xf32>, vector<2x8x8xf32> -> vector<2x8x64xf32>
    %402 = vector.shape_cast %401 : vector<2x8x64xf32> to vector<16x64xf32>
    %c1_135 = arith.constant 1 : index
    %c0_136 = arith.constant 0 : index
    %c0_137 = arith.constant 0 : index
    %403 = vector.load %arg5[%c1_135, %c0_136, %c0_137] : memref<2x64x64xbf16, #tpu.memory_space<vmem>>, vector<1x64x64xbf16>
    %404 = vector.shape_cast %403 : vector<1x64x64xbf16> to vector<64x64xbf16>
    %405 = arith.truncf %402 : vector<16x64xf32> to vector<16x64xbf16>
    %cst_138 = arith.constant dense<0.000000e+00> : vector<16x64xf32>
    %406 = tpu.matmul %405, %404, %cst_138 {dimension_numbers = #tpu.dot_dimension_numbers<[1], [0], [0], [1], [0, 0, 1, 1], [], []>} : vector<16x64xbf16>, vector<64x64xbf16>, vector<16x64xf32> -> vector<16x64xf32>
    %407 = arith.addf %233, %406 : vector<16x64xf32>
    %c1_139 = arith.constant 1 : index
    %c0_140 = arith.constant 0 : index
    %c0_141 = arith.constant 0 : index
    %408 = vector.load %arg6[%c1_139, %c0_140, %c0_141] : memref<2x1x64xf32, #tpu.memory_space<vmem>>, vector<1x1x64xf32>
    %409 = vector.shape_cast %408 : vector<1x1x64xf32> to vector<1x64xf32>
    %410 = vector.broadcast %409 : vector<1x64xf32> to vector<16x64xf32>
    %411 = arith.addf %407, %410 : vector<16x64xf32>
    %c1_142 = arith.constant 1 : index
    %c0_143 = arith.constant 0 : index
    %c0_144 = arith.constant 0 : index
    %412 = vector.load %arg7[%c1_142, %c0_143, %c0_144] : memref<2x1x64xf32, #tpu.memory_space<vmem>>, vector<1x1x64xf32>
    %413 = vector.shape_cast %412 : vector<1x1x64xf32> to vector<1x64xf32>
    %c1_145 = arith.constant 1 : index
    %c0_146 = arith.constant 0 : index
    %c0_147 = arith.constant 0 : index
    %414 = vector.load %arg8[%c1_145, %c0_146, %c0_147] : memref<2x1x64xf32, #tpu.memory_space<vmem>>, vector<1x1x64xf32>
    %415 = vector.shape_cast %414 : vector<1x1x64xf32> to vector<1x64xf32>
    %cst_148 = arith.constant dense<0.000000e+00> : vector<16xf32>
    %416 = vector.multi_reduction <add>, %411, %cst_148 [1] : vector<16x64xf32> to vector<16xf32>
    %417 = vector.shape_cast %416 : vector<16xf32> to vector<16x1xf32>
    %cst_149 = arith.constant 6.400000e+01 : f32
    %418 = vector.broadcast %cst_149 : f32 to vector<16x1xf32>
    %419 = arith.divf %417, %418 : vector<16x1xf32>
    %420 = vector.broadcast %419 : vector<16x1xf32> to vector<16x64xf32>
    %421 = arith.subf %411, %420 : vector<16x64xf32>
    %422 = arith.mulf %421, %421 : vector<16x64xf32>
    %cst_150 = arith.constant dense<0.000000e+00> : vector<16xf32>
    %423 = vector.multi_reduction <add>, %422, %cst_150 [1] : vector<16x64xf32> to vector<16xf32>
    %424 = vector.shape_cast %423 : vector<16xf32> to vector<16x1xf32>
    %cst_151 = arith.constant 6.400000e+01 : f32
    %425 = vector.broadcast %cst_151 : f32 to vector<16x1xf32>
    %426 = arith.divf %424, %425 : vector<16x1xf32>
    %cst_152 = arith.constant 9.99999974E-6 : f32
    %427 = vector.broadcast %cst_152 : f32 to vector<16x1xf32>
    %428 = arith.addf %426, %427 : vector<16x1xf32>
    %429 = math.rsqrt %428 : vector<16x1xf32>
    %430 = vector.broadcast %429 : vector<16x1xf32> to vector<16x64xf32>
    %431 = arith.mulf %421, %430 : vector<16x64xf32>
    %432 = vector.broadcast %413 : vector<1x64xf32> to vector<16x64xf32>
    %433 = arith.mulf %431, %432 : vector<16x64xf32>
    %434 = vector.broadcast %415 : vector<1x64xf32> to vector<16x64xf32>
    %435 = arith.addf %433, %434 : vector<16x64xf32>
    %c1_153 = arith.constant 1 : index
    %c0_154 = arith.constant 0 : index
    %c0_155 = arith.constant 0 : index
    %436 = vector.load %arg9[%c1_153, %c0_154, %c0_155] : memref<2x64x256xbf16, #tpu.memory_space<vmem>>, vector<1x64x256xbf16>
    %437 = vector.shape_cast %436 : vector<1x64x256xbf16> to vector<64x256xbf16>
    %438 = arith.truncf %435 : vector<16x64xf32> to vector<16x64xbf16>
    %cst_156 = arith.constant dense<0.000000e+00> : vector<16x256xf32>
    %439 = tpu.matmul %438, %437, %cst_156 {dimension_numbers = #tpu.dot_dimension_numbers<[1], [0], [0], [1], [0, 0, 1, 1], [], []>} : vector<16x64xbf16>, vector<64x256xbf16>, vector<16x256xf32> -> vector<16x256xf32>
    %c1_157 = arith.constant 1 : index
    %c0_158 = arith.constant 0 : index
    %c0_159 = arith.constant 0 : index
    %440 = vector.load %arg10[%c1_157, %c0_158, %c0_159] : memref<2x1x256xf32, #tpu.memory_space<vmem>>, vector<1x1x256xf32>
    %441 = vector.shape_cast %440 : vector<1x1x256xf32> to vector<1x256xf32>
    %442 = vector.broadcast %441 : vector<1x256xf32> to vector<16x256xf32>
    %443 = arith.addf %439, %442 : vector<16x256xf32>
    %cst_160 = arith.constant 5.000000e-01 : f32
    %444 = vector.broadcast %cst_160 : f32 to vector<16x256xf32>
    %445 = arith.mulf %444, %443 : vector<16x256xf32>
    %cst_161 = arith.constant 0.707106769 : f32
    %446 = vector.broadcast %cst_161 : f32 to vector<16x256xf32>
    %447 = arith.mulf %443, %446 : vector<16x256xf32>
    %cst_162 = arith.constant 0.000000e+00 : f32
    %448 = vector.broadcast %cst_162 : f32 to vector<16x256xf32>
    %449 = arith.cmpf olt, %447, %448 : vector<16x256xf32>
    %cst_163 = arith.constant -1.000000e+00 : f32
    %cst_164 = arith.constant 1.000000e+00 : f32
    %450 = vector.broadcast %cst_163 : f32 to vector<16x256xf32>
    %451 = vector.broadcast %cst_164 : f32 to vector<16x256xf32>
    %452 = arith.select %449, %450, %451 : vector<16x256xi1>, vector<16x256xf32>
    %453 = math.absf %447 : vector<16x256xf32>
    %cst_165 = arith.constant 0.327591091 : f32
    %454 = vector.broadcast %cst_165 : f32 to vector<16x256xf32>
    %455 = arith.mulf %454, %453 : vector<16x256xf32>
    %cst_166 = arith.constant 1.000000e+00 : f32
    %456 = vector.broadcast %cst_166 : f32 to vector<16x256xf32>
    %457 = arith.addf %456, %455 : vector<16x256xf32>
    %cst_167 = arith.constant 1.000000e+00 : f32
    %458 = vector.broadcast %cst_167 : f32 to vector<16x256xf32>
    %459 = arith.divf %458, %457 : vector<16x256xf32>
    %cst_168 = arith.constant 1.06140542 : f32
    %460 = vector.broadcast %cst_168 : f32 to vector<16x256xf32>
    %461 = arith.mulf %460, %459 : vector<16x256xf32>
    %cst_169 = arith.constant -1.45315206 : f32
    %462 = vector.broadcast %cst_169 : f32 to vector<16x256xf32>
    %463 = arith.addf %461, %462 : vector<16x256xf32>
    %464 = arith.mulf %463, %459 : vector<16x256xf32>
    %cst_170 = arith.constant 1.42141378 : f32
    %465 = vector.broadcast %cst_170 : f32 to vector<16x256xf32>
    %466 = arith.addf %464, %465 : vector<16x256xf32>
    %467 = arith.mulf %466, %459 : vector<16x256xf32>
    %cst_171 = arith.constant -0.284496725 : f32
    %468 = vector.broadcast %cst_171 : f32 to vector<16x256xf32>
    %469 = arith.addf %467, %468 : vector<16x256xf32>
    %470 = arith.mulf %469, %459 : vector<16x256xf32>
    %cst_172 = arith.constant 0.254829586 : f32
    %471 = vector.broadcast %cst_172 : f32 to vector<16x256xf32>
    %472 = arith.addf %470, %471 : vector<16x256xf32>
    %473 = arith.mulf %472, %459 : vector<16x256xf32>
    %cst_173 = arith.constant 0.000000e+00 : f32
    %474 = vector.broadcast %cst_173 : f32 to vector<16x256xf32>
    %475 = arith.subf %474, %453 : vector<16x256xf32>
    %476 = arith.mulf %475, %453 : vector<16x256xf32>
    %477 = math.exp %476 : vector<16x256xf32>
    %478 = arith.mulf %473, %477 : vector<16x256xf32>
    %cst_174 = arith.constant 1.000000e+00 : f32
    %479 = vector.broadcast %cst_174 : f32 to vector<16x256xf32>
    %480 = arith.subf %479, %478 : vector<16x256xf32>
    %481 = arith.mulf %452, %480 : vector<16x256xf32>
    %cst_175 = arith.constant 1.000000e+00 : f32
    %482 = vector.broadcast %cst_175 : f32 to vector<16x256xf32>
    %483 = arith.addf %482, %481 : vector<16x256xf32>
    %484 = arith.mulf %445, %483 : vector<16x256xf32>
    %c1_176 = arith.constant 1 : index
    %c0_177 = arith.constant 0 : index
    %c0_178 = arith.constant 0 : index
    %485 = vector.load %arg11[%c1_176, %c0_177, %c0_178] : memref<2x256x64xbf16, #tpu.memory_space<vmem>>, vector<1x256x64xbf16>
    %486 = vector.shape_cast %485 : vector<1x256x64xbf16> to vector<256x64xbf16>
    %487 = arith.truncf %484 : vector<16x256xf32> to vector<16x256xbf16>
    %cst_179 = arith.constant dense<0.000000e+00> : vector<16x64xf32>
    %488 = tpu.matmul %487, %486, %cst_179 {dimension_numbers = #tpu.dot_dimension_numbers<[1], [0], [0], [1], [0, 0, 1, 1], [], []>} : vector<16x256xbf16>, vector<256x64xbf16>, vector<16x64xf32> -> vector<16x64xf32>
    %489 = arith.addf %411, %488 : vector<16x64xf32>
    %c1_180 = arith.constant 1 : index
    %c0_181 = arith.constant 0 : index
    %c0_182 = arith.constant 0 : index
    %490 = vector.load %arg12[%c1_180, %c0_181, %c0_182] : memref<2x1x64xf32, #tpu.memory_space<vmem>>, vector<1x1x64xf32>
    %491 = vector.shape_cast %490 : vector<1x1x64xf32> to vector<1x64xf32>
    %492 = vector.broadcast %491 : vector<1x64xf32> to vector<16x64xf32>
    %493 = arith.addf %489, %492 : vector<16x64xf32>
    %494 = vector.shape_cast %380 : vector<16x8x8xf32> to vector<8x2x8x8xf32>
    %495 = vector.extract_strided_slice %494 {offsets = [0, 0, 0, 0], sizes = [1, 2, 8, 8], strides = [1, 1, 1, 1]} : vector<8x2x8x8xf32> to vector<1x2x8x8xf32>
    %496 = vector.shape_cast %495 : vector<1x2x8x8xf32> to vector<2x8x8xf32>
    %cst_183 = arith.constant 0.000000e+00 : f32
    %497 = vector.broadcast %cst_183 : f32 to vector<2x8x8xf32>
    %498 = arith.addf %497, %496 : vector<2x8x8xf32>
    %499 = vector.extract_strided_slice %494 {offsets = [1, 0, 0, 0], sizes = [1, 2, 8, 8], strides = [1, 1, 1, 1]} : vector<8x2x8x8xf32> to vector<1x2x8x8xf32>
    %500 = vector.shape_cast %499 : vector<1x2x8x8xf32> to vector<2x8x8xf32>
    %501 = arith.addf %498, %500 : vector<2x8x8xf32>
    %502 = vector.extract_strided_slice %494 {offsets = [2, 0, 0, 0], sizes = [1, 2, 8, 8], strides = [1, 1, 1, 1]} : vector<8x2x8x8xf32> to vector<1x2x8x8xf32>
    %503 = vector.shape_cast %502 : vector<1x2x8x8xf32> to vector<2x8x8xf32>
    %504 = arith.addf %501, %503 : vector<2x8x8xf32>
    %505 = vector.extract_strided_slice %494 {offsets = [3, 0, 0, 0], sizes = [1, 2, 8, 8], strides = [1, 1, 1, 1]} : vector<8x2x8x8xf32> to vector<1x2x8x8xf32>
    %506 = vector.shape_cast %505 : vector<1x2x8x8xf32> to vector<2x8x8xf32>
    %507 = arith.addf %504, %506 : vector<2x8x8xf32>
    %508 = vector.extract_strided_slice %494 {offsets = [4, 0, 0, 0], sizes = [1, 2, 8, 8], strides = [1, 1, 1, 1]} : vector<8x2x8x8xf32> to vector<1x2x8x8xf32>
    %509 = vector.shape_cast %508 : vector<1x2x8x8xf32> to vector<2x8x8xf32>
    %510 = arith.addf %507, %509 : vector<2x8x8xf32>
    %511 = vector.extract_strided_slice %494 {offsets = [5, 0, 0, 0], sizes = [1, 2, 8, 8], strides = [1, 1, 1, 1]} : vector<8x2x8x8xf32> to vector<1x2x8x8xf32>
    %512 = vector.shape_cast %511 : vector<1x2x8x8xf32> to vector<2x8x8xf32>
    %513 = arith.addf %510, %512 : vector<2x8x8xf32>
    %514 = vector.extract_strided_slice %494 {offsets = [6, 0, 0, 0], sizes = [1, 2, 8, 8], strides = [1, 1, 1, 1]} : vector<8x2x8x8xf32> to vector<1x2x8x8xf32>
    %515 = vector.shape_cast %514 : vector<1x2x8x8xf32> to vector<2x8x8xf32>
    %516 = arith.addf %513, %515 : vector<2x8x8xf32>
    %517 = vector.extract_strided_slice %494 {offsets = [7, 0, 0, 0], sizes = [1, 2, 8, 8], strides = [1, 1, 1, 1]} : vector<8x2x8x8xf32> to vector<1x2x8x8xf32>
    %518 = vector.shape_cast %517 : vector<1x2x8x8xf32> to vector<2x8x8xf32>
    %519 = arith.addf %516, %518 : vector<2x8x8xf32>
    %cst_184 = arith.constant 1.250000e-01 : f32
    %520 = vector.broadcast %cst_184 : f32 to vector<2x8x8xf32>
    %521 = arith.mulf %519, %520 : vector<2x8x8xf32>
    %522 = vector.shape_cast %261 : vector<2x8x8xf32> to vector<1x2x8x8xf32>
    %523 = vector.shape_cast %521 : vector<2x8x8xf32> to vector<1x2x8x8xf32>
    %524 = tpu.concatenate %522, %523 in 0 : vector<1x2x8x8xf32>, vector<1x2x8x8xf32> -> vector<2x2x8x8xf32>
    %c0_185 = arith.constant 0 : index
    %c0_186 = arith.constant 0 : index
    %c0_187 = arith.constant 0 : index
    %c0_188 = arith.constant 0 : index
    %525 = vector.load %arg16[%c0_185, %c0_186, %c0_187, %c0_188] : memref<2x2x8x8xf32, #tpu.memory_space<vmem>>, vector<2x2x8x8xf32>
    tpu.vector_store %arg16[%c0_185, %c0_186, %c0_187, %c0_188], %524 {strides = array<i32>} : memref<2x2x8x8xf32, #tpu.memory_space<vmem>>, vector<2x2x8x8xf32>,
    %526 = vector.shape_cast %493 : vector<16x64xf32> to vector<2x8x64xf32>
    %527 = vector.extract_strided_slice %526 {offsets = [0, 0, 0], sizes = [2, 1, 64], strides = [1, 1, 1]} : vector<2x8x64xf32> to vector<2x1x64xf32>
    %528 = vector.shape_cast %527 : vector<2x1x64xf32> to vector<2x64xf32>
    %c0_189 = arith.constant 0 : index
    %c0_190 = arith.constant 0 : index
    %529 = vector.load %arg13[%c0_189, %c0_190] : memref<64x512xbf16, #tpu.memory_space<vmem>>, vector<64x512xbf16>
    %530 = arith.truncf %528 : vector<2x64xf32> to vector<2x64xbf16>
    %cst_191 = arith.constant dense<0.000000e+00> : vector<2x512xf32>
    %531 = tpu.matmul %530, %529, %cst_191 {dimension_numbers = #tpu.dot_dimension_numbers<[1], [0], [0], [1], [0, 0, 1, 1], [], []>} : vector<2x64xbf16>, vector<64x512xbf16>, vector<2x512xf32> -> vector<2x512xf32>
    %c0_192 = arith.constant 0 : index
    %c0_193 = arith.constant 0 : index
    %532 = vector.load %arg14[%c0_192, %c0_193] : memref<1x512xf32, #tpu.memory_space<vmem>>, vector<1x512xf32>
    %533 = vector.broadcast %532 : vector<1x512xf32> to vector<2x512xf32>
    %534 = arith.addf %531, %533 : vector<2x512xf32>
    %c0_194 = arith.constant 0 : index
    %c0_195 = arith.constant 0 : index
    %535 = vector.load %arg15[%c0_194, %c0_195] : memref<2x512xf32, #tpu.memory_space<vmem>>, vector<2x512xf32>
    tpu.vector_store %arg15[%c0_194, %c0_195], %534 {strides = array<i32>} : memref<2x512xf32, #tpu.memory_space<vmem>>, vector<2x512xf32>,
    return
  }
}

</mosaic_0001>

<llo_original>
// kernel: tpu_custom_call.1
$region0: #{tpu_custom_call.1}
  #allocation0 [shape = 'u32[]', space=smem, size = 0x4, offset = 0x4, fixed_abs, tag = 'smem constant byte address 0x4 - core index']
  #allocation1 [shape = 'u32[72,128]{1,0:T(1,128)}', space=vmem, size = 0x9000, scoped, tag = 'internal scratch']
  %s0 = inlined_call_operand.hbm [shape: f32[2,8,64], index: 0, kind: input, shape index: {}]
  %s1 = inlined_call_operand.hbm [shape: f32[2,1,64], index: 1, kind: input, shape index: {}]
  %s2 = inlined_call_operand.hbm [shape: f32[2,1,64], index: 2, kind: input, shape index: {}]
  %s3 = inlined_call_operand.vmem [shape: bf16[2,3,64,64], index: 3, kind: input, shape index: {}]
  %s4 = inlined_call_operand.hbm [shape: f32[2,3,1,64], index: 4, kind: input, shape index: {}]
  %s5 = inlined_call_operand.vmem [shape: bf16[2,64,64], index: 5, kind: input, shape index: {}]
  %s6 = inlined_call_operand.hbm [shape: f32[2,1,64], index: 6, kind: input, shape index: {}]
  %s7 = inlined_call_operand.hbm [shape: f32[2,1,64], index: 7, kind: input, shape index: {}]
  %s8 = inlined_call_operand.hbm [shape: f32[2,1,64], index: 8, kind: input, shape index: {}]
  %s9 = inlined_call_operand.vmem [shape: bf16[2,64,256], index: 9, kind: input, shape index: {}]
  %s10 = inlined_call_operand.vmem [shape: f32[2,1,256], index: 10, kind: input, shape index: {}]
  %s11 = inlined_call_operand.vmem [shape: bf16[2,256,64], index: 11, kind: input, shape index: {}]
  %s12 = inlined_call_operand.hbm [shape: f32[2,1,64], index: 12, kind: input, shape index: {}]
  %s13 = inlined_call_operand.hbm [shape: bf16[64,512], index: 13, kind: input, shape index: {}]
  %s14 = inlined_call_operand.vmem [shape: f32[1,512], index: 14, kind: input, shape index: {}]
  %s15 = inlined_call_operand.hbm [shape: f32[2,512], index: 15, kind: output, shape index: {0}]
  %s16 = inlined_call_operand.hbm [shape: f32[2,2,8,8], index: 16, kind: output, shape index: {1}]
  %17 = xla_tuple %s15, %s16
  %s18 = sld [smem:[#allocation0]]
  $region114: #{tpu_custom_call.1} parent=0
    _
  %s20 = ssub.s32 1, %s18
  %s21 = scalar_select 0, %s20, %s18
  $region1: #{tpu_custom_call.1} parent=0
    #allocation2 [shape = 'u8[8192]{0}', space=vmem, size = 0x2000, scoped, tag = 'input window, operand 0, single buffered']
    #allocation3 [shape = 's32[1]{0}', space=sflag, size = 0x4, scoped, tag = 'scoped memory for tpu_custom_call.1']
    #allocation4 [shape = 's32[1]{0}', space=sflag, size = 0x4, scoped, tag = 'scoped memory for tpu_custom_call.1']
    #allocation5 [shape = 'u8[1024]{0}', space=vmem, size = 0x400, scoped, tag = 'input window, operand 1, single buffered']
    #allocation6 [shape = 's32[1]{0}', space=sflag, size = 0x4, scoped, tag = 'scoped memory for tpu_custom_call.1']
    #allocation7 [shape = 'u8[1024]{0}', space=vmem, size = 0x400, scoped, tag = 'input window, operand 2, single buffered']
    #allocation8 [shape = 'u8[3072]{0}', space=vmem, size = 0xc00, scoped, tag = 'input window, operand 4, single buffered']
    #allocation9 [shape = 's32[1]{0}', space=sflag, size = 0x4, scoped, tag = 'scoped memory for tpu_custom_call.1']
    #allocation10 [shape = 'u8[1024]{0}', space=vmem, size = 0x400, scoped, tag = 'input window, operand 6, single buffered']
    #allocation11 [shape = 'u8[1024]{0}', space=vmem, size = 0x400, scoped, tag = 'input window, operand 7, single buffered']
    #allocation12 [shape = 's32[1]{0}', space=sflag, size = 0x4, scoped, tag = 'scoped memory for tpu_custom_call.1']
    #allocation13 [shape = 'u8[1024]{0}', space=vmem, size = 0x400, scoped, tag = 'input window, operand 8, single buffered']
    #allocation14 [shape = 'u8[1024]{0}', space=vmem, size = 0x400, scoped, tag = 'input window, operand 12, single buffered']
    #allocation15 [shape = 's32[1]{0}', space=sflag, size = 0x4, scoped, tag = 'scoped memory for tpu_custom_call.1']
    #allocation16 [shape = 'u8[65536]{0}', space=vmem, size = 0x10000, scoped, tag = 'input window, operand 13, single buffered']
    #allocation17 [shape = 'u8[4096]{0}', space=vmem, size = 0x1000, scoped, tag = 'output window, operand 0, single buffered']
    #allocation18 [shape = 'u8[16384]{0}', space=vmem, size = 0x4000, scoped, tag = 'output window, operand 1, single buffered']
    #allocation19 [shape = 's32[1]{0}', space=sflag, size = 0x4, scoped, tag = 'scoped memory for tpu_custom_call.1']
    %22 = vsyncpa [#allocation3], 0
    %23 = vsyncpa [#allocation6], 0
    %24 = vsyncpa [#allocation9], 0
    %25 = vsyncpa [#allocation12], 0
    %26 = vsyncpa [#allocation15], 0
    %27 = vsyncpa [#allocation4], 0
    %28 = vsyncpa [#allocation19], 0
    // Predicated region
    $region2: #{tpu_custom_call.1} parent=1 // pred_check
      _
    $region3: #{tpu_custom_call.1} parent=1 // pred_check_branch
      %30 = sbr.rel (0) target = $region5
    $region4: #{tpu_custom_call.1} parent=1 // pred_region
      %32 = vsyncadd [#allocation3], 0
      %s33 = sshll.u32 %s0, 4
      %s34 = int_to_ptr.hbm [resolvable:$true] %s33
      %s35 = sshll.u32 [#allocation2], 4
      %s36 = int_to_ptr.vmem [resolvable:$true] %s35
      %41 = dma.hbm_to_vmem [thread:$0]  %s34, 256, %s36, [#allocation3], 128, 128, 8
    $region5: #{tpu_custom_call.1} parent=1 // pred_fallthru
      _
    // Predicated region
    $region6: #{tpu_custom_call.1} parent=1 // pred_check
      _
    $region7: #{tpu_custom_call.1} parent=1 // pred_check_branch
      %43 = sbr.rel (0) target = $region9
    $region8: #{tpu_custom_call.1} parent=1 // pred_region
      %45 = vsyncadd [#allocation6], 0
      %s46 = sshll.u32 %s1, 4
      %s47 = int_to_ptr.hbm [resolvable:$true] %s46
      %s48 = sshll.u32 [#allocation5], 4
      %s49 = int_to_ptr.vmem [resolvable:$true] %s48
      %54 = dma.hbm_to_vmem [thread:$0]  %s47, 32, %s49, [#allocation6], 16, 16, 1
    $region9: #{tpu_custom_call.1} parent=1 // pred_fallthru
      _
    // Predicated region
    $region10: #{tpu_custom_call.1} parent=1 // pred_check
      _
    $region11: #{tpu_custom_call.1} parent=1 // pred_check_branch
      %56 = sbr.rel (0) target = $region13
    $region12: #{tpu_custom_call.1} parent=1 // pred_region
      %58 = vsyncadd [#allocation6], 0
      %s59 = sshll.u32 %s2, 4
      %s60 = int_to_ptr.hbm [resolvable:$true] %s59
      %s61 = sshll.u32 [#allocation7], 4
      %s62 = int_to_ptr.vmem [resolvable:$true] %s61
      %67 = dma.hbm_to_vmem [thread:$0]  %s60, 32, %s62, [#allocation6], 16, 16, 1
    $region13: #{tpu_custom_call.1} parent=1 // pred_fallthru
      _
    // Predicated region
    $region14: #{tpu_custom_call.1} parent=1 // pred_check
      _
    $region15: #{tpu_custom_call.1} parent=1 // pred_check_branch
      %69 = sbr.rel (0) target = $region17
    $region16: #{tpu_custom_call.1} parent=1 // pred_region
      _
    $region17: #{tpu_custom_call.1} parent=1 // pred_fallthru
      _
    // Predicated region
    $region18: #{tpu_custom_call.1} parent=1 // pred_check
      _
    $region19: #{tpu_custom_call.1} parent=1 // pred_check_branch
      %71 = sbr.rel (0) target = $region21
    $region20: #{tpu_custom_call.1} parent=1 // pred_region
      %73 = vsyncadd [#allocation9], 0
      %s74 = sshll.u32 %s4, 4
      %s75 = int_to_ptr.hbm [resolvable:$true] %s74
      %s76 = sshll.u32 [#allocation8], 4
      %s77 = int_to_ptr.vmem [resolvable:$true] %s76
      %82 = dma.hbm_to_vmem [thread:$0]  %s75, 96, %s77, [#allocation9], 16, 16, 1
    $region21: #{tpu_custom_call.1} parent=1 // pred_fallthru
      _
    // Predicated region
    $region22: #{tpu_custom_call.1} parent=1 // pred_check
      _
    $region23: #{tpu_custom_call.1} parent=1 // pred_check_branch
      %84 = sbr.rel (0) target = $region25
    $region24: #{tpu_custom_call.1} parent=1 // pred_region
      _
    $region25: #{tpu_custom_call.1} parent=1 // pred_fallthru
      _
    // Predicated region
    $region26: #{tpu_custom_call.1} parent=1 // pred_check
      _
    $region27: #{tpu_custom_call.1} parent=1 // pred_check_branch
      %86 = sbr.rel (0) target = $region29
    $region28: #{tpu_custom_call.1} parent=1 // pred_region
      %88 = vsyncadd [#allocation9], 0
      %s89 = sshll.u32 %s6, 4
      %s90 = int_to_ptr.hbm [resolvable:$true] %s89
      %s91 = sshll.u32 [#allocation10], 4
      %s92 = int_to_ptr.vmem [resolvable:$true] %s91
      %97 = dma.hbm_to_vmem [thread:$0]  %s90, 32, %s92, [#allocation9], 16, 16, 1
    $region29: #{tpu_custom_call.1} parent=1 // pred_fallthru
      _
    // Predicated region
    $region30: #{tpu_custom_call.1} parent=1 // pred_check
      _
    $region31: #{tpu_custom_call.1} parent=1 // pred_check_branch
      %99 = sbr.rel (0) target = $region33
    $region32: #{tpu_custom_call.1} parent=1 // pred_region
      %101 = vsyncadd [#allocation12], 0
      %s102 = sshll.u32 %s7, 4
      %s103 = int_to_ptr.hbm [resolvable:$true] %s102
      %s104 = sshll.u32 [#allocation11], 4
      %s105 = int_to_ptr.vmem [resolvable:$true] %s104
      %110 = dma.hbm_to_vmem [thread:$0]  %s103, 32, %s105, [#allocation12], 16, 16, 1
    $region33: #{tpu_custom_call.1} parent=1 // pred_fallthru
      _
    // Predicated region
    $region34: #{tpu_custom_call.1} parent=1 // pred_check
      _
    $region35: #{tpu_custom_call.1} parent=1 // pred_check_branch
      %112 = sbr.rel (0) target = $region37
    $region36: #{tpu_custom_call.1} parent=1 // pred_region
      %114 = vsyncadd [#allocation12], 0
      %s115 = sshll.u32 %s8, 4
      %s116 = int_to_ptr.hbm [resolvable:$true] %s115
      %s117 = sshll.u32 [#allocation13], 4
      %s118 = int_to_ptr.vmem [resolvable:$true] %s117
      %123 = dma.hbm_to_vmem [thread:$0]  %s116, 32, %s118, [#allocation12], 16, 16, 1
    $region37: #{tpu_custom_call.1} parent=1 // pred_fallthru
      _
    // Predicated region
    $region38: #{tpu_custom_call.1} parent=1 // pred_check
      _
    $region39: #{tpu_custom_call.1} parent=1 // pred_check_branch
      %125 = sbr.rel (0) target = $region41
    $region40: #{tpu_custom_call.1} parent=1 // pred_region
      _
    $region41: #{tpu_custom_call.1} parent=1 // pred_fallthru
      _
    // Predicated region
    $region42: #{tpu_custom_call.1} parent=1 // pred_check
      _
    $region43: #{tpu_custom_call.1} parent=1 // pred_check_branch
      %127 = sbr.rel (0) target = $region45
    $region44: #{tpu_custom_call.1} parent=1 // pred_region
      _
    $region45: #{tpu_custom_call.1} parent=1 // pred_fallthru
      _
    // Predicated region
    $region46: #{tpu_custom_call.1} parent=1 // pred_check
      _
    $region47: #{tpu_custom_call.1} parent=1 // pred_check_branch
      %129 = sbr.rel (0) target = $region49
    $region48: #{tpu_custom_call.1} parent=1 // pred_region
      _
    $region49: #{tpu_custom_call.1} parent=1 // pred_fallthru
      _
    // Predicated region
    $region50: #{tpu_custom_call.1} parent=1 // pred_check
      _
    $region51: #{tpu_custom_call.1} parent=1 // pred_check_branch
      %131 = sbr.rel (0) target = $region53
    $region52: #{tpu_custom_call.1} parent=1 // pred_region
      %133 = vsyncadd [#allocation15], 0
      %s134 = sshll.u32 %s12, 4
      %s135 = int_to_ptr.hbm [resolvable:$true] %s134
      %s136 = sshll.u32 [#allocation14], 4
      %s137 = int_to_ptr.vmem [resolvable:$true] %s136
      %142 = dma.hbm_to_vmem [thread:$0]  %s135, 32, %s137, [#allocation15], 16, 16, 1
    $region53: #{tpu_custom_call.1} parent=1 // pred_fallthru
      _
    // Predicated region
    $region54: #{tpu_custom_call.1} parent=1 // pred_check
      _
    $region55: #{tpu_custom_call.1} parent=1 // pred_check_branch
      %144 = sbr.rel (0) target = $region57
    $region56: #{tpu_custom_call.1} parent=1 // pred_region
      %146 = vsyncadd [#allocation15], 0
      %s147 = sshll.u32 %s13, 4
      %s148 = int_to_ptr.hbm [resolvable:$true] %s147
      %s149 = sshll.u32 [#allocation16], 4
      %s150 = int_to_ptr.vmem [resolvable:$true] %s149
      %155 = dma.hbm_to_vmem [thread:$0]  %s148, 2048, %s150, [#allocation15], 256, 256, 16
    $region57: #{tpu_custom_call.1} parent=1 // pred_fallthru
      _
    // Predicated region
    $region58: #{tpu_custom_call.1} parent=1 // pred_check
      _
    $region59: #{tpu_custom_call.1} parent=1 // pred_check_branch
      %157 = sbr.rel (0) target = $region61
    $region60: #{tpu_custom_call.1} parent=1 // pred_region
      _
    $region61: #{tpu_custom_call.1} parent=1 // pred_fallthru
      _
    // Predicated region
    $region62: #{tpu_custom_call.1} parent=1 // pred_check
      _
    $region63: #{tpu_custom_call.1} parent=1 // pred_check_branch
      %159 = sbr.rel (0) target = $region65
    $region64: #{tpu_custom_call.1} parent=1 // pred_region
      %161 = dma.done [#allocation3], 256
    $region65: #{tpu_custom_call.1} parent=1 // pred_fallthru
      _
    // Predicated region
    $region66: #{tpu_custom_call.1} parent=1 // pred_check
      _
    $region67: #{tpu_custom_call.1} parent=1 // pred_check_branch
      %163 = sbr.rel (0) target = $region69
    $region68: #{tpu_custom_call.1} parent=1 // pred_region
      %165 = dma.done [#allocation6], 32
    $region69: #{tpu_custom_call.1} parent=1 // pred_fallthru
      _
    // Predicated region
    $region70: #{tpu_custom_call.1} parent=1 // pred_check
      _
    $region71: #{tpu_custom_call.1} parent=1 // pred_check_branch
      %167 = sbr.rel (0) target = $region73
    $region72: #{tpu_custom_call.1} parent=1 // pred_region
      %169 = dma.done [#allocation6], 32
    $region73: #{tpu_custom_call.1} parent=1 // pred_fallthru
      _
    // Predicated region
    $region74: #{tpu_custom_call.1} parent=1 // pred_check
      _
    $region75: #{tpu_custom_call.1} parent=1 // pred_check_branch
      %171 = sbr.rel (0) target = $region77
    $region76: #{tpu_custom_call.1} parent=1 // pred_region
      %173 = dma.done [#allocation9], 96
    $region77: #{tpu_custom_call.1} parent=1 // pred_fallthru
      _
    // Predicated region
    $region78: #{tpu_custom_call.1} parent=1 // pred_check
      _
    $region79: #{tpu_custom_call.1} parent=1 // pred_check_branch
      %175 = sbr.rel (0) target = $region81
    $region80: #{tpu_custom_call.1} parent=1 // pred_region
      %177 = dma.done [#allocation9], 32
    $region81: #{tpu_custom_call.1} parent=1 // pred_fallthru
      _
    // Predicated region
    $region82: #{tpu_custom_call.1} parent=1 // pred_check
      _
    $region83: #{tpu_custom_call.1} parent=1 // pred_check_branch
      %179 = sbr.rel (0) target = $region85
    $region84: #{tpu_custom_call.1} parent=1 // pred_region
      %181 = dma.done [#allocation12], 32
    $region85: #{tpu_custom_call.1} parent=1 // pred_fallthru
      _
    // Predicated region
    $region86: #{tpu_custom_call.1} parent=1 // pred_check
      _
    $region87: #{tpu_custom_call.1} parent=1 // pred_check_branch
      %183 = sbr.rel (0) target = $region89
    $region88: #{tpu_custom_call.1} parent=1 // pred_region
      %185 = dma.done [#allocation12], 32
    $region89: #{tpu_custom_call.1} parent=1 // pred_fallthru
      _
    // Predicated region
    $region90: #{tpu_custom_call.1} parent=1 // pred_check
      _
    $region91: #{tpu_custom_call.1} parent=1 // pred_check_branch
      %187 = sbr.rel (0) target = $region93
    $region92: #{tpu_custom_call.1} parent=1 // pred_region
      %189 = dma.done [#allocation15], 32
    $region93: #{tpu_custom_call.1} parent=1 // pred_fallthru
      _
    // Predicated region
    $region94: #{tpu_custom_call.1} parent=1 // pred_check
      _
    $region95: #{tpu_custom_call.1} parent=1 // pred_check_branch
      %191 = sbr.rel (0) target = $region97
    $region96: #{tpu_custom_call.1} parent=1 // pred_region
      %193 = dma.done [#allocation15], 2048
    $region97: #{tpu_custom_call.1} parent=1 // pred_fallthru
      _
    %v195 = vld [vmem:[#allocation2] sm:$0xff]
    %v196 = vld [vmem:[#allocation2 + $0x8] sm:$0xff]
    %v197 = vld [vmem:[#allocation5] sm:$0x1]
    %v198 = vld [vmem:[#allocation7] sm:$0x1]
    %vm199 = vcmask 523264
    %v200 = vsel %vm199, %v195, 0.0
    %201 = vadd.xlane.f32.xlu0 %v200
    %v202 = vpop.xlane.xlu0 %201
    %v203 = vsel %vm199, %v196, 0.0
    %204 = vadd.xlane.f32.xlu0 %v203
    %v205 = vpop.xlane.xlu0 %204
    %v206 = vrcp.pop 64.0
    %v207 = vmul.f32 64.0, %v206
    %v208 = vsub.f32 1.0, %v207
    %v209 = vmul.f32 %v206, %v208
    %v210 = vadd.f32 %v206, %v209
    %vm211 = vweird.f32 %v206
    %v212 = vsel %vm211, %v206, %v210
    %v213 = vmul.f32 %v202, %v212
    %v214 = vmul.f32 %v205, %v212
    %v215 = vsub.f32 %v195, %v213
    %v216 = vsub.f32 %v196, %v214
    %v217 = vmul.f32 %v215, %v215
    %v218 = vmul.f32 %v216, %v216
    %v219 = vsel %vm199, %v217, 0.0
    %220 = vadd.xlane.f32.xlu0 %v219
    %v221 = vpop.xlane.xlu0 %220
    %v222 = vsel %vm199, %v218, 0.0
    %223 = vadd.xlane.f32.xlu0 %v222
    %v224 = vpop.xlane.xlu0 %223
    %v225 = vmul.f32 %v221, %v212
    %v226 = vmul.f32 %v224, %v212
    %v227 = vadd.f32 %v225, 1e-05
    %v228 = vadd.f32 %v226, 1e-05
    %v229 = vrsqrt.pop %v227
    %v230 = vmul.f32 %v229, %v227
    %v231 = vmul.f32 %v230, %v229
    %v232 = vmul.f32 0.5, %v231
    %v233 = vsub.f32 1.5, %v232
    %v234 = vmul.f32 %v229, %v233
    %vm235 = vweird.f32 %v227
    %vm236 = vweird.f32 %v229
    %vm237 = vmor %vm235, %vm236
    %v238 = vsel %vm237, %v229, %v234
    %v239 = vrsqrt.pop %v228
    %v240 = vmul.f32 %v239, %v228
    %v241 = vmul.f32 %v240, %v239
    %v242 = vmul.f32 0.5, %v241
    %v243 = vsub.f32 1.5, %v242
    %v244 = vmul.f32 %v239, %v243
    %vm245 = vweird.f32 %v228
    %vm246 = vweird.f32 %v239
    %vm247 = vmor %vm245, %vm246
    %v248 = vsel %vm247, %v239, %v244
    %v249 = vmul.f32 %v215, %v238
    %v250 = vmul.f32 %v216, %v248
    %v252 = vperm.slane %v197, 0
    %v254 = vmul.f32 %v249, %v252
    %v255 = vmul.f32 %v250, %v252
    %v257 = vperm.slane %v198, 0
    %v259 = vadd.f32 %v254, %v257
    %v260 = vadd.f32 %v255, %v257
    %v261 = vld [vmem:[%s3] sm:$0xf]
    %v262 = vld [vmem:[%s3 + $0x4] sm:$0xf]
    %v263 = vld [vmem:[%s3 + $0x8] sm:$0xf]
    %v264 = vld [vmem:[%s3 + $0xc] sm:$0xf]
    %v265 = vld [vmem:[%s3 + $0x10] sm:$0xf]
    %v266 = vld [vmem:[%s3 + $0x14] sm:$0xf]
    %v267 = vld [vmem:[%s3 + $0x18] sm:$0xf]
    %v268 = vld [vmem:[%s3 + $0x1c] sm:$0xf]
    %v269 = vpack.c.bf16 %v260, %v259
    %v270 = vld [vmem:[#allocation8] sm:$0x1]
    %v272 = vperm.slane %v270, 0
    %v282 = vunpack.c.l.b16 %v261
    %v283 = vunpack.c.l.b16 %v262
    %v284 = vunpack.c.l.b16 %v263
    %v285 = vunpack.c.l.b16 %v264
    %v286 = vunpack.c.l.b16 %v265
    %v287 = vunpack.c.l.b16 %v266
    %v288 = vunpack.c.l.b16 %v267
    %v289 = vunpack.c.l.b16 %v268
    %v290 = vpack.c.b16 %v283, %v282
    %v291 = vpack.c.b16 %v285, %v284
    %v292 = vpack.c.b16 %v287, %v286
    %v293 = vpack.c.b16 %v289, %v288
    %v299 = vsel %vm199, %v269, 0
    %301 = vmatpush.bf16.msra.mxu0 0
    %302 = vmatpush.bf16.msra.mxu0 0
    %303 = vmatpush.bf16.msra.mxu0 0
    %304 = vmatpush.bf16.msra.mxu0 0
    %305 = vmatpush.bf16.msra.mxu0 %v293
    %306 = vmatpush.bf16.msra.mxu0 %v292
    %307 = vmatpush.bf16.msra.mxu0 %v291
    %308 = vmatpush.bf16.msra.mxu0 %v290
    %309 = vmatmul.bf16.gmra.mxu0 %v299
    %v310 = vpop.f32.mrf.mxu0
    %v311 = vadd.f32 %v272, %v310
    %v312 = vpop.f32.mrf.mxu0
    %v313 = vadd.f32 %v272, %v312
    %314 = vdwg.mxu0
    %s315 = scalar_lea.vmem %s3, 32
    %v316 = vld [vmem:[%s315] sm:$0xf]
    %v317 = vld [vmem:[%s315 + $0x4] sm:$0xf]
    %v318 = vld [vmem:[%s315 + $0x8] sm:$0xf]
    %v319 = vld [vmem:[%s315 + $0xc] sm:$0xf]
    %v320 = vld [vmem:[%s315 + $0x10] sm:$0xf]
    %v321 = vld [vmem:[%s315 + $0x14] sm:$0xf]
    %v322 = vld [vmem:[%s315 + $0x18] sm:$0xf]
    %v323 = vld [vmem:[%s315 + $0x1c] sm:$0xf]
    %s324 = scalar_lea.vmem [#allocation8], 1
    %v325 = vld [vmem:[%s324] sm:$0x1]
    %v327 = vperm.slane %v325, 0
    %v337 = vunpack.c.l.b16 %v316
    %v338 = vunpack.c.l.b16 %v317
    %v339 = vunpack.c.l.b16 %v318
    %v340 = vunpack.c.l.b16 %v319
    %v341 = vunpack.c.l.b16 %v320
    %v342 = vunpack.c.l.b16 %v321
    %v343 = vunpack.c.l.b16 %v322
    %v344 = vunpack.c.l.b16 %v323
    %v345 = vpack.c.b16 %v338, %v337
    %v346 = vpack.c.b16 %v340, %v339
    %v347 = vpack.c.b16 %v342, %v341
    %v348 = vpack.c.b16 %v344, %v343
    %353 = vmatpush.bf16.msra.mxu0 0
    %354 = vmatpush.bf16.msra.mxu0 0
    %355 = vmatpush.bf16.msra.mxu0 0
    %356 = vmatpush.bf16.msra.mxu0 0
    %357 = vmatpush.bf16.msra.mxu0 %v348
    %358 = vmatpush.bf16.msra.mxu0 %v347
    %359 = vmatpush.bf16.msra.mxu0 %v346
    %360 = vmatpush.bf16.msra.mxu0 %v345
    %361 = vmatmul.bf16.gmra.mxu0 %v299
    %v362 = vpop.f32.mrf.mxu0
    %v363 = vadd.f32 %v327, %v362
    %v364 = vpop.f32.mrf.mxu0
    %v365 = vadd.f32 %v327, %v364
    %366 = vdwg.mxu0
    %s367 = scalar_lea.vmem %s3, 64
    %v368 = vld [vmem:[%s367] sm:$0xf]
    %v369 = vld [vmem:[%s367 + $0x4] sm:$0xf]
    %v370 = vld [vmem:[%s367 + $0x8] sm:$0xf]
    %v371 = vld [vmem:[%s367 + $0xc] sm:$0xf]
    %v372 = vld [vmem:[%s367 + $0x10] sm:$0xf]
    %v373 = vld [vmem:[%s367 + $0x14] sm:$0xf]
    %v374 = vld [vmem:[%s367 + $0x18] sm:$0xf]
    %v375 = vld [vmem:[%s367 + $0x1c] sm:$0xf]
    %s376 = scalar_lea.vmem [#allocation8], 2
    %v377 = vld [vmem:[%s376] sm:$0x1]
    %v379 = vperm.slane %v377, 0
    %v389 = vunpack.c.l.b16 %v368
    %v390 = vunpack.c.l.b16 %v369
    %v391 = vunpack.c.l.b16 %v370
    %v392 = vunpack.c.l.b16 %v371
    %v393 = vunpack.c.l.b16 %v372
    %v394 = vunpack.c.l.b16 %v373
    %v395 = vunpack.c.l.b16 %v374
    %v396 = vunpack.c.l.b16 %v375
    %v397 = vpack.c.b16 %v390, %v389
    %v398 = vpack.c.b16 %v392, %v391
    %v399 = vpack.c.b16 %v394, %v393
    %v400 = vpack.c.b16 %v396, %v395
    %405 = vmatpush.bf16.msra.mxu0 0
    %406 = vmatpush.bf16.msra.mxu0 0
    %407 = vmatpush.bf16.msra.mxu0 0
    %408 = vmatpush.bf16.msra.mxu0 0
    %409 = vmatpush.bf16.msra.mxu0 %v400
    %410 = vmatpush.bf16.msra.mxu0 %v399
    %411 = vmatpush.bf16.msra.mxu0 %v398
    %412 = vmatpush.bf16.msra.mxu0 %v397
    %413 = vmatmul.bf16.gmra.mxu0 %v299
    %v414 = vpop.f32.mrf.mxu0
    %v415 = vadd.f32 %v379, %v414
    %v416 = vpop.f32.mrf.mxu0
    %v417 = vadd.f32 %v379, %v416
    %418 = vdwg.mxu0
    %421 = vrot.lane.b32.xlu0 %v311, 120
    %v422 = vpop.permute.xlu0 %421
    %423 = vrot.lane.b32.xlu0 %v313, 120
    %v424 = vpop.permute.xlu0 %423
    %427 = vrot.lane.b32.xlu0 %v311, 112
    %v428 = vpop.permute.xlu0 %427
    %429 = vrot.lane.b32.xlu0 %v313, 112
    %v430 = vpop.permute.xlu0 %429
    %433 = vrot.lane.b32.xlu0 %v311, 104
    %v434 = vpop.permute.xlu0 %433
    %435 = vrot.lane.b32.xlu0 %v313, 104
    %v436 = vpop.permute.xlu0 %435
    %439 = vrot.lane.b32.xlu0 %v311, 96
    %v440 = vpop.permute.xlu0 %439
    %441 = vrot.lane.b32.xlu0 %v313, 96
    %v442 = vpop.permute.xlu0 %441
    %445 = vrot.lane.b32.xlu0 %v311, 88
    %v446 = vpop.permute.xlu0 %445
    %447 = vrot.lane.b32.xlu0 %v313, 88
    %v448 = vpop.permute.xlu0 %447
    %451 = vrot.lane.b32.xlu0 %v311, 80
    %v452 = vpop.permute.xlu0 %451
    %453 = vrot.lane.b32.xlu0 %v313, 80
    %v454 = vpop.permute.xlu0 %453
    %457 = vrot.lane.b32.xlu0 %v311, 72
    %v458 = vpop.permute.xlu0 %457
    %459 = vrot.lane.b32.xlu0 %v313, 72
    %v460 = vpop.permute.xlu0 %459
    %465 = vrot.lane.b32.xlu0 %v363, 120
    %v466 = vpop.permute.xlu0 %465
    %467 = vrot.lane.b32.xlu0 %v365, 120
    %v468 = vpop.permute.xlu0 %467
    %471 = vrot.lane.b32.xlu0 %v363, 112
    %v472 = vpop.permute.xlu0 %471
    %473 = vrot.lane.b32.xlu0 %v365, 112
    %v474 = vpop.permute.xlu0 %473
    %477 = vrot.lane.b32.xlu0 %v363, 104
    %v478 = vpop.permute.xlu0 %477
    %479 = vrot.lane.b32.xlu0 %v365, 104
    %v480 = vpop.permute.xlu0 %479
    %483 = vrot.lane.b32.xlu0 %v363, 96
    %v484 = vpop.permute.xlu0 %483
    %485 = vrot.lane.b32.xlu0 %v365, 96
    %v486 = vpop.permute.xlu0 %485
    %489 = vrot.lane.b32.xlu0 %v363, 88
    %v490 = vpop.permute.xlu0 %489
    %491 = vrot.lane.b32.xlu0 %v365, 88
    %v492 = vpop.permute.xlu0 %491
    %495 = vrot.lane.b32.xlu0 %v363, 80
    %v496 = vpop.permute.xlu0 %495
    %497 = vrot.lane.b32.xlu0 %v365, 80
    %v498 = vpop.permute.xlu0 %497
    %501 = vrot.lane.b32.xlu0 %v363, 72
    %v502 = vpop.permute.xlu0 %501
    %503 = vrot.lane.b32.xlu0 %v365, 72
    %v504 = vpop.permute.xlu0 %503
    %509 = vrot.lane.b32.xlu0 %v415, 120
    %v510 = vpop.permute.xlu0 %509
    %511 = vrot.lane.b32.xlu0 %v417, 120
    %v512 = vpop.permute.xlu0 %511
    %515 = vrot.lane.b32.xlu0 %v415, 112
    %v516 = vpop.permute.xlu0 %515
    %517 = vrot.lane.b32.xlu0 %v417, 112
    %v518 = vpop.permute.xlu0 %517
    %521 = vrot.lane.b32.xlu0 %v415, 104
    %v522 = vpop.permute.xlu0 %521
    %523 = vrot.lane.b32.xlu0 %v417, 104
    %v524 = vpop.permute.xlu0 %523
    %527 = vrot.lane.b32.xlu0 %v415, 96
    %v528 = vpop.permute.xlu0 %527
    %529 = vrot.lane.b32.xlu0 %v417, 96
    %v530 = vpop.permute.xlu0 %529
    %533 = vrot.lane.b32.xlu0 %v415, 88
    %v534 = vpop.permute.xlu0 %533
    %535 = vrot.lane.b32.xlu0 %v417, 88
    %v536 = vpop.permute.xlu0 %535
    %539 = vrot.lane.b32.xlu0 %v415, 80
    %v540 = vpop.permute.xlu0 %539
    %541 = vrot.lane.b32.xlu0 %v417, 80
    %v542 = vpop.permute.xlu0 %541
    %545 = vrot.lane.b32.xlu0 %v415, 72
    %v546 = vpop.permute.xlu0 %545
    %547 = vrot.lane.b32.xlu0 %v417, 72
    %v548 = vpop.permute.xlu0 %547
    %v551 = vpack.c.bf16 %v311, %v311
    %v552 = vpack.c.bf16 %v313, %v313
    %v553 = vpack.c.bf16 %v422, %v422
    %v554 = vpack.c.bf16 %v424, %v424
    %v555 = vpack.c.bf16 %v428, %v428
    %v556 = vpack.c.bf16 %v430, %v430
    %v557 = vpack.c.bf16 %v434, %v434
    %v558 = vpack.c.bf16 %v436, %v436
    %v559 = vpack.c.bf16 %v440, %v440
    %v560 = vpack.c.bf16 %v442, %v442
    %v561 = vpack.c.bf16 %v446, %v446
    %v562 = vpack.c.bf16 %v448, %v448
    %v563 = vpack.c.bf16 %v452, %v452
    %v564 = vpack.c.bf16 %v454, %v454
    %v565 = vpack.c.bf16 %v458, %v458
    %v566 = vpack.c.bf16 %v460, %v460
    %v567 = vpack.c.bf16 %v363, %v363
    %v568 = vpack.c.bf16 %v365, %v365
    %v569 = vpack.c.bf16 %v466, %v466
    %v570 = vpack.c.bf16 %v468, %v468
    %v571 = vpack.c.bf16 %v472, %v472
    %v572 = vpack.c.bf16 %v474, %v474
    %v573 = vpack.c.bf16 %v478, %v478
    %v574 = vpack.c.bf16 %v480, %v480
    %v575 = vpack.c.bf16 %v484, %v484
    %v576 = vpack.c.bf16 %v486, %v486
    %v577 = vpack.c.bf16 %v490, %v490
    %v578 = vpack.c.bf16 %v492, %v492
    %v579 = vpack.c.bf16 %v496, %v496
    %v580 = vpack.c.bf16 %v498, %v498
    %v581 = vpack.c.bf16 %v502, %v502
    %v582 = vpack.c.bf16 %v504, %v504
    %vm583 = vcmask 64512
    %v585 = vsel %vm583, %v551, 0
    %v588 = vsel %vm583, %v567, 0
    %590 = vmatpush.bf16.xpose.msra.mxu0 0
    %591 = vmatpush.bf16.xpose.msra.mxu0 0
    %592 = vmatpush.bf16.xpose.msra.mxu0 0
    %593 = vmatpush.bf16.xpose.msra.mxu0 0
    %594 = vmatpush.bf16.xpose.msra.mxu0 0
    %595 = vmatpush.bf16.xpose.msra.mxu0 0
    %596 = vmatpush.bf16.xpose.msra.mxu0 0
    %597 = vmatpush.bf16.xpose.msra.mxu0 %v588
    %598 = vmatmul.bf16.gmra.mxu0 %v585
    %v599 = vpop.f32.mrf.mxu0
    %v600 = vadd.f32 0.0, %v599
    %v601 = vpop.f32.mrf.mxu0
    %602 = vdwg.mxu0
    %v604 = vsel %vm583, %v552, 0
    %v607 = vsel %vm583, %v568, 0
    %609 = vmatpush.bf16.xpose.msra.mxu0 0
    %610 = vmatpush.bf16.xpose.msra.mxu0 0
    %611 = vmatpush.bf16.xpose.msra.mxu0 0
    %612 = vmatpush.bf16.xpose.msra.mxu0 0
    %613 = vmatpush.bf16.xpose.msra.mxu0 0
    %614 = vmatpush.bf16.xpose.msra.mxu0 0
    %615 = vmatpush.bf16.xpose.msra.mxu0 0
    %616 = vmatpush.bf16.xpose.msra.mxu0 %v607
    %617 = vmatmul.bf16.gmra.mxu0 %v604
    %v618 = vpop.f32.mrf.mxu0
    %v619 = vadd.f32 0.0, %v618
    %v620 = vpop.f32.mrf.mxu0
    %621 = vdwg.mxu0
    %v623 = vsel %vm583, %v553, 0
    %v626 = vsel %vm583, %v569, 0
    %628 = vmatpush.bf16.xpose.msra.mxu0 0
    %629 = vmatpush.bf16.xpose.msra.mxu0 0
    %630 = vmatpush.bf16.xpose.msra.mxu0 0
    %631 = vmatpush.bf16.xpose.msra.mxu0 0
    %632 = vmatpush.bf16.xpose.msra.mxu0 0
    %633 = vmatpush.bf16.xpose.msra.mxu0 0
    %634 = vmatpush.bf16.xpose.msra.mxu0 0
    %635 = vmatpush.bf16.xpose.msra.mxu0 %v626
    %636 = vmatmul.bf16.gmra.mxu0 %v623
    %v637 = vpop.f32.mrf.mxu0
    %v638 = vadd.f32 0.0, %v637
    %v639 = vpop.f32.mrf.mxu0
    %640 = vdwg.mxu0
    %v642 = vsel %vm583, %v554, 0
    %v645 = vsel %vm583, %v570, 0
    %647 = vmatpush.bf16.xpose.msra.mxu0 0
    %648 = vmatpush.bf16.xpose.msra.mxu0 0
    %649 = vmatpush.bf16.xpose.msra.mxu0 0
    %650 = vmatpush.bf16.xpose.msra.mxu0 0
    %651 = vmatpush.bf16.xpose.msra.mxu0 0
    %652 = vmatpush.bf16.xpose.msra.mxu0 0
    %653 = vmatpush.bf16.xpose.msra.mxu0 0
    %654 = vmatpush.bf16.xpose.msra.mxu0 %v645
    %655 = vmatmul.bf16.gmra.mxu0 %v642
    %v656 = vpop.f32.mrf.mxu0
    %v657 = vadd.f32 0.0, %v656
    %v658 = vpop.f32.mrf.mxu0
    %659 = vdwg.mxu0
    %v661 = vsel %vm583, %v555, 0
    %v664 = vsel %vm583, %v571, 0
    %666 = vmatpush.bf16.xpose.msra.mxu0 0
    %667 = vmatpush.bf16.xpose.msra.mxu0 0
    %668 = vmatpush.bf16.xpose.msra.mxu0 0
    %669 = vmatpush.bf16.xpose.msra.mxu0 0
    %670 = vmatpush.bf16.xpose.msra.mxu0 0
    %671 = vmatpush.bf16.xpose.msra.mxu0 0
    %672 = vmatpush.bf16.xpose.msra.mxu0 0
    %673 = vmatpush.bf16.xpose.msra.mxu0 %v664
    %674 = vmatmul.bf16.gmra.mxu0 %v661
    %v675 = vpop.f32.mrf.mxu0
    %v676 = vadd.f32 0.0, %v675
    %v677 = vpop.f32.mrf.mxu0
    %678 = vdwg.mxu0
    %v680 = vsel %vm583, %v556, 0
    %v683 = vsel %vm583, %v572, 0
    %685 = vmatpush.bf16.xpose.msra.mxu0 0
    %686 = vmatpush.bf16.xpose.msra.mxu0 0
    %687 = vmatpush.bf16.xpose.msra.mxu0 0
    %688 = vmatpush.bf16.xpose.msra.mxu0 0
    %689 = vmatpush.bf16.xpose.msra.mxu0 0
    %690 = vmatpush.bf16.xpose.msra.mxu0 0
    %691 = vmatpush.bf16.xpose.msra.mxu0 0
    %692 = vmatpush.bf16.xpose.msra.mxu0 %v683
    %693 = vmatmul.bf16.gmra.mxu0 %v680
    %v694 = vpop.f32.mrf.mxu0
    %v695 = vadd.f32 0.0, %v694
    %v696 = vpop.f32.mrf.mxu0
    %697 = vdwg.mxu0
    %v699 = vsel %vm583, %v557, 0
    %v702 = vsel %vm583, %v573, 0
    %704 = vmatpush.bf16.xpose.msra.mxu0 0
    %705 = vmatpush.bf16.xpose.msra.mxu0 0
    %706 = vmatpush.bf16.xpose.msra.mxu0 0
    %707 = vmatpush.bf16.xpose.msra.mxu0 0
    %708 = vmatpush.bf16.xpose.msra.mxu0 0
    %709 = vmatpush.bf16.xpose.msra.mxu0 0
    %710 = vmatpush.bf16.xpose.msra.mxu0 0
    %711 = vmatpush.bf16.xpose.msra.mxu0 %v702
    %712 = vmatmul.bf16.gmra.mxu0 %v699
    %v713 = vpop.f32.mrf.mxu0
    %v714 = vadd.f32 0.0, %v713
    %v715 = vpop.f32.mrf.mxu0
    %716 = vdwg.mxu0
    %v718 = vsel %vm583, %v558, 0
    %v721 = vsel %vm583, %v574, 0
    %723 = vmatpush.bf16.xpose.msra.mxu0 0
    %724 = vmatpush.bf16.xpose.msra.mxu0 0
    %725 = vmatpush.bf16.xpose.msra.mxu0 0
    %726 = vmatpush.bf16.xpose.msra.mxu0 0
    %727 = vmatpush.bf16.xpose.msra.mxu0 0
    %728 = vmatpush.bf16.xpose.msra.mxu0 0
    %729 = vmatpush.bf16.xpose.msra.mxu0 0
    %730 = vmatpush.bf16.xpose.msra.mxu0 %v721
    %731 = vmatmul.bf16.gmra.mxu0 %v718
    %v732 = vpop.f32.mrf.mxu0
    %v733 = vadd.f32 0.0, %v732
    %v734 = vpop.f32.mrf.mxu0
    %735 = vdwg.mxu0
    %v737 = vsel %vm583, %v559, 0
    %v740 = vsel %vm583, %v575, 0
    %742 = vmatpush.bf16.xpose.msra.mxu0 0
    %743 = vmatpush.bf16.xpose.msra.mxu0 0
    %744 = vmatpush.bf16.xpose.msra.mxu0 0
    %745 = vmatpush.bf16.xpose.msra.mxu0 0
    %746 = vmatpush.bf16.xpose.msra.mxu0 0
    %747 = vmatpush.bf16.xpose.msra.mxu0 0
    %748 = vmatpush.bf16.xpose.msra.mxu0 0
    %749 = vmatpush.bf16.xpose.msra.mxu0 %v740
    %750 = vmatmul.bf16.gmra.mxu0 %v737
    %v751 = vpop.f32.mrf.mxu0
    %v752 = vadd.f32 0.0, %v751
    %v753 = vpop.f32.mrf.mxu0
    %754 = vdwg.mxu0
    %v756 = vsel %vm583, %v560, 0
    %v759 = vsel %vm583, %v576, 0
    %761 = vmatpush.bf16.xpose.msra.mxu0 0
    %762 = vmatpush.bf16.xpose.msra.mxu0 0
    %763 = vmatpush.bf16.xpose.msra.mxu0 0
    %764 = vmatpush.bf16.xpose.msra.mxu0 0
    %765 = vmatpush.bf16.xpose.msra.mxu0 0
    %766 = vmatpush.bf16.xpose.msra.mxu0 0
    %767 = vmatpush.bf16.xpose.msra.mxu0 0
    %768 = vmatpush.bf16.xpose.msra.mxu0 %v759
    %769 = vmatmul.bf16.gmra.mxu0 %v756
    %v770 = vpop.f32.mrf.mxu0
    %v771 = vadd.f32 0.0, %v770
    %v772 = vpop.f32.mrf.mxu0
    %773 = vdwg.mxu0
    %v775 = vsel %vm583, %v561, 0
    %v778 = vsel %vm583, %v577, 0
    %780 = vmatpush.bf16.xpose.msra.mxu0 0
    %781 = vmatpush.bf16.xpose.msra.mxu0 0
    %782 = vmatpush.bf16.xpose.msra.mxu0 0
    %783 = vmatpush.bf16.xpose.msra.mxu0 0
    %784 = vmatpush.bf16.xpose.msra.mxu0 0
    %785 = vmatpush.bf16.xpose.msra.mxu0 0
    %786 = vmatpush.bf16.xpose.msra.mxu0 0
    %787 = vmatpush.bf16.xpose.msra.mxu0 %v778
    %788 = vmatmul.bf16.gmra.mxu0 %v775
    %v789 = vpop.f32.mrf.mxu0
    %v790 = vadd.f32 0.0, %v789
    %v791 = vpop.f32.mrf.mxu0
    %792 = vdwg.mxu0
    %v794 = vsel %vm583, %v562, 0
    %v797 = vsel %vm583, %v578, 0
    %799 = vmatpush.bf16.xpose.msra.mxu0 0
    %800 = vmatpush.bf16.xpose.msra.mxu0 0
    %801 = vmatpush.bf16.xpose.msra.mxu0 0
    %802 = vmatpush.bf16.xpose.msra.mxu0 0
    %803 = vmatpush.bf16.xpose.msra.mxu0 0
    %804 = vmatpush.bf16.xpose.msra.mxu0 0
    %805 = vmatpush.bf16.xpose.msra.mxu0 0
    %806 = vmatpush.bf16.xpose.msra.mxu0 %v797
    %807 = vmatmul.bf16.gmra.mxu0 %v794
    %v808 = vpop.f32.mrf.mxu0
    %v809 = vadd.f32 0.0, %v808
    %v810 = vpop.f32.mrf.mxu0
    %811 = vdwg.mxu0
    %v813 = vsel %vm583, %v563, 0
    %v816 = vsel %vm583, %v579, 0
    %818 = vmatpush.bf16.xpose.msra.mxu0 0
    %819 = vmatpush.bf16.xpose.msra.mxu0 0
    %820 = vmatpush.bf16.xpose.msra.mxu0 0
    %821 = vmatpush.bf16.xpose.msra.mxu0 0
    %822 = vmatpush.bf16.xpose.msra.mxu0 0
    %823 = vmatpush.bf16.xpose.msra.mxu0 0
    %824 = vmatpush.bf16.xpose.msra.mxu0 0
    %825 = vmatpush.bf16.xpose.msra.mxu0 %v816
    %826 = vmatmul.bf16.gmra.mxu0 %v813
    %v827 = vpop.f32.mrf.mxu0
    %v828 = vadd.f32 0.0, %v827
    %v829 = vpop.f32.mrf.mxu0
    %830 = vdwg.mxu0
    %v832 = vsel %vm583, %v564, 0
    %v835 = vsel %vm583, %v580, 0
    %837 = vmatpush.bf16.xpose.msra.mxu0 0
    %838 = vmatpush.bf16.xpose.msra.mxu0 0
    %839 = vmatpush.bf16.xpose.msra.mxu0 0
    %840 = vmatpush.bf16.xpose.msra.mxu0 0
    %841 = vmatpush.bf16.xpose.msra.mxu0 0
    %842 = vmatpush.bf16.xpose.msra.mxu0 0
    %843 = vmatpush.bf16.xpose.msra.mxu0 0
    %844 = vmatpush.bf16.xpose.msra.mxu0 %v835
    %845 = vmatmul.bf16.gmra.mxu0 %v832
    %v846 = vpop.f32.mrf.mxu0
    %v847 = vadd.f32 0.0, %v846
    %v848 = vpop.f32.mrf.mxu0
    %849 = vdwg.mxu0
    %v851 = vsel %vm583, %v565, 0
    %v854 = vsel %vm583, %v581, 0
    %856 = vmatpush.bf16.xpose.msra.mxu0 0
    %857 = vmatpush.bf16.xpose.msra.mxu0 0
    %858 = vmatpush.bf16.xpose.msra.mxu0 0
    %859 = vmatpush.bf16.xpose.msra.mxu0 0
    %860 = vmatpush.bf16.xpose.msra.mxu0 0
    %861 = vmatpush.bf16.xpose.msra.mxu0 0
    %862 = vmatpush.bf16.xpose.msra.mxu0 0
    %863 = vmatpush.bf16.xpose.msra.mxu0 %v854
    %864 = vmatmul.bf16.gmra.mxu0 %v851
    %v865 = vpop.f32.mrf.mxu0
    %v866 = vadd.f32 0.0, %v865
    %v867 = vpop.f32.mrf.mxu0
    %868 = vdwg.mxu0
    %v870 = vsel %vm583, %v566, 0
    %v873 = vsel %vm583, %v582, 0
    %875 = vmatpush.bf16.xpose.msra.mxu0 0
    %876 = vmatpush.bf16.xpose.msra.mxu0 0
    %877 = vmatpush.bf16.xpose.msra.mxu0 0
    %878 = vmatpush.bf16.xpose.msra.mxu0 0
    %879 = vmatpush.bf16.xpose.msra.mxu0 0
    %880 = vmatpush.bf16.xpose.msra.mxu0 0
    %881 = vmatpush.bf16.xpose.msra.mxu0 0
    %882 = vmatpush.bf16.xpose.msra.mxu0 %v873
    %883 = vmatmul.bf16.gmra.mxu0 %v870
    %v884 = vpop.f32.mrf.mxu0
    %v885 = vadd.f32 0.0, %v884
    %v886 = vpop.f32.mrf.mxu0
    %887 = vdwg.mxu0
    %v888 = vsel %vm583, %v600, -inf
    %889 = vmax.xlane.f32.xlu0 %v888
    %v890 = vpop.xlane.xlu0 %889
    %v891 = vsel %vm583, %v619, -inf
    %892 = vmax.xlane.f32.xlu0 %v891
    %v893 = vpop.xlane.xlu0 %892
    %v894 = vsel %vm583, %v638, -inf
    %895 = vmax.xlane.f32.xlu0 %v894
    %v896 = vpop.xlane.xlu0 %895
    %v897 = vsel %vm583, %v657, -inf
    %898 = vmax.xlane.f32.xlu0 %v897
    %v899 = vpop.xlane.xlu0 %898
    %v900 = vsel %vm583, %v676, -inf
    %901 = vmax.xlane.f32.xlu0 %v900
    %v902 = vpop.xlane.xlu0 %901
    %v903 = vsel %vm583, %v695, -inf
    %904 = vmax.xlane.f32.xlu0 %v903
    %v905 = vpop.xlane.xlu0 %904
    %v906 = vsel %vm583, %v714, -inf
    %907 = vmax.xlane.f32.xlu0 %v906
    %v908 = vpop.xlane.xlu0 %907
    %v909 = vsel %vm583, %v733, -inf
    %910 = vmax.xlane.f32.xlu0 %v909
    %v911 = vpop.xlane.xlu0 %910
    %v912 = vsel %vm583, %v752, -inf
    %913 = vmax.xlane.f32.xlu0 %v912
    %v914 = vpop.xlane.xlu0 %913
    %v915 = vsel %vm583, %v771, -inf
    %916 = vmax.xlane.f32.xlu0 %v915
    %v917 = vpop.xlane.xlu0 %916
    %v918 = vsel %vm583, %v790, -inf
    %919 = vmax.xlane.f32.xlu0 %v918
    %v920 = vpop.xlane.xlu0 %919
    %v921 = vsel %vm583, %v809, -inf
    %922 = vmax.xlane.f32.xlu0 %v921
    %v923 = vpop.xlane.xlu0 %922
    %v924 = vsel %vm583, %v828, -inf
    %925 = vmax.xlane.f32.xlu0 %v924
    %v926 = vpop.xlane.xlu0 %925
    %v927 = vsel %vm583, %v847, -inf
    %928 = vmax.xlane.f32.xlu0 %v927
    %v929 = vpop.xlane.xlu0 %928
    %v930 = vsel %vm583, %v866, -inf
    %931 = vmax.xlane.f32.xlu0 %v930
    %v932 = vpop.xlane.xlu0 %931
    %v933 = vsel %vm583, %v885, -inf
    %934 = vmax.xlane.f32.xlu0 %v933
    %v935 = vpop.xlane.xlu0 %934
    %v936 = vsub.f32 %v600, %v890
    %v937 = vsub.f32 %v619, %v893
    %v938 = vsub.f32 %v638, %v896
    %v939 = vsub.f32 %v657, %v899
    %v940 = vsub.f32 %v676, %v902
    %v941 = vsub.f32 %v695, %v905
    %v942 = vsub.f32 %v714, %v908
    %v943 = vsub.f32 %v733, %v911
    %v944 = vsub.f32 %v752, %v914
    %v945 = vsub.f32 %v771, %v917
    %v946 = vsub.f32 %v790, %v920
    %v947 = vsub.f32 %v809, %v923
    %v948 = vsub.f32 %v828, %v926
    %v949 = vsub.f32 %v847, %v929
    %v950 = vsub.f32 %v866, %v932
    %v951 = vsub.f32 %v885, %v935
    %v952 = vmul.f32 %v936, 1.442695
    %v953 = vpow.pop %v952
    %v954 = vmul.f32 %v937, 1.442695
    %v955 = vpow.pop %v954
    %v956 = vmul.f32 %v938, 1.442695
    %v957 = vpow.pop %v956
    %v958 = vmul.f32 %v939, 1.442695
    %v959 = vpow.pop %v958
    %v960 = vmul.f32 %v940, 1.442695
    %v961 = vpow.pop %v960
    %v962 = vmul.f32 %v941, 1.442695
    %v963 = vpow.pop %v962
    %v964 = vmul.f32 %v942, 1.442695
    %v965 = vpow.pop %v964
    %v966 = vmul.f32 %v943, 1.442695
    %v967 = vpow.pop %v966
    %v968 = vmul.f32 %v944, 1.442695
    %v969 = vpow.pop %v968
    %v970 = vmul.f32 %v945, 1.442695
    %v971 = vpow.pop %v970
    %v972 = vmul.f32 %v946, 1.442695
    %v973 = vpow.pop %v972
    %v974 = vmul.f32 %v947, 1.442695
    %v975 = vpow.pop %v974
    %v976 = vmul.f32 %v948, 1.442695
    %v977 = vpow.pop %v976
    %v978 = vmul.f32 %v949, 1.442695
    %v979 = vpow.pop %v978
    %v980 = vmul.f32 %v950, 1.442695
    %v981 = vpow.pop %v980
    %v982 = vmul.f32 %v951, 1.442695
    %v983 = vpow.pop %v982
    %v984 = vsel %vm583, %v953, 0.0
    %985 = vadd.xlane.f32.xlu0 %v984
    %v986 = vpop.xlane.xlu0 %985
    %v987 = vsel %vm583, %v955, 0.0
    %988 = vadd.xlane.f32.xlu0 %v987
    %v989 = vpop.xlane.xlu0 %988
    %v990 = vsel %vm583, %v957, 0.0
    %991 = vadd.xlane.f32.xlu0 %v990
    %v992 = vpop.xlane.xlu0 %991
    %v993 = vsel %vm583, %v959, 0.0
    %994 = vadd.xlane.f32.xlu0 %v993
    %v995 = vpop.xlane.xlu0 %994
    %v996 = vsel %vm583, %v961, 0.0
    %997 = vadd.xlane.f32.xlu0 %v996
    %v998 = vpop.xlane.xlu0 %997
    %v999 = vsel %vm583, %v963, 0.0
    %1000 = vadd.xlane.f32.xlu0 %v999
    %v1001 = vpop.xlane.xlu0 %1000
    %v1002 = vsel %vm583, %v965, 0.0
    %1003 = vadd.xlane.f32.xlu0 %v1002
    %v1004 = vpop.xlane.xlu0 %1003
    %v1005 = vsel %vm583, %v967, 0.0
    %1006 = vadd.xlane.f32.xlu0 %v1005
    %v1007 = vpop.xlane.xlu0 %1006
    %v1008 = vsel %vm583, %v969, 0.0
    %1009 = vadd.xlane.f32.xlu0 %v1008
    %v1010 = vpop.xlane.xlu0 %1009
    %v1011 = vsel %vm583, %v971, 0.0
    %1012 = vadd.xlane.f32.xlu0 %v1011
    %v1013 = vpop.xlane.xlu0 %1012
    %v1014 = vsel %vm583, %v973, 0.0
    %1015 = vadd.xlane.f32.xlu0 %v1014
    %v1016 = vpop.xlane.xlu0 %1015
    %v1017 = vsel %vm583, %v975, 0.0
    %1018 = vadd.xlane.f32.xlu0 %v1017
    %v1019 = vpop.xlane.xlu0 %1018
    %v1020 = vsel %vm583, %v977, 0.0
    %1021 = vadd.xlane.f32.xlu0 %v1020
    %v1022 = vpop.xlane.xlu0 %1021
    %v1023 = vsel %vm583, %v979, 0.0
    %1024 = vadd.xlane.f32.xlu0 %v1023
    %v1025 = vpop.xlane.xlu0 %1024
    %v1026 = vsel %vm583, %v981, 0.0
    %1027 = vadd.xlane.f32.xlu0 %v1026
    %v1028 = vpop.xlane.xlu0 %1027
    %v1029 = vsel %vm583, %v983, 0.0
    %1030 = vadd.xlane.f32.xlu0 %v1029
    %v1031 = vpop.xlane.xlu0 %1030
    %v1032 = vrcp.pop %v986
    %v1033 = vrcp.pop %v989
    %v1034 = vrcp.pop %v992
    %v1035 = vrcp.pop %v995
    %v1036 = vrcp.pop %v998
    %v1037 = vrcp.pop %v1001
    %v1038 = vrcp.pop %v1004
    %v1039 = vrcp.pop %v1007
    %v1040 = vrcp.pop %v1010
    %v1041 = vrcp.pop %v1013
    %v1042 = vrcp.pop %v1016
    %v1043 = vrcp.pop %v1019
    %v1044 = vrcp.pop %v1022
    %v1045 = vrcp.pop %v1025
    %v1046 = vrcp.pop %v1028
    %v1047 = vrcp.pop %v1031
    %v1048 = vmul.f32 %v986, %v1032
    %v1049 = vmul.f32 %v989, %v1033
    %v1050 = vmul.f32 %v992, %v1034
    %v1051 = vmul.f32 %v995, %v1035
    %v1052 = vmul.f32 %v998, %v1036
    %v1053 = vmul.f32 %v1001, %v1037
    %v1054 = vmul.f32 %v1004, %v1038
    %v1055 = vmul.f32 %v1007, %v1039
    %v1056 = vmul.f32 %v1010, %v1040
    %v1057 = vmul.f32 %v1013, %v1041
    %v1058 = vmul.f32 %v1016, %v1042
    %v1059 = vmul.f32 %v1019, %v1043
    %v1060 = vmul.f32 %v1022, %v1044
    %v1061 = vmul.f32 %v1025, %v1045
    %v1062 = vmul.f32 %v1028, %v1046
    %v1063 = vmul.f32 %v1031, %v1047
    %v1064 = vsub.f32 2.0, %v1048
    %v1065 = vsub.f32 2.0, %v1049
    %v1066 = vsub.f32 2.0, %v1050
    %v1067 = vsub.f32 2.0, %v1051
    %v1068 = vsub.f32 2.0, %v1052
    %v1069 = vsub.f32 2.0, %v1053
    %v1070 = vsub.f32 2.0, %v1054
    %v1071 = vsub.f32 2.0, %v1055
    %v1072 = vsub.f32 2.0, %v1056
    %v1073 = vsub.f32 2.0, %v1057
    %v1074 = vsub.f32 2.0, %v1058
    %v1075 = vsub.f32 2.0, %v1059
    %v1076 = vsub.f32 2.0, %v1060
    %v1077 = vsub.f32 2.0, %v1061
    %v1078 = vsub.f32 2.0, %v1062
    %v1079 = vsub.f32 2.0, %v1063
    %v1080 = vmul.f32 %v1032, %v1064
    %v1081 = vmul.f32 %v1033, %v1065
    %v1082 = vmul.f32 %v1034, %v1066
    %v1083 = vmul.f32 %v1035, %v1067
    %v1084 = vmul.f32 %v1036, %v1068
    %v1085 = vmul.f32 %v1037, %v1069
    %v1086 = vmul.f32 %v1038, %v1070
    %v1087 = vmul.f32 %v1039, %v1071
    %v1088 = vmul.f32 %v1040, %v1072
    %v1089 = vmul.f32 %v1041, %v1073
    %v1090 = vmul.f32 %v1042, %v1074
    %v1091 = vmul.f32 %v1043, %v1075
    %v1092 = vmul.f32 %v1044, %v1076
    %v1093 = vmul.f32 %v1045, %v1077
    %v1094 = vmul.f32 %v1046, %v1078
    %v1095 = vmul.f32 %v1047, %v1079
    %v1096 = vmul.f32 %v953, %v1080
    %v1097 = vmul.f32 %v955, %v1081
    %v1098 = vmul.f32 %v957, %v1082
    %v1099 = vmul.f32 %v959, %v1083
    %v1100 = vmul.f32 %v961, %v1084
    %v1101 = vmul.f32 %v963, %v1085
    %v1102 = vmul.f32 %v965, %v1086
    %v1103 = vmul.f32 %v967, %v1087
    %v1104 = vmul.f32 %v969, %v1088
    %v1105 = vmul.f32 %v971, %v1089
    %v1106 = vmul.f32 %v973, %v1090
    %v1107 = vmul.f32 %v975, %v1091
    %v1108 = vmul.f32 %v977, %v1092
    %v1109 = vmul.f32 %v979, %v1093
    %v1110 = vmul.f32 %v981, %v1094
    %v1111 = vmul.f32 %v983, %v1095
    %v1112 = vpack.c.bf16 %v1096, %v1096
    %v1113 = vpack.c.bf16 %v1097, %v1097
    %v1114 = vpack.c.bf16 %v1098, %v1098
    %v1115 = vpack.c.bf16 %v1099, %v1099
    %v1116 = vpack.c.bf16 %v1100, %v1100
    %v1117 = vpack.c.bf16 %v1101, %v1101
    %v1118 = vpack.c.bf16 %v1102, %v1102
    %v1119 = vpack.c.bf16 %v1103, %v1103
    %v1120 = vpack.c.bf16 %v1104, %v1104
    %v1121 = vpack.c.bf16 %v1105, %v1105
    %v1122 = vpack.c.bf16 %v1106, %v1106
    %v1123 = vpack.c.bf16 %v1107, %v1107
    %v1124 = vpack.c.bf16 %v1108, %v1108
    %v1125 = vpack.c.bf16 %v1109, %v1109
    %v1126 = vpack.c.bf16 %v1110, %v1110
    %v1127 = vpack.c.bf16 %v1111, %v1111
    %v1128 = vpack.c.bf16 %v415, %v415
    %v1129 = vpack.c.bf16 %v417, %v417
    %v1130 = vpack.c.bf16 %v510, %v510
    %v1131 = vpack.c.bf16 %v512, %v512
    %v1132 = vpack.c.bf16 %v516, %v516
    %v1133 = vpack.c.bf16 %v518, %v518
    %v1134 = vpack.c.bf16 %v522, %v522
    %v1135 = vpack.c.bf16 %v524, %v524
    %v1136 = vpack.c.bf16 %v528, %v528
    %v1137 = vpack.c.bf16 %v530, %v530
    %v1138 = vpack.c.bf16 %v534, %v534
    %v1139 = vpack.c.bf16 %v536, %v536
    %v1140 = vpack.c.bf16 %v540, %v540
    %v1141 = vpack.c.bf16 %v542, %v542
    %v1142 = vpack.c.bf16 %v546, %v546
    %v1143 = vpack.c.bf16 %v548, %v548
    %v1145 = vsel %vm583, %v1112, 0
    %vm1147 = vcmask 1043456
    %v1149 = vsel %vm1147, %v1128, 0
    %1151 = vmatpush.bf16.msra.mxu0 0
    %1152 = vmatpush.bf16.msra.mxu0 0
    %1153 = vmatpush.bf16.msra.mxu0 0
    %1154 = vmatpush.bf16.msra.mxu0 0
    %1155 = vmatpush.bf16.msra.mxu0 0
    %1156 = vmatpush.bf16.msra.mxu0 0
    %1157 = vmatpush.bf16.msra.mxu0 0
    %1158 = vmatpush.bf16.msra.mxu0 %v1149
    %1159 = vmatmul.bf16.gmra.mxu0 %v1145
    %v1160 = vpop.f32.mrf.mxu0
    %v1161 = vadd.f32 0.0, %v1160
    %v1162 = vpop.f32.mrf.mxu0
    %1163 = vdwg.mxu0
    %v1165 = vsel %vm583, %v1113, 0
    %v1168 = vsel %vm1147, %v1129, 0
    %1170 = vmatpush.bf16.msra.mxu0 0
    %1171 = vmatpush.bf16.msra.mxu0 0
    %1172 = vmatpush.bf16.msra.mxu0 0
    %1173 = vmatpush.bf16.msra.mxu0 0
    %1174 = vmatpush.bf16.msra.mxu0 0
    %1175 = vmatpush.bf16.msra.mxu0 0
    %1176 = vmatpush.bf16.msra.mxu0 0
    %1177 = vmatpush.bf16.msra.mxu0 %v1168
    %1178 = vmatmul.bf16.gmra.mxu0 %v1165
    %v1179 = vpop.f32.mrf.mxu0
    %v1180 = vadd.f32 0.0, %v1179
    %v1181 = vpop.f32.mrf.mxu0
    %1182 = vdwg.mxu0
    %v1184 = vsel %vm583, %v1114, 0
    %v1187 = vsel %vm1147, %v1130, 0
    %1189 = vmatpush.bf16.msra.mxu0 0
    %1190 = vmatpush.bf16.msra.mxu0 0
    %1191 = vmatpush.bf16.msra.mxu0 0
    %1192 = vmatpush.bf16.msra.mxu0 0
    %1193 = vmatpush.bf16.msra.mxu0 0
    %1194 = vmatpush.bf16.msra.mxu0 0
    %1195 = vmatpush.bf16.msra.mxu0 0
    %1196 = vmatpush.bf16.msra.mxu0 %v1187
    %1197 = vmatmul.bf16.gmra.mxu0 %v1184
    %v1198 = vpop.f32.mrf.mxu0
    %v1199 = vadd.f32 0.0, %v1198
    %v1200 = vpop.f32.mrf.mxu0
    %1201 = vdwg.mxu0
    %v1203 = vsel %vm583, %v1115, 0
    %v1206 = vsel %vm1147, %v1131, 0
    %1208 = vmatpush.bf16.msra.mxu0 0
    %1209 = vmatpush.bf16.msra.mxu0 0
    %1210 = vmatpush.bf16.msra.mxu0 0
    %1211 = vmatpush.bf16.msra.mxu0 0
    %1212 = vmatpush.bf16.msra.mxu0 0
    %1213 = vmatpush.bf16.msra.mxu0 0
    %1214 = vmatpush.bf16.msra.mxu0 0
    %1215 = vmatpush.bf16.msra.mxu0 %v1206
    %1216 = vmatmul.bf16.gmra.mxu0 %v1203
    %v1217 = vpop.f32.mrf.mxu0
    %v1218 = vadd.f32 0.0, %v1217
    %v1219 = vpop.f32.mrf.mxu0
    %1220 = vdwg.mxu0
    %v1222 = vsel %vm583, %v1116, 0
    %v1225 = vsel %vm1147, %v1132, 0
    %1227 = vmatpush.bf16.msra.mxu0 0
    %1228 = vmatpush.bf16.msra.mxu0 0
    %1229 = vmatpush.bf16.msra.mxu0 0
    %1230 = vmatpush.bf16.msra.mxu0 0
    %1231 = vmatpush.bf16.msra.mxu0 0
    %1232 = vmatpush.bf16.msra.mxu0 0
    %1233 = vmatpush.bf16.msra.mxu0 0
    %1234 = vmatpush.bf16.msra.mxu0 %v1225
    %1235 = vmatmul.bf16.gmra.mxu0 %v1222
    %v1236 = vpop.f32.mrf.mxu0
    %v1237 = vadd.f32 0.0, %v1236
    %v1238 = vpop.f32.mrf.mxu0
    %1239 = vdwg.mxu0
    %v1241 = vsel %vm583, %v1117, 0
    %v1244 = vsel %vm1147, %v1133, 0
    %1246 = vmatpush.bf16.msra.mxu0 0
    %1247 = vmatpush.bf16.msra.mxu0 0
    %1248 = vmatpush.bf16.msra.mxu0 0
    %1249 = vmatpush.bf16.msra.mxu0 0
    %1250 = vmatpush.bf16.msra.mxu0 0
    %1251 = vmatpush.bf16.msra.mxu0 0
    %1252 = vmatpush.bf16.msra.mxu0 0
    %1253 = vmatpush.bf16.msra.mxu0 %v1244
    %1254 = vmatmul.bf16.gmra.mxu0 %v1241
    %v1255 = vpop.f32.mrf.mxu0
    %v1256 = vadd.f32 0.0, %v1255
    %v1257 = vpop.f32.mrf.mxu0
    %1258 = vdwg.mxu0
    %v1260 = vsel %vm583, %v1118, 0
    %v1263 = vsel %vm1147, %v1134, 0
    %1265 = vmatpush.bf16.msra.mxu0 0
    %1266 = vmatpush.bf16.msra.mxu0 0
    %1267 = vmatpush.bf16.msra.mxu0 0
    %1268 = vmatpush.bf16.msra.mxu0 0
    %1269 = vmatpush.bf16.msra.mxu0 0
    %1270 = vmatpush.bf16.msra.mxu0 0
    %1271 = vmatpush.bf16.msra.mxu0 0
    %1272 = vmatpush.bf16.msra.mxu0 %v1263
    %1273 = vmatmul.bf16.gmra.mxu0 %v1260
    %v1274 = vpop.f32.mrf.mxu0
    %v1275 = vadd.f32 0.0, %v1274
    %v1276 = vpop.f32.mrf.mxu0
    %1277 = vdwg.mxu0
    %v1279 = vsel %vm583, %v1119, 0
    %v1282 = vsel %vm1147, %v1135, 0
    %1284 = vmatpush.bf16.msra.mxu0 0
    %1285 = vmatpush.bf16.msra.mxu0 0
    %1286 = vmatpush.bf16.msra.mxu0 0
    %1287 = vmatpush.bf16.msra.mxu0 0
    %1288 = vmatpush.bf16.msra.mxu0 0
    %1289 = vmatpush.bf16.msra.mxu0 0
    %1290 = vmatpush.bf16.msra.mxu0 0
    %1291 = vmatpush.bf16.msra.mxu0 %v1282
    %1292 = vmatmul.bf16.gmra.mxu0 %v1279
    %v1293 = vpop.f32.mrf.mxu0
    %v1294 = vadd.f32 0.0, %v1293
    %v1295 = vpop.f32.mrf.mxu0
    %1296 = vdwg.mxu0
    %v1298 = vsel %vm583, %v1120, 0
    %v1301 = vsel %vm1147, %v1136, 0
    %1303 = vmatpush.bf16.msra.mxu0 0
    %1304 = vmatpush.bf16.msra.mxu0 0
    %1305 = vmatpush.bf16.msra.mxu0 0
    %1306 = vmatpush.bf16.msra.mxu0 0
    %1307 = vmatpush.bf16.msra.mxu0 0
    %1308 = vmatpush.bf16.msra.mxu0 0
    %1309 = vmatpush.bf16.msra.mxu0 0
    %1310 = vmatpush.bf16.msra.mxu0 %v1301
    %1311 = vmatmul.bf16.gmra.mxu0 %v1298
    %v1312 = vpop.f32.mrf.mxu0
    %v1313 = vadd.f32 0.0, %v1312
    %v1314 = vpop.f32.mrf.mxu0
    %1315 = vdwg.mxu0
    %v1317 = vsel %vm583, %v1121, 0
    %v1320 = vsel %vm1147, %v1137, 0
    %1322 = vmatpush.bf16.msra.mxu0 0
    %1323 = vmatpush.bf16.msra.mxu0 0
    %1324 = vmatpush.bf16.msra.mxu0 0
    %1325 = vmatpush.bf16.msra.mxu0 0
    %1326 = vmatpush.bf16.msra.mxu0 0
    %1327 = vmatpush.bf16.msra.mxu0 0
    %1328 = vmatpush.bf16.msra.mxu0 0
    %1329 = vmatpush.bf16.msra.mxu0 %v1320
    %1330 = vmatmul.bf16.gmra.mxu0 %v1317
    %v1331 = vpop.f32.mrf.mxu0
    %v1332 = vadd.f32 0.0, %v1331
    %v1333 = vpop.f32.mrf.mxu0
    %1334 = vdwg.mxu0
    %v1336 = vsel %vm583, %v1122, 0
    %v1339 = vsel %vm1147, %v1138, 0
    %1341 = vmatpush.bf16.msra.mxu0 0
    %1342 = vmatpush.bf16.msra.mxu0 0
    %1343 = vmatpush.bf16.msra.mxu0 0
    %1344 = vmatpush.bf16.msra.mxu0 0
    %1345 = vmatpush.bf16.msra.mxu0 0
    %1346 = vmatpush.bf16.msra.mxu0 0
    %1347 = vmatpush.bf16.msra.mxu0 0
    %1348 = vmatpush.bf16.msra.mxu0 %v1339
    %1349 = vmatmul.bf16.gmra.mxu0 %v1336
    %v1350 = vpop.f32.mrf.mxu0
    %v1351 = vadd.f32 0.0, %v1350
    %v1352 = vpop.f32.mrf.mxu0
    %1353 = vdwg.mxu0
    %v1355 = vsel %vm583, %v1123, 0
    %v1358 = vsel %vm1147, %v1139, 0
    %1360 = vmatpush.bf16.msra.mxu0 0
    %1361 = vmatpush.bf16.msra.mxu0 0
    %1362 = vmatpush.bf16.msra.mxu0 0
    %1363 = vmatpush.bf16.msra.mxu0 0
    %1364 = vmatpush.bf16.msra.mxu0 0
    %1365 = vmatpush.bf16.msra.mxu0 0
    %1366 = vmatpush.bf16.msra.mxu0 0
    %1367 = vmatpush.bf16.msra.mxu0 %v1358
    %1368 = vmatmul.bf16.gmra.mxu0 %v1355
    %v1369 = vpop.f32.mrf.mxu0
    %v1370 = vadd.f32 0.0, %v1369
    %v1371 = vpop.f32.mrf.mxu0
    %1372 = vdwg.mxu0
    %v1374 = vsel %vm583, %v1124, 0
    %v1377 = vsel %vm1147, %v1140, 0
    %1379 = vmatpush.bf16.msra.mxu0 0
    %1380 = vmatpush.bf16.msra.mxu0 0
    %1381 = vmatpush.bf16.msra.mxu0 0
    %1382 = vmatpush.bf16.msra.mxu0 0
    %1383 = vmatpush.bf16.msra.mxu0 0
    %1384 = vmatpush.bf16.msra.mxu0 0
    %1385 = vmatpush.bf16.msra.mxu0 0
    %1386 = vmatpush.bf16.msra.mxu0 %v1377
    %1387 = vmatmul.bf16.gmra.mxu0 %v1374
    %v1388 = vpop.f32.mrf.mxu0
    %v1389 = vadd.f32 0.0, %v1388
    %v1390 = vpop.f32.mrf.mxu0
    %1391 = vdwg.mxu0
    %v1393 = vsel %vm583, %v1125, 0
    %v1396 = vsel %vm1147, %v1141, 0
    %1398 = vmatpush.bf16.msra.mxu0 0
    %1399 = vmatpush.bf16.msra.mxu0 0
    %1400 = vmatpush.bf16.msra.mxu0 0
    %1401 = vmatpush.bf16.msra.mxu0 0
    %1402 = vmatpush.bf16.msra.mxu0 0
    %1403 = vmatpush.bf16.msra.mxu0 0
    %1404 = vmatpush.bf16.msra.mxu0 0
    %1405 = vmatpush.bf16.msra.mxu0 %v1396
    %1406 = vmatmul.bf16.gmra.mxu0 %v1393
    %v1407 = vpop.f32.mrf.mxu0
    %v1408 = vadd.f32 0.0, %v1407
    %v1409 = vpop.f32.mrf.mxu0
    %1410 = vdwg.mxu0
    %v1412 = vsel %vm583, %v1126, 0
    %v1415 = vsel %vm1147, %v1142, 0
    %1417 = vmatpush.bf16.msra.mxu0 0
    %1418 = vmatpush.bf16.msra.mxu0 0
    %1419 = vmatpush.bf16.msra.mxu0 0
    %1420 = vmatpush.bf16.msra.mxu0 0
    %1421 = vmatpush.bf16.msra.mxu0 0
    %1422 = vmatpush.bf16.msra.mxu0 0
    %1423 = vmatpush.bf16.msra.mxu0 0
    %1424 = vmatpush.bf16.msra.mxu0 %v1415
    %1425 = vmatmul.bf16.gmra.mxu0 %v1412
    %v1426 = vpop.f32.mrf.mxu0
    %v1427 = vadd.f32 0.0, %v1426
    %v1428 = vpop.f32.mrf.mxu0
    %1429 = vdwg.mxu0
    %v1431 = vsel %vm583, %v1127, 0
    %v1434 = vsel %vm1147, %v1143, 0
    %1436 = vmatpush.bf16.msra.mxu0 0
    %1437 = vmatpush.bf16.msra.mxu0 0
    %1438 = vmatpush.bf16.msra.mxu0 0
    %1439 = vmatpush.bf16.msra.mxu0 0
    %1440 = vmatpush.bf16.msra.mxu0 0
    %1441 = vmatpush.bf16.msra.mxu0 0
    %1442 = vmatpush.bf16.msra.mxu0 0
    %1443 = vmatpush.bf16.msra.mxu0 %v1434
    %1444 = vmatmul.bf16.gmra.mxu0 %v1431
    %v1445 = vpop.f32.mrf.mxu0
    %v1446 = vadd.f32 0.0, %v1445
    %v1447 = vpop.f32.mrf.mxu0
    %1448 = vdwg.mxu0
    %1451 = vrot.lane.b32.xlu0 %v1199, 8
    %v1452 = vpop.permute.xlu0 %1451
    %1453 = vrot.lane.b32.xlu0 %v1218, 8
    %v1454 = vpop.permute.xlu0 %1453
    %1459 = vrot.lane.b32.xlu0 %v1237, 16
    %v1460 = vpop.permute.xlu0 %1459
    %1461 = vrot.lane.b32.xlu0 %v1256, 16
    %v1462 = vpop.permute.xlu0 %1461
    %1467 = vrot.lane.b32.xlu0 %v1275, 24
    %v1468 = vpop.permute.xlu0 %1467
    %1469 = vrot.lane.b32.xlu0 %v1294, 24
    %v1470 = vpop.permute.xlu0 %1469
    %1475 = vrot.lane.b32.xlu0 %v1313, 32
    %v1476 = vpop.permute.xlu0 %1475
    %1477 = vrot.lane.b32.xlu0 %v1332, 32
    %v1478 = vpop.permute.xlu0 %1477
    %1483 = vrot.lane.b32.xlu0 %v1351, 40
    %v1484 = vpop.permute.xlu0 %1483
    %1485 = vrot.lane.b32.xlu0 %v1370, 40
    %v1486 = vpop.permute.xlu0 %1485
    %1491 = vrot.lane.b32.xlu0 %v1389, 48
    %v1492 = vpop.permute.xlu0 %1491
    %1493 = vrot.lane.b32.xlu0 %v1408, 48
    %v1494 = vpop.permute.xlu0 %1493
    %1499 = vrot.lane.b32.xlu0 %v1427, 56
    %v1500 = vpop.permute.xlu0 %1499
    %1501 = vrot.lane.b32.xlu0 %v1446, 56
    %v1502 = vpop.permute.xlu0 %1501
    %v1505 = vsel %vm583, %v1161, %v1452
    %v1506 = vsel %vm583, %v1180, %v1454
    %vm1507 = vcmask 130048
    %v1508 = vsel %vm1507, %v1505, %v1460
    %v1509 = vsel %vm1507, %v1506, %v1462
    %vm1510 = vcmask 195584
    %v1511 = vsel %vm1510, %v1508, %v1468
    %v1512 = vsel %vm1510, %v1509, %v1470
    %vm1513 = vcmask 261120
    %v1514 = vsel %vm1513, %v1511, %v1476
    %v1515 = vsel %vm1513, %v1512, %v1478
    %vm1516 = vcmask 326656
    %v1517 = vsel %vm1516, %v1514, %v1484
    %v1518 = vsel %vm1516, %v1515, %v1486
    %vm1519 = vcmask 392192
    %v1520 = vsel %vm1519, %v1517, %v1492
    %v1521 = vsel %vm1519, %v1518, %v1494
    %vm1522 = vcmask 457728
    %v1523 = vsel %vm1522, %v1520, %v1500
    %v1524 = vsel %vm1522, %v1521, %v1502
    %v1525 = vld [vmem:[%s5] sm:$0xf]
    %v1526 = vld [vmem:[%s5 + $0x4] sm:$0xf]
    %v1527 = vld [vmem:[%s5 + $0x8] sm:$0xf]
    %v1528 = vld [vmem:[%s5 + $0xc] sm:$0xf]
    %v1529 = vld [vmem:[%s5 + $0x10] sm:$0xf]
    %v1530 = vld [vmem:[%s5 + $0x14] sm:$0xf]
    %v1531 = vld [vmem:[%s5 + $0x18] sm:$0xf]
    %v1532 = vld [vmem:[%s5 + $0x1c] sm:$0xf]
    %v1533 = vpack.c.bf16 %v1524, %v1523
    %v1542 = vunpack.c.l.b16 %v1525
    %v1543 = vunpack.c.l.b16 %v1526
    %v1544 = vunpack.c.l.b16 %v1527
    %v1545 = vunpack.c.l.b16 %v1528
    %v1546 = vunpack.c.l.b16 %v1529
    %v1547 = vunpack.c.l.b16 %v1530
    %v1548 = vunpack.c.l.b16 %v1531
    %v1549 = vunpack.c.l.b16 %v1532
    %v1550 = vpack.c.b16 %v1543, %v1542
    %v1551 = vpack.c.b16 %v1545, %v1544
    %v1552 = vpack.c.b16 %v1547, %v1546
    %v1553 = vpack.c.b16 %v1549, %v1548
    %v1559 = vsel %vm199, %v1533, 0
    %1561 = vmatpush.bf16.msra.mxu0 0
    %1562 = vmatpush.bf16.msra.mxu0 0
    %1563 = vmatpush.bf16.msra.mxu0 0
    %1564 = vmatpush.bf16.msra.mxu0 0
    %1565 = vmatpush.bf16.msra.mxu0 %v1553
    %1566 = vmatpush.bf16.msra.mxu0 %v1552
    %1567 = vmatpush.bf16.msra.mxu0 %v1551
    %1568 = vmatpush.bf16.msra.mxu0 %v1550
    %1569 = vmatmul.bf16.gmra.mxu0 %v1559
    %v1570 = vpop.f32.mrf.mxu0
    %v1571 = vadd.f32 0.0, %v1570
    %v1572 = vpop.f32.mrf.mxu0
    %v1573 = vadd.f32 0.0, %v1572
    %1574 = vdwg.mxu0
    %v1575 = vadd.f32 %v195, %v1571
    %v1576 = vadd.f32 %v196, %v1573
    %v1577 = vld [vmem:[#allocation10] sm:$0x1]
    %v1579 = vperm.slane %v1577, 0
    %v1581 = vadd.f32 %v1575, %v1579
    %v1582 = vadd.f32 %v1576, %v1579
    %v1583 = vld [vmem:[#allocation11] sm:$0x1]
    %v1584 = vld [vmem:[#allocation13] sm:$0x1]
    %v1585 = vsel %vm199, %v1581, 0.0
    %1586 = vadd.xlane.f32.xlu0 %v1585
    %v1587 = vpop.xlane.xlu0 %1586
    %v1588 = vsel %vm199, %v1582, 0.0
    %1589 = vadd.xlane.f32.xlu0 %v1588
    %v1590 = vpop.xlane.xlu0 %1589
    %v1591 = vmul.f32 %v1587, %v212
    %v1592 = vmul.f32 %v1590, %v212
    %v1593 = vsub.f32 %v1581, %v1591
    %v1594 = vsub.f32 %v1582, %v1592
    %v1595 = vmul.f32 %v1593, %v1593
    %v1596 = vmul.f32 %v1594, %v1594
    %v1597 = vsel %vm199, %v1595, 0.0
    %1598 = vadd.xlane.f32.xlu0 %v1597
    %v1599 = vpop.xlane.xlu0 %1598
    %v1600 = vsel %vm199, %v1596, 0.0
    %1601 = vadd.xlane.f32.xlu0 %v1600
    %v1602 = vpop.xlane.xlu0 %1601
    %v1603 = vmul.f32 %v1599, %v212
    %v1604 = vmul.f32 %v1602, %v212
    %v1605 = vadd.f32 %v1603, 1e-05
    %v1606 = vadd.f32 %v1604, 1e-05
    %v1607 = vrsqrt.pop %v1605
    %v1608 = vmul.f32 %v1607, %v1605
    %v1609 = vmul.f32 %v1608, %v1607
    %v1610 = vmul.f32 0.5, %v1609
    %v1611 = vsub.f32 1.5, %v1610
    %v1612 = vmul.f32 %v1607, %v1611
    %vm1613 = vweird.f32 %v1605
    %vm1614 = vweird.f32 %v1607
    %vm1615 = vmor %vm1613, %vm1614
    %v1616 = vsel %vm1615, %v1607, %v1612
    %v1617 = vrsqrt.pop %v1606
    %v1618 = vmul.f32 %v1617, %v1606
    %v1619 = vmul.f32 %v1618, %v1617
    %v1620 = vmul.f32 0.5, %v1619
    %v1621 = vsub.f32 1.5, %v1620
    %v1622 = vmul.f32 %v1617, %v1621
    %vm1623 = vweird.f32 %v1606
    %vm1624 = vweird.f32 %v1617
    %vm1625 = vmor %vm1623, %vm1624
    %v1626 = vsel %vm1625, %v1617, %v1622
    %v1627 = vmul.f32 %v1593, %v1616
    %v1628 = vmul.f32 %v1594, %v1626
    %v1630 = vperm.slane %v1583, 0
    %v1632 = vmul.f32 %v1627, %v1630
    %v1633 = vmul.f32 %v1628, %v1630
    %v1635 = vperm.slane %v1584, 0
    %v1637 = vadd.f32 %v1632, %v1635
    %v1638 = vadd.f32 %v1633, %v1635
    %v1639 = vld [vmem:[%s9] sm:$0xff]
    %v1640 = vld [vmem:[%s9 + $0x8] sm:$0xff]
    %v1641 = vld [vmem:[%s9 + $0x10] sm:$0xff]
    %v1642 = vld [vmem:[%s9 + $0x18] sm:$0xff]
    %v1643 = vld [vmem:[%s9 + $0x20] sm:$0xff]
    %v1644 = vld [vmem:[%s9 + $0x28] sm:$0xff]
    %v1645 = vld [vmem:[%s9 + $0x30] sm:$0xff]
    %v1646 = vld [vmem:[%s9 + $0x38] sm:$0xff]
    %v1647 = vpack.c.bf16 %v1638, %v1637
    %v1648 = vld [vmem:[%s10] sm:$0x3]
    %v1650 = vperm.slane %v1648, 0
    %v1651 = vperm.slane %v1648, 1
    %v1662 = vunpack.c.l.b16 %v1639
    %v1663 = vunpack.c.h.b16 %v1639
    %v1664 = vunpack.c.l.b16 %v1640
    %v1665 = vunpack.c.h.b16 %v1640
    %v1666 = vunpack.c.l.b16 %v1641
    %v1667 = vunpack.c.h.b16 %v1641
    %v1668 = vunpack.c.l.b16 %v1642
    %v1669 = vunpack.c.h.b16 %v1642
    %v1670 = vunpack.c.l.b16 %v1643
    %v1671 = vunpack.c.h.b16 %v1643
    %v1672 = vunpack.c.l.b16 %v1644
    %v1673 = vunpack.c.h.b16 %v1644
    %v1674 = vunpack.c.l.b16 %v1645
    %v1675 = vunpack.c.h.b16 %v1645
    %v1676 = vunpack.c.l.b16 %v1646
    %v1677 = vunpack.c.h.b16 %v1646
    %v1678 = vpack.c.b16 %v1664, %v1662
    %v1679 = vpack.c.b16 %v1665, %v1663
    %v1680 = vpack.c.b16 %v1668, %v1666
    %v1681 = vpack.c.b16 %v1669, %v1667
    %v1682 = vpack.c.b16 %v1672, %v1670
    %v1683 = vpack.c.b16 %v1673, %v1671
    %v1684 = vpack.c.b16 %v1676, %v1674
    %v1685 = vpack.c.b16 %v1677, %v1675
    %v1695 = vsel %vm199, %v1647, 0
    %1697 = vmatpush.bf16.msra.mxu0 0
    %1698 = vmatpush.bf16.msra.mxu0 0
    %1699 = vmatpush.bf16.msra.mxu0 0
    %1700 = vmatpush.bf16.msra.mxu0 0
    %1701 = vmatpush.bf16.msra.mxu0 %v1684
    %1702 = vmatpush.bf16.msra.mxu0 %v1682
    %1703 = vmatpush.bf16.msra.mxu0 %v1680
    %1704 = vmatpush.bf16.msra.mxu0 %v1678
    %1705 = vmatmul.bf16.gmra.mxu0 %v1695
    %v1706 = vpop.f32.mrf.mxu0
    %v1707 = vadd.f32 %v1650, %v1706
    %v1708 = vpop.f32.mrf.mxu0
    %v1709 = vadd.f32 %v1650, %v1708
    %1710 = vdwg.mxu0
    %1711 = vmatpush.bf16.msra.mxu0 0
    %1712 = vmatpush.bf16.msra.mxu0 0
    %1713 = vmatpush.bf16.msra.mxu0 0
    %1714 = vmatpush.bf16.msra.mxu0 0
    %1715 = vmatpush.bf16.msra.mxu0 %v1685
    %1716 = vmatpush.bf16.msra.mxu0 %v1683
    %1717 = vmatpush.bf16.msra.mxu0 %v1681
    %1718 = vmatpush.bf16.msra.mxu0 %v1679
    %1719 = vmatmul.bf16.gmra.mxu0 %v1695
    %v1720 = vpop.f32.mrf.mxu0
    %v1721 = vadd.f32 %v1651, %v1720
    %v1722 = vpop.f32.mrf.mxu0
    %v1723 = vadd.f32 %v1651, %v1722
    %1724 = vdwg.mxu0
    %v1725 = vmul.f32 %v1707, 0.5
    %v1726 = vmul.f32 %v1721, 0.5
    %v1727 = vmul.f32 %v1709, 0.5
    %v1728 = vmul.f32 %v1723, 0.5
    %v1729 = vmul.f32 %v1707, 0.70710677
    %v1730 = vmul.f32 %v1721, 0.70710677
    %v1731 = vmul.f32 %v1709, 0.70710677
    %v1732 = vmul.f32 %v1723, 0.70710677
    %vm1733 = vcmp.lt.f32.partialorder %v1729, 0.0
    %vm1734 = vcmp.lt.f32.partialorder %v1730, 0.0
    %vm1735 = vcmp.lt.f32.partialorder %v1731, 0.0
    %vm1736 = vcmp.lt.f32.partialorder %v1732, 0.0
    %v1737 = vsel %vm1733, -1.0, 1.0
    %v1738 = vsel %vm1734, -1.0, 1.0
    %v1739 = vsel %vm1735, -1.0, 1.0
    %v1740 = vsel %vm1736, -1.0, 1.0
    %v1741 = vand.u32 2147483647, %v1729
    %v1742 = vand.u32 2147483647, %v1730
    %v1743 = vand.u32 2147483647, %v1731
    %v1744 = vand.u32 2147483647, %v1732
    %v1745 = vmul.f32 %v1741, 0.3275911
    %v1746 = vmul.f32 %v1742, 0.3275911
    %v1747 = vmul.f32 %v1743, 0.3275911
    %v1748 = vmul.f32 %v1744, 0.3275911
    %v1749 = vadd.f32 %v1745, 1.0
    %v1750 = vadd.f32 %v1746, 1.0
    %v1751 = vadd.f32 %v1747, 1.0
    %v1752 = vadd.f32 %v1748, 1.0
    %v1753 = vrcp.pop %v1749
    %v1754 = vmul.f32 %v1749, %v1753
    %v1755 = vsub.f32 1.0, %v1754
    %v1756 = vmul.f32 %v1753, %v1755
    %v1757 = vadd.f32 %v1753, %v1756
    %vm1758 = vweird.f32 %v1749
    %vm1759 = vweird.f32 %v1753
    %vm1760 = vmor %vm1758, %vm1759
    %v1761 = vsel %vm1760, %v1753, %v1757
    %v1762 = vand.u32 2147483647, %v1749
    %vm1763 = vcmp.eq.f32.partialorder %v1762, 8.507059e+37
    %v1764 = vand.u32 %v1749, 2147483648
    %v1765 = vor.u32 1.1754944e-38, %v1764
    %v1766 = vsel %vm1763, %v1765, %v1761
    %v1767 = vmul.f32 1.0, %v1766
    %v1768 = vrcp.pop %v1750
    %v1769 = vmul.f32 %v1750, %v1768
    %v1770 = vsub.f32 1.0, %v1769
    %v1771 = vmul.f32 %v1768, %v1770
    %v1772 = vadd.f32 %v1768, %v1771
    %vm1773 = vweird.f32 %v1750
    %vm1774 = vweird.f32 %v1768
    %vm1775 = vmor %vm1773, %vm1774
    %v1776 = vsel %vm1775, %v1768, %v1772
    %v1777 = vand.u32 2147483647, %v1750
    %vm1778 = vcmp.eq.f32.partialorder %v1777, 8.507059e+37
    %v1779 = vand.u32 %v1750, 2147483648
    %v1780 = vor.u32 1.1754944e-38, %v1779
    %v1781 = vsel %vm1778, %v1780, %v1776
    %v1782 = vmul.f32 1.0, %v1781
    %v1783 = vrcp.pop %v1751
    %v1784 = vmul.f32 %v1751, %v1783
    %v1785 = vsub.f32 1.0, %v1784
    %v1786 = vmul.f32 %v1783, %v1785
    %v1787 = vadd.f32 %v1783, %v1786
    %vm1788 = vweird.f32 %v1751
    %vm1789 = vweird.f32 %v1783
    %vm1790 = vmor %vm1788, %vm1789
    %v1791 = vsel %vm1790, %v1783, %v1787
    %v1792 = vand.u32 2147483647, %v1751
    %vm1793 = vcmp.eq.f32.partialorder %v1792, 8.507059e+37
    %v1794 = vand.u32 %v1751, 2147483648
    %v1795 = vor.u32 1.1754944e-38, %v1794
    %v1796 = vsel %vm1793, %v1795, %v1791
    %v1797 = vmul.f32 1.0, %v1796
    %v1798 = vrcp.pop %v1752
    %v1799 = vmul.f32 %v1752, %v1798
    %v1800 = vsub.f32 1.0, %v1799
    %v1801 = vmul.f32 %v1798, %v1800
    %v1802 = vadd.f32 %v1798, %v1801
    %vm1803 = vweird.f32 %v1752
    %vm1804 = vweird.f32 %v1798
    %vm1805 = vmor %vm1803, %vm1804
    %v1806 = vsel %vm1805, %v1798, %v1802
    %v1807 = vand.u32 2147483647, %v1752
    %vm1808 = vcmp.eq.f32.partialorder %v1807, 8.507059e+37
    %v1809 = vand.u32 %v1752, 2147483648
    %v1810 = vor.u32 1.1754944e-38, %v1809
    %v1811 = vsel %vm1808, %v1810, %v1806
    %v1812 = vmul.f32 1.0, %v1811
    %v1813 = vmul.f32 %v1767, 1.0614054
    %v1814 = vmul.f32 %v1782, 1.0614054
    %v1815 = vmul.f32 %v1797, 1.0614054
    %v1816 = vmul.f32 %v1812, 1.0614054
    %v1817 = vadd.f32 %v1813, -1.4531521
    %v1818 = vadd.f32 %v1814, -1.4531521
    %v1819 = vadd.f32 %v1815, -1.4531521
    %v1820 = vadd.f32 %v1816, -1.4531521
    %v1821 = vmul.f32 %v1817, %v1767
    %v1822 = vmul.f32 %v1818, %v1782
    %v1823 = vmul.f32 %v1819, %v1797
    %v1824 = vmul.f32 %v1820, %v1812
    %v1825 = vadd.f32 %v1821, 1.4214138
    %v1826 = vadd.f32 %v1822, 1.4214138
    %v1827 = vadd.f32 %v1823, 1.4214138
    %v1828 = vadd.f32 %v1824, 1.4214138
    %v1829 = vmul.f32 %v1825, %v1767
    %v1830 = vmul.f32 %v1826, %v1782
    %v1831 = vmul.f32 %v1827, %v1797
    %v1832 = vmul.f32 %v1828, %v1812
    %v1833 = vadd.f32 %v1829, -0.28449672
    %v1834 = vadd.f32 %v1830, -0.28449672
    %v1835 = vadd.f32 %v1831, -0.28449672
    %v1836 = vadd.f32 %v1832, -0.28449672
    %v1837 = vmul.f32 %v1833, %v1767
    %v1838 = vmul.f32 %v1834, %v1782
    %v1839 = vmul.f32 %v1835, %v1797
    %v1840 = vmul.f32 %v1836, %v1812
    %v1841 = vadd.f32 %v1837, 0.2548296
    %v1842 = vadd.f32 %v1838, 0.2548296
    %v1843 = vadd.f32 %v1839, 0.2548296
    %v1844 = vadd.f32 %v1840, 0.2548296
    %v1845 = vmul.f32 %v1841, %v1767
    %v1846 = vmul.f32 %v1842, %v1782
    %v1847 = vmul.f32 %v1843, %v1797
    %v1848 = vmul.f32 %v1844, %v1812
    %v1849 = vsub.f32 0.0, %v1741
    %v1850 = vsub.f32 0.0, %v1742
    %v1851 = vsub.f32 0.0, %v1743
    %v1852 = vsub.f32 0.0, %v1744
    %v1853 = vmul.f32 %v1849, %v1741
    %v1854 = vmul.f32 %v1850, %v1742
    %v1855 = vmul.f32 %v1851, %v1743
    %v1856 = vmul.f32 %v1852, %v1744
    %v1857 = vmul.f32 %v1853, 1.442695
    %v1858 = vpow.pop %v1857
    %v1859 = vmul.f32 %v1854, 1.442695
    %v1860 = vpow.pop %v1859
    %v1861 = vmul.f32 %v1855, 1.442695
    %v1862 = vpow.pop %v1861
    %v1863 = vmul.f32 %v1856, 1.442695
    %v1864 = vpow.pop %v1863
    %v1865 = vmul.f32 %v1845, %v1858
    %v1866 = vmul.f32 %v1846, %v1860
    %v1867 = vmul.f32 %v1847, %v1862
    %v1868 = vmul.f32 %v1848, %v1864
    %v1869 = vsub.f32 1.0, %v1865
    %v1870 = vsub.f32 1.0, %v1866
    %v1871 = vsub.f32 1.0, %v1867
    %v1872 = vsub.f32 1.0, %v1868
    %v1873 = vmul.f32 %v1737, %v1869
    %v1874 = vmul.f32 %v1738, %v1870
    %v1875 = vmul.f32 %v1739, %v1871
    %v1876 = vmul.f32 %v1740, %v1872
    %v1877 = vadd.f32 %v1873, 1.0
    %v1878 = vadd.f32 %v1874, 1.0
    %v1879 = vadd.f32 %v1875, 1.0
    %v1880 = vadd.f32 %v1876, 1.0
    %v1881 = vmul.f32 %v1725, %v1877
    %v1882 = vmul.f32 %v1726, %v1878
    %v1883 = vmul.f32 %v1727, %v1879
    %v1884 = vmul.f32 %v1728, %v1880
    %v1885 = vld [vmem:[%s11] sm:$0xf]
    %v1886 = vld [vmem:[%s11 + $0x4] sm:$0xf]
    %v1887 = vld [vmem:[%s11 + $0x8] sm:$0xf]
    %v1888 = vld [vmem:[%s11 + $0xc] sm:$0xf]
    %v1889 = vld [vmem:[%s11 + $0x10] sm:$0xf]
    %v1890 = vld [vmem:[%s11 + $0x14] sm:$0xf]
    %v1891 = vld [vmem:[%s11 + $0x18] sm:$0xf]
    %v1892 = vld [vmem:[%s11 + $0x1c] sm:$0xf]
    %v1893 = vld [vmem:[%s11 + $0x20] sm:$0xf]
    %v1894 = vld [vmem:[%s11 + $0x24] sm:$0xf]
    %v1895 = vld [vmem:[%s11 + $0x28] sm:$0xf]
    %v1896 = vld [vmem:[%s11 + $0x2c] sm:$0xf]
    %v1897 = vld [vmem:[%s11 + $0x30] sm:$0xf]
    %v1898 = vld [vmem:[%s11 + $0x34] sm:$0xf]
    %v1899 = vld [vmem:[%s11 + $0x38] sm:$0xf]
    %v1900 = vld [vmem:[%s11 + $0x3c] sm:$0xf]
    %v1901 = vld [vmem:[%s11 + $0x40] sm:$0xf]
    %v1902 = vld [vmem:[%s11 + $0x44] sm:$0xf]
    %v1903 = vld [vmem:[%s11 + $0x48] sm:$0xf]
    %v1904 = vld [vmem:[%s11 + $0x4c] sm:$0xf]
    %v1905 = vld [vmem:[%s11 + $0x50] sm:$0xf]
    %v1906 = vld [vmem:[%s11 + $0x54] sm:$0xf]
    %v1907 = vld [vmem:[%s11 + $0x58] sm:$0xf]
    %v1908 = vld [vmem:[%s11 + $0x5c] sm:$0xf]
    %v1909 = vld [vmem:[%s11 + $0x60] sm:$0xf]
    %v1910 = vld [vmem:[%s11 + $0x64] sm:$0xf]
    %v1911 = vld [vmem:[%s11 + $0x68] sm:$0xf]
    %v1912 = vld [vmem:[%s11 + $0x6c] sm:$0xf]
    %v1913 = vld [vmem:[%s11 + $0x70] sm:$0xf]
    %v1914 = vld [vmem:[%s11 + $0x74] sm:$0xf]
    %v1915 = vld [vmem:[%s11 + $0x78] sm:$0xf]
    %v1916 = vld [vmem:[%s11 + $0x7c] sm:$0xf]
    %v1917 = vpack.c.bf16 %v1883, %v1881
    %v1918 = vpack.c.bf16 %v1884, %v1882
    %v1951 = vunpack.c.l.b16 %v1885
    %v1952 = vunpack.c.l.b16 %v1886
    %v1953 = vunpack.c.l.b16 %v1887
    %v1954 = vunpack.c.l.b16 %v1888
    %v1955 = vunpack.c.l.b16 %v1889
    %v1956 = vunpack.c.l.b16 %v1890
    %v1957 = vunpack.c.l.b16 %v1891
    %v1958 = vunpack.c.l.b16 %v1892
    %v1959 = vunpack.c.l.b16 %v1893
    %v1960 = vunpack.c.l.b16 %v1894
    %v1961 = vunpack.c.l.b16 %v1895
    %v1962 = vunpack.c.l.b16 %v1896
    %v1963 = vunpack.c.l.b16 %v1897
    %v1964 = vunpack.c.l.b16 %v1898
    %v1965 = vunpack.c.l.b16 %v1899
    %v1966 = vunpack.c.l.b16 %v1900
    %v1967 = vunpack.c.l.b16 %v1901
    %v1968 = vunpack.c.l.b16 %v1902
    %v1969 = vunpack.c.l.b16 %v1903
    %v1970 = vunpack.c.l.b16 %v1904
    %v1971 = vunpack.c.l.b16 %v1905
    %v1972 = vunpack.c.l.b16 %v1906
    %v1973 = vunpack.c.l.b16 %v1907
    %v1974 = vunpack.c.l.b16 %v1908
    %v1975 = vunpack.c.l.b16 %v1909
    %v1976 = vunpack.c.l.b16 %v1910
    %v1977 = vunpack.c.l.b16 %v1911
    %v1978 = vunpack.c.l.b16 %v1912
    %v1979 = vunpack.c.l.b16 %v1913
    %v1980 = vunpack.c.l.b16 %v1914
    %v1981 = vunpack.c.l.b16 %v1915
    %v1982 = vunpack.c.l.b16 %v1916
    %v1983 = vpack.c.b16 %v1952, %v1951
    %v1984 = vpack.c.b16 %v1954, %v1953
    %v1985 = vpack.c.b16 %v1956, %v1955
    %v1986 = vpack.c.b16 %v1958, %v1957
    %v1987 = vpack.c.b16 %v1960, %v1959
    %v1988 = vpack.c.b16 %v1962, %v1961
    %v1989 = vpack.c.b16 %v1964, %v1963
    %v1990 = vpack.c.b16 %v1966, %v1965
    %v1991 = vpack.c.b16 %v1968, %v1967
    %v1992 = vpack.c.b16 %v1970, %v1969
    %v1993 = vpack.c.b16 %v1972, %v1971
    %v1994 = vpack.c.b16 %v1974, %v1973
    %v1995 = vpack.c.b16 %v1976, %v1975
    %v1996 = vpack.c.b16 %v1978, %v1977
    %v1997 = vpack.c.b16 %v1980, %v1979
    %v1998 = vpack.c.b16 %v1982, %v1981
    %2015 = vmatpush.bf16.msra.mxu0 %v1990
    %2016 = vmatpush.bf16.msra.mxu0 %v1989
    %2017 = vmatpush.bf16.msra.mxu0 %v1988
    %2018 = vmatpush.bf16.msra.mxu0 %v1987
    %2019 = vmatpush.bf16.msra.mxu0 %v1986
    %2020 = vmatpush.bf16.msra.mxu0 %v1985
    %2021 = vmatpush.bf16.msra.mxu0 %v1984
    %2022 = vmatpush.bf16.msra.mxu0 %v1983
    %2023 = vmatmul.bf16.gmra.mxu0 %v1917
    %v2024 = vpop.f32.mrf.mxu0
    %v2025 = vadd.f32 0.0, %v2024
    %v2026 = vpop.f32.mrf.mxu0
    %v2027 = vadd.f32 0.0, %v2026
    %2028 = vdwg.mxu0
    %2029 = vmatpush.bf16.msra.mxu0 %v1998
    %2030 = vmatpush.bf16.msra.mxu0 %v1997
    %2031 = vmatpush.bf16.msra.mxu0 %v1996
    %2032 = vmatpush.bf16.msra.mxu0 %v1995
    %2033 = vmatpush.bf16.msra.mxu0 %v1994
    %2034 = vmatpush.bf16.msra.mxu0 %v1993
    %2035 = vmatpush.bf16.msra.mxu0 %v1992
    %2036 = vmatpush.bf16.msra.mxu0 %v1991
    %2037 = vmatmul.bf16.gmra.mxu0 %v1918
    %v2038 = vpop.f32.mrf.mxu0
    %v2039 = vadd.f32 %v2025, %v2038
    %v2040 = vpop.f32.mrf.mxu0
    %v2041 = vadd.f32 %v2027, %v2040
    %2042 = vdwg.mxu0
    %v2043 = vadd.f32 %v1581, %v2039
    %v2044 = vadd.f32 %v1582, %v2041
    %v2045 = vld [vmem:[#allocation14] sm:$0x1]
    %v2047 = vperm.slane %v2045, 0
    %v2049 = vadd.f32 %v2043, %v2047
    %v2050 = vadd.f32 %v2044, %v2047
    %v2051 = vadd.f32 %v1096, 0.0
    %v2052 = vadd.f32 %v1097, 0.0
    %v2053 = vadd.f32 %v2051, %v1098
    %v2054 = vadd.f32 %v2052, %v1099
    %v2055 = vadd.f32 %v2053, %v1100
    %v2056 = vadd.f32 %v2054, %v1101
    %v2057 = vadd.f32 %v2055, %v1102
    %v2058 = vadd.f32 %v2056, %v1103
    %v2059 = vadd.f32 %v2057, %v1104
    %v2060 = vadd.f32 %v2058, %v1105
    %v2061 = vadd.f32 %v2059, %v1106
    %v2062 = vadd.f32 %v2060, %v1107
    %v2063 = vadd.f32 %v2061, %v1108
    %v2064 = vadd.f32 %v2062, %v1109
    %v2065 = vadd.f32 %v2063, %v1110
    %v2066 = vadd.f32 %v2064, %v1111
    %v2067 = vmul.f32 %v2065, 0.125
    %v2068 = vmul.f32 %v2066, 0.125
    %s2069 = scalar_lea.vmem [#allocation5], 1
    %v2070 = vld [vmem:[%s2069] sm:$0x1]
    %s2071 = scalar_lea.vmem [#allocation7], 1
    %v2072 = vld [vmem:[%s2071] sm:$0x1]
    %v2073 = vsel %vm199, %v2049, 0.0
    %2074 = vadd.xlane.f32.xlu0 %v2073
    %v2075 = vpop.xlane.xlu0 %2074
    %v2076 = vsel %vm199, %v2050, 0.0
    %2077 = vadd.xlane.f32.xlu0 %v2076
    %v2078 = vpop.xlane.xlu0 %2077
    %v2079 = vmul.f32 %v2075, %v212
    %v2080 = vmul.f32 %v2078, %v212
    %v2081 = vsub.f32 %v2049, %v2079
    %v2082 = vsub.f32 %v2050, %v2080
    %v2083 = vmul.f32 %v2081, %v2081
    %v2084 = vmul.f32 %v2082, %v2082
    %v2085 = vsel %vm199, %v2083, 0.0
    %2086 = vadd.xlane.f32.xlu0 %v2085
    %v2087 = vpop.xlane.xlu0 %2086
    %v2088 = vsel %vm199, %v2084, 0.0
    %2089 = vadd.xlane.f32.xlu0 %v2088
    %v2090 = vpop.xlane.xlu0 %2089
    %v2091 = vmul.f32 %v2087, %v212
    %v2092 = vmul.f32 %v2090, %v212
    %v2093 = vadd.f32 %v2091, 1e-05
    %v2094 = vadd.f32 %v2092, 1e-05
    %v2095 = vrsqrt.pop %v2093
    %v2096 = vmul.f32 %v2095, %v2093
    %v2097 = vmul.f32 %v2096, %v2095
    %v2098 = vmul.f32 0.5, %v2097
    %v2099 = vsub.f32 1.5, %v2098
    %v2100 = vmul.f32 %v2095, %v2099
    %vm2101 = vweird.f32 %v2093
    %vm2102 = vweird.f32 %v2095
    %vm2103 = vmor %vm2101, %vm2102
    %v2104 = vsel %vm2103, %v2095, %v2100
    %v2105 = vrsqrt.pop %v2094
    %v2106 = vmul.f32 %v2105, %v2094
    %v2107 = vmul.f32 %v2106, %v2105
    %v2108 = vmul.f32 0.5, %v2107
    %v2109 = vsub.f32 1.5, %v2108
    %v2110 = vmul.f32 %v2105, %v2109
    %vm2111 = vweird.f32 %v2094
    %vm2112 = vweird.f32 %v2105
    %vm2113 = vmor %vm2111, %vm2112
    %v2114 = vsel %vm2113, %v2105, %v2110
    %v2115 = vmul.f32 %v2081, %v2104
    %v2116 = vmul.f32 %v2082, %v2114
    %v2118 = vperm.slane %v2070, 0
    %v2120 = vmul.f32 %v2115, %v2118
    %v2121 = vmul.f32 %v2116, %v2118
    %v2123 = vperm.slane %v2072, 0
    %v2125 = vadd.f32 %v2120, %v2123
    %v2126 = vadd.f32 %v2121, %v2123
    %s2127 = scalar_lea.vmem %s3, 96
    %v2128 = vld [vmem:[%s2127] sm:$0xf]
    %v2129 = vld [vmem:[%s2127 + $0x4] sm:$0xf]
    %v2130 = vld [vmem:[%s2127 + $0x8] sm:$0xf]
    %v2131 = vld [vmem:[%s2127 + $0xc] sm:$0xf]
    %v2132 = vld [vmem:[%s2127 + $0x10] sm:$0xf]
    %v2133 = vld [vmem:[%s2127 + $0x14] sm:$0xf]
    %v2134 = vld [vmem:[%s2127 + $0x18] sm:$0xf]
    %v2135 = vld [vmem:[%s2127 + $0x1c] sm:$0xf]
    %v2136 = vpack.c.bf16 %v2126, %v2125
    %s2137 = scalar_lea.vmem [#allocation8], 3
    %v2138 = vld [vmem:[%s2137] sm:$0x1]
    %v2140 = vperm.slane %v2138, 0
    %v2150 = vunpack.c.l.b16 %v2128
    %v2151 = vunpack.c.l.b16 %v2129
    %v2152 = vunpack.c.l.b16 %v2130
    %v2153 = vunpack.c.l.b16 %v2131
    %v2154 = vunpack.c.l.b16 %v2132
    %v2155 = vunpack.c.l.b16 %v2133
    %v2156 = vunpack.c.l.b16 %v2134
    %v2157 = vunpack.c.l.b16 %v2135
    %v2158 = vpack.c.b16 %v2151, %v2150
    %v2159 = vpack.c.b16 %v2153, %v2152
    %v2160 = vpack.c.b16 %v2155, %v2154
    %v2161 = vpack.c.b16 %v2157, %v2156
    %v2167 = vsel %vm199, %v2136, 0
    %2169 = vmatpush.bf16.msra.mxu0 0
    %2170 = vmatpush.bf16.msra.mxu0 0
    %2171 = vmatpush.bf16.msra.mxu0 0
    %2172 = vmatpush.bf16.msra.mxu0 0
    %2173 = vmatpush.bf16.msra.mxu0 %v2161
    %2174 = vmatpush.bf16.msra.mxu0 %v2160
    %2175 = vmatpush.bf16.msra.mxu0 %v2159
    %2176 = vmatpush.bf16.msra.mxu0 %v2158
    %2177 = vmatmul.bf16.gmra.mxu0 %v2167
    %v2178 = vpop.f32.mrf.mxu0
    %v2179 = vadd.f32 %v2140, %v2178
    %v2180 = vpop.f32.mrf.mxu0
    %v2181 = vadd.f32 %v2140, %v2180
    %2182 = vdwg.mxu0
    %s2183 = scalar_lea.vmem %s3, 128
    %v2184 = vld [vmem:[%s2183] sm:$0xf]
    %v2185 = vld [vmem:[%s2183 + $0x4] sm:$0xf]
    %v2186 = vld [vmem:[%s2183 + $0x8] sm:$0xf]
    %v2187 = vld [vmem:[%s2183 + $0xc] sm:$0xf]
    %v2188 = vld [vmem:[%s2183 + $0x10] sm:$0xf]
    %v2189 = vld [vmem:[%s2183 + $0x14] sm:$0xf]
    %v2190 = vld [vmem:[%s2183 + $0x18] sm:$0xf]
    %v2191 = vld [vmem:[%s2183 + $0x1c] sm:$0xf]
    %s2192 = scalar_lea.vmem [#allocation8], 4
    %v2193 = vld [vmem:[%s2192] sm:$0x1]
    %v2195 = vperm.slane %v2193, 0
    %v2205 = vunpack.c.l.b16 %v2184
    %v2206 = vunpack.c.l.b16 %v2185
    %v2207 = vunpack.c.l.b16 %v2186
    %v2208 = vunpack.c.l.b16 %v2187
    %v2209 = vunpack.c.l.b16 %v2188
    %v2210 = vunpack.c.l.b16 %v2189
    %v2211 = vunpack.c.l.b16 %v2190
    %v2212 = vunpack.c.l.b16 %v2191
    %v2213 = vpack.c.b16 %v2206, %v2205
    %v2214 = vpack.c.b16 %v2208, %v2207
    %v2215 = vpack.c.b16 %v2210, %v2209
    %v2216 = vpack.c.b16 %v2212, %v2211
    %2221 = vmatpush.bf16.msra.mxu0 0
    %2222 = vmatpush.bf16.msra.mxu0 0
    %2223 = vmatpush.bf16.msra.mxu0 0
    %2224 = vmatpush.bf16.msra.mxu0 0
    %2225 = vmatpush.bf16.msra.mxu0 %v2216
    %2226 = vmatpush.bf16.msra.mxu0 %v2215
    %2227 = vmatpush.bf16.msra.mxu0 %v2214
    %2228 = vmatpush.bf16.msra.mxu0 %v2213
    %2229 = vmatmul.bf16.gmra.mxu0 %v2167
    %v2230 = vpop.f32.mrf.mxu0
    %v2231 = vadd.f32 %v2195, %v2230
    %v2232 = vpop.f32.mrf.mxu0
    %v2233 = vadd.f32 %v2195, %v2232
    %2234 = vdwg.mxu0
    %s2235 = scalar_lea.vmem %s3, 160
    %v2236 = vld [vmem:[%s2235] sm:$0xf]
    %v2237 = vld [vmem:[%s2235 + $0x4] sm:$0xf]
    %v2238 = vld [vmem:[%s2235 + $0x8] sm:$0xf]
    %v2239 = vld [vmem:[%s2235 + $0xc] sm:$0xf]
    %v2240 = vld [vmem:[%s2235 + $0x10] sm:$0xf]
    %v2241 = vld [vmem:[%s2235 + $0x14] sm:$0xf]
    %v2242 = vld [vmem:[%s2235 + $0x18] sm:$0xf]
    %v2243 = vld [vmem:[%s2235 + $0x1c] sm:$0xf]
    %s2244 = scalar_lea.vmem [#allocation8], 5
    %v2245 = vld [vmem:[%s2244] sm:$0x1]
    %v2247 = vperm.slane %v2245, 0
    %v2257 = vunpack.c.l.b16 %v2236
    %v2258 = vunpack.c.l.b16 %v2237
    %v2259 = vunpack.c.l.b16 %v2238
    %v2260 = vunpack.c.l.b16 %v2239
    %v2261 = vunpack.c.l.b16 %v2240
    %v2262 = vunpack.c.l.b16 %v2241
    %v2263 = vunpack.c.l.b16 %v2242
    %v2264 = vunpack.c.l.b16 %v2243
    %v2265 = vpack.c.b16 %v2258, %v2257
    %v2266 = vpack.c.b16 %v2260, %v2259
    %v2267 = vpack.c.b16 %v2262, %v2261
    %v2268 = vpack.c.b16 %v2264, %v2263
    %2273 = vmatpush.bf16.msra.mxu0 0
    %2274 = vmatpush.bf16.msra.mxu0 0
    %2275 = vmatpush.bf16.msra.mxu0 0
    %2276 = vmatpush.bf16.msra.mxu0 0
    %2277 = vmatpush.bf16.msra.mxu0 %v2268
    %2278 = vmatpush.bf16.msra.mxu0 %v2267
    %2279 = vmatpush.bf16.msra.mxu0 %v2266
    %2280 = vmatpush.bf16.msra.mxu0 %v2265
    %2281 = vmatmul.bf16.gmra.mxu0 %v2167
    %v2282 = vpop.f32.mrf.mxu0
    %v2283 = vadd.f32 %v2247, %v2282
    %v2284 = vpop.f32.mrf.mxu0
    %v2285 = vadd.f32 %v2247, %v2284
    %2286 = vdwg.mxu0
    %2289 = vrot.lane.b32.xlu0 %v2179, 120
    %v2290 = vpop.permute.xlu0 %2289
    %2291 = vrot.lane.b32.xlu0 %v2181, 120
    %v2292 = vpop.permute.xlu0 %2291
    %2295 = vrot.lane.b32.xlu0 %v2179, 112
    %v2296 = vpop.permute.xlu0 %2295
    %2297 = vrot.lane.b32.xlu0 %v2181, 112
    %v2298 = vpop.permute.xlu0 %2297
    %2301 = vrot.lane.b32.xlu0 %v2179, 104
    %v2302 = vpop.permute.xlu0 %2301
    %2303 = vrot.lane.b32.xlu0 %v2181, 104
    %v2304 = vpop.permute.xlu0 %2303
    %2307 = vrot.lane.b32.xlu0 %v2179, 96
    %v2308 = vpop.permute.xlu0 %2307
    %2309 = vrot.lane.b32.xlu0 %v2181, 96
    %v2310 = vpop.permute.xlu0 %2309
    %2313 = vrot.lane.b32.xlu0 %v2179, 88
    %v2314 = vpop.permute.xlu0 %2313
    %2315 = vrot.lane.b32.xlu0 %v2181, 88
    %v2316 = vpop.permute.xlu0 %2315
    %2319 = vrot.lane.b32.xlu0 %v2179, 80
    %v2320 = vpop.permute.xlu0 %2319
    %2321 = vrot.lane.b32.xlu0 %v2181, 80
    %v2322 = vpop.permute.xlu0 %2321
    %2325 = vrot.lane.b32.xlu0 %v2179, 72
    %v2326 = vpop.permute.xlu0 %2325
    %2327 = vrot.lane.b32.xlu0 %v2181, 72
    %v2328 = vpop.permute.xlu0 %2327
    %2333 = vrot.lane.b32.xlu0 %v2231, 120
    %v2334 = vpop.permute.xlu0 %2333
    %2335 = vrot.lane.b32.xlu0 %v2233, 120
    %v2336 = vpop.permute.xlu0 %2335
    %2339 = vrot.lane.b32.xlu0 %v2231, 112
    %v2340 = vpop.permute.xlu0 %2339
    %2341 = vrot.lane.b32.xlu0 %v2233, 112
    %v2342 = vpop.permute.xlu0 %2341
    %2345 = vrot.lane.b32.xlu0 %v2231, 104
    %v2346 = vpop.permute.xlu0 %2345
    %2347 = vrot.lane.b32.xlu0 %v2233, 104
    %v2348 = vpop.permute.xlu0 %2347
    %2351 = vrot.lane.b32.xlu0 %v2231, 96
    %v2352 = vpop.permute.xlu0 %2351
    %2353 = vrot.lane.b32.xlu0 %v2233, 96
    %v2354 = vpop.permute.xlu0 %2353
    %2357 = vrot.lane.b32.xlu0 %v2231, 88
    %v2358 = vpop.permute.xlu0 %2357
    %2359 = vrot.lane.b32.xlu0 %v2233, 88
    %v2360 = vpop.permute.xlu0 %2359
    %2363 = vrot.lane.b32.xlu0 %v2231, 80
    %v2364 = vpop.permute.xlu0 %2363
    %2365 = vrot.lane.b32.xlu0 %v2233, 80
    %v2366 = vpop.permute.xlu0 %2365
    %2369 = vrot.lane.b32.xlu0 %v2231, 72
    %v2370 = vpop.permute.xlu0 %2369
    %2371 = vrot.lane.b32.xlu0 %v2233, 72
    %v2372 = vpop.permute.xlu0 %2371
    %2377 = vrot.lane.b32.xlu0 %v2283, 120
    %v2378 = vpop.permute.xlu0 %2377
    %2379 = vrot.lane.b32.xlu0 %v2285, 120
    %v2380 = vpop.permute.xlu0 %2379
    %2383 = vrot.lane.b32.xlu0 %v2283, 112
    %v2384 = vpop.permute.xlu0 %2383
    %2385 = vrot.lane.b32.xlu0 %v2285, 112
    %v2386 = vpop.permute.xlu0 %2385
    %2389 = vrot.lane.b32.xlu0 %v2283, 104
    %v2390 = vpop.permute.xlu0 %2389
    %2391 = vrot.lane.b32.xlu0 %v2285, 104
    %v2392 = vpop.permute.xlu0 %2391
    %2395 = vrot.lane.b32.xlu0 %v2283, 96
    %v2396 = vpop.permute.xlu0 %2395
    %2397 = vrot.lane.b32.xlu0 %v2285, 96
    %v2398 = vpop.permute.xlu0 %2397
    %2401 = vrot.lane.b32.xlu0 %v2283, 88
    %v2402 = vpop.permute.xlu0 %2401
    %2403 = vrot.lane.b32.xlu0 %v2285, 88
    %v2404 = vpop.permute.xlu0 %2403
    %2407 = vrot.lane.b32.xlu0 %v2283, 80
    %v2408 = vpop.permute.xlu0 %2407
    %2409 = vrot.lane.b32.xlu0 %v2285, 80
    %v2410 = vpop.permute.xlu0 %2409
    %2413 = vrot.lane.b32.xlu0 %v2283, 72
    %v2414 = vpop.permute.xlu0 %2413
    %2415 = vrot.lane.b32.xlu0 %v2285, 72
    %v2416 = vpop.permute.xlu0 %2415
    %v2419 = vpack.c.bf16 %v2179, %v2179
    %v2420 = vpack.c.bf16 %v2181, %v2181
    %v2421 = vpack.c.bf16 %v2290, %v2290
    %v2422 = vpack.c.bf16 %v2292, %v2292
    %v2423 = vpack.c.bf16 %v2296, %v2296
    %v2424 = vpack.c.bf16 %v2298, %v2298
    %v2425 = vpack.c.bf16 %v2302, %v2302
    %v2426 = vpack.c.bf16 %v2304, %v2304
    %v2427 = vpack.c.bf16 %v2308, %v2308
    %v2428 = vpack.c.bf16 %v2310, %v2310
    %v2429 = vpack.c.bf16 %v2314, %v2314
    %v2430 = vpack.c.bf16 %v2316, %v2316
    %v2431 = vpack.c.bf16 %v2320, %v2320
    %v2432 = vpack.c.bf16 %v2322, %v2322
    %v2433 = vpack.c.bf16 %v2326, %v2326
    %v2434 = vpack.c.bf16 %v2328, %v2328
    %v2435 = vpack.c.bf16 %v2231, %v2231
    %v2436 = vpack.c.bf16 %v2233, %v2233
    %v2437 = vpack.c.bf16 %v2334, %v2334
    %v2438 = vpack.c.bf16 %v2336, %v2336
    %v2439 = vpack.c.bf16 %v2340, %v2340
    %v2440 = vpack.c.bf16 %v2342, %v2342
    %v2441 = vpack.c.bf16 %v2346, %v2346
    %v2442 = vpack.c.bf16 %v2348, %v2348
    %v2443 = vpack.c.bf16 %v2352, %v2352
    %v2444 = vpack.c.bf16 %v2354, %v2354
    %v2445 = vpack.c.bf16 %v2358, %v2358
    %v2446 = vpack.c.bf16 %v2360, %v2360
    %v2447 = vpack.c.bf16 %v2364, %v2364
    %v2448 = vpack.c.bf16 %v2366, %v2366
    %v2449 = vpack.c.bf16 %v2370, %v2370
    %v2450 = vpack.c.bf16 %v2372, %v2372
    %v2452 = vsel %vm583, %v2419, 0
    %v2455 = vsel %vm583, %v2435, 0
    %2457 = vmatpush.bf16.xpose.msra.mxu0 0
    %2458 = vmatpush.bf16.xpose.msra.mxu0 0
    %2459 = vmatpush.bf16.xpose.msra.mxu0 0
    %2460 = vmatpush.bf16.xpose.msra.mxu0 0
    %2461 = vmatpush.bf16.xpose.msra.mxu0 0
    %2462 = vmatpush.bf16.xpose.msra.mxu0 0
    %2463 = vmatpush.bf16.xpose.msra.mxu0 0
    %2464 = vmatpush.bf16.xpose.msra.mxu0 %v2455
    %2465 = vmatmul.bf16.gmra.mxu0 %v2452
    %v2466 = vpop.f32.mrf.mxu0
    %v2467 = vadd.f32 0.0, %v2466
    %v2468 = vpop.f32.mrf.mxu0
    %2469 = vdwg.mxu0
    %v2471 = vsel %vm583, %v2420, 0
    %v2474 = vsel %vm583, %v2436, 0
    %2476 = vmatpush.bf16.xpose.msra.mxu0 0
    %2477 = vmatpush.bf16.xpose.msra.mxu0 0
    %2478 = vmatpush.bf16.xpose.msra.mxu0 0
    %2479 = vmatpush.bf16.xpose.msra.mxu0 0
    %2480 = vmatpush.bf16.xpose.msra.mxu0 0
    %2481 = vmatpush.bf16.xpose.msra.mxu0 0
    %2482 = vmatpush.bf16.xpose.msra.mxu0 0
    %2483 = vmatpush.bf16.xpose.msra.mxu0 %v2474
    %2484 = vmatmul.bf16.gmra.mxu0 %v2471
    %v2485 = vpop.f32.mrf.mxu0
    %v2486 = vadd.f32 0.0, %v2485
    %v2487 = vpop.f32.mrf.mxu0
    %2488 = vdwg.mxu0
    %v2490 = vsel %vm583, %v2421, 0
    %v2493 = vsel %vm583, %v2437, 0
    %2495 = vmatpush.bf16.xpose.msra.mxu0 0
    %2496 = vmatpush.bf16.xpose.msra.mxu0 0
    %2497 = vmatpush.bf16.xpose.msra.mxu0 0
    %2498 = vmatpush.bf16.xpose.msra.mxu0 0
    %2499 = vmatpush.bf16.xpose.msra.mxu0 0
    %2500 = vmatpush.bf16.xpose.msra.mxu0 0
    %2501 = vmatpush.bf16.xpose.msra.mxu0 0
    %2502 = vmatpush.bf16.xpose.msra.mxu0 %v2493
    %2503 = vmatmul.bf16.gmra.mxu0 %v2490
    %v2504 = vpop.f32.mrf.mxu0
    %v2505 = vadd.f32 0.0, %v2504
    %v2506 = vpop.f32.mrf.mxu0
    %2507 = vdwg.mxu0
    %v2509 = vsel %vm583, %v2422, 0
    %v2512 = vsel %vm583, %v2438, 0
    %2514 = vmatpush.bf16.xpose.msra.mxu0 0
    %2515 = vmatpush.bf16.xpose.msra.mxu0 0
    %2516 = vmatpush.bf16.xpose.msra.mxu0 0
    %2517 = vmatpush.bf16.xpose.msra.mxu0 0
    %2518 = vmatpush.bf16.xpose.msra.mxu0 0
    %2519 = vmatpush.bf16.xpose.msra.mxu0 0
    %2520 = vmatpush.bf16.xpose.msra.mxu0 0
    %2521 = vmatpush.bf16.xpose.msra.mxu0 %v2512
    %2522 = vmatmul.bf16.gmra.mxu0 %v2509
    %v2523 = vpop.f32.mrf.mxu0
    %v2524 = vadd.f32 0.0, %v2523
    %v2525 = vpop.f32.mrf.mxu0
    %2526 = vdwg.mxu0
    %v2528 = vsel %vm583, %v2423, 0
    %v2531 = vsel %vm583, %v2439, 0
    %2533 = vmatpush.bf16.xpose.msra.mxu0 0
    %2534 = vmatpush.bf16.xpose.msra.mxu0 0
    %2535 = vmatpush.bf16.xpose.msra.mxu0 0
    %2536 = vmatpush.bf16.xpose.msra.mxu0 0
    %2537 = vmatpush.bf16.xpose.msra.mxu0 0
    %2538 = vmatpush.bf16.xpose.msra.mxu0 0
    %2539 = vmatpush.bf16.xpose.msra.mxu0 0
    %2540 = vmatpush.bf16.xpose.msra.mxu0 %v2531
    %2541 = vmatmul.bf16.gmra.mxu0 %v2528
    %v2542 = vpop.f32.mrf.mxu0
    %v2543 = vadd.f32 0.0, %v2542
    %v2544 = vpop.f32.mrf.mxu0
    %2545 = vdwg.mxu0
    %v2547 = vsel %vm583, %v2424, 0
    %v2550 = vsel %vm583, %v2440, 0
    %2552 = vmatpush.bf16.xpose.msra.mxu0 0
    %2553 = vmatpush.bf16.xpose.msra.mxu0 0
    %2554 = vmatpush.bf16.xpose.msra.mxu0 0
    %2555 = vmatpush.bf16.xpose.msra.mxu0 0
    %2556 = vmatpush.bf16.xpose.msra.mxu0 0
    %2557 = vmatpush.bf16.xpose.msra.mxu0 0
    %2558 = vmatpush.bf16.xpose.msra.mxu0 0
    %2559 = vmatpush.bf16.xpose.msra.mxu0 %v2550
    %2560 = vmatmul.bf16.gmra.mxu0 %v2547
    %v2561 = vpop.f32.mrf.mxu0
    %v2562 = vadd.f32 0.0, %v2561
    %v2563 = vpop.f32.mrf.mxu0
    %2564 = vdwg.mxu0
    %v2566 = vsel %vm583, %v2425, 0
    %v2569 = vsel %vm583, %v2441, 0
    %2571 = vmatpush.bf16.xpose.msra.mxu0 0
    %2572 = vmatpush.bf16.xpose.msra.mxu0 0
    %2573 = vmatpush.bf16.xpose.msra.mxu0 0
    %2574 = vmatpush.bf16.xpose.msra.mxu0 0
    %2575 = vmatpush.bf16.xpose.msra.mxu0 0
    %2576 = vmatpush.bf16.xpose.msra.mxu0 0
    %2577 = vmatpush.bf16.xpose.msra.mxu0 0
    %2578 = vmatpush.bf16.xpose.msra.mxu0 %v2569
    %2579 = vmatmul.bf16.gmra.mxu0 %v2566
    %v2580 = vpop.f32.mrf.mxu0
    %v2581 = vadd.f32 0.0, %v2580
    %v2582 = vpop.f32.mrf.mxu0
    %2583 = vdwg.mxu0
    %v2585 = vsel %vm583, %v2426, 0
    %v2588 = vsel %vm583, %v2442, 0
    %2590 = vmatpush.bf16.xpose.msra.mxu0 0
    %2591 = vmatpush.bf16.xpose.msra.mxu0 0
    %2592 = vmatpush.bf16.xpose.msra.mxu0 0
    %2593 = vmatpush.bf16.xpose.msra.mxu0 0
    %2594 = vmatpush.bf16.xpose.msra.mxu0 0
    %2595 = vmatpush.bf16.xpose.msra.mxu0 0
    %2596 = vmatpush.bf16.xpose.msra.mxu0 0
    %2597 = vmatpush.bf16.xpose.msra.mxu0 %v2588
    %2598 = vmatmul.bf16.gmra.mxu0 %v2585
    %v2599 = vpop.f32.mrf.mxu0
    %v2600 = vadd.f32 0.0, %v2599
    %v2601 = vpop.f32.mrf.mxu0
    %2602 = vdwg.mxu0
    %v2604 = vsel %vm583, %v2427, 0
    %v2607 = vsel %vm583, %v2443, 0
    %2609 = vmatpush.bf16.xpose.msra.mxu0 0
    %2610 = vmatpush.bf16.xpose.msra.mxu0 0
    %2611 = vmatpush.bf16.xpose.msra.mxu0 0
    %2612 = vmatpush.bf16.xpose.msra.mxu0 0
    %2613 = vmatpush.bf16.xpose.msra.mxu0 0
    %2614 = vmatpush.bf16.xpose.msra.mxu0 0
    %2615 = vmatpush.bf16.xpose.msra.mxu0 0
    %2616 = vmatpush.bf16.xpose.msra.mxu0 %v2607
    %2617 = vmatmul.bf16.gmra.mxu0 %v2604
    %v2618 = vpop.f32.mrf.mxu0
    %v2619 = vadd.f32 0.0, %v2618
    %v2620 = vpop.f32.mrf.mxu0
    %2621 = vdwg.mxu0
    %v2623 = vsel %vm583, %v2428, 0
    %v2626 = vsel %vm583, %v2444, 0
    %2628 = vmatpush.bf16.xpose.msra.mxu0 0
    %2629 = vmatpush.bf16.xpose.msra.mxu0 0
    %2630 = vmatpush.bf16.xpose.msra.mxu0 0
    %2631 = vmatpush.bf16.xpose.msra.mxu0 0
    %2632 = vmatpush.bf16.xpose.msra.mxu0 0
    %2633 = vmatpush.bf16.xpose.msra.mxu0 0
    %2634 = vmatpush.bf16.xpose.msra.mxu0 0
    %2635 = vmatpush.bf16.xpose.msra.mxu0 %v2626
    %2636 = vmatmul.bf16.gmra.mxu0 %v2623
    %v2637 = vpop.f32.mrf.mxu0
    %v2638 = vadd.f32 0.0, %v2637
    %v2639 = vpop.f32.mrf.mxu0
    %2640 = vdwg.mxu0
    %v2642 = vsel %vm583, %v2429, 0
    %v2645 = vsel %vm583, %v2445, 0
    %2647 = vmatpush.bf16.xpose.msra.mxu0 0
    %2648 = vmatpush.bf16.xpose.msra.mxu0 0
    %2649 = vmatpush.bf16.xpose.msra.mxu0 0
    %2650 = vmatpush.bf16.xpose.msra.mxu0 0
    %2651 = vmatpush.bf16.xpose.msra.mxu0 0
    %2652 = vmatpush.bf16.xpose.msra.mxu0 0
    %2653 = vmatpush.bf16.xpose.msra.mxu0 0
    %2654 = vmatpush.bf16.xpose.msra.mxu0 %v2645
    %2655 = vmatmul.bf16.gmra.mxu0 %v2642
    %v2656 = vpop.f32.mrf.mxu0
    %v2657 = vadd.f32 0.0, %v2656
    %v2658 = vpop.f32.mrf.mxu0
    %2659 = vdwg.mxu0
    %v2661 = vsel %vm583, %v2430, 0
    %v2664 = vsel %vm583, %v2446, 0
    %2666 = vmatpush.bf16.xpose.msra.mxu0 0
    %2667 = vmatpush.bf16.xpose.msra.mxu0 0
    %2668 = vmatpush.bf16.xpose.msra.mxu0 0
    %2669 = vmatpush.bf16.xpose.msra.mxu0 0
    %2670 = vmatpush.bf16.xpose.msra.mxu0 0
    %2671 = vmatpush.bf16.xpose.msra.mxu0 0
    %2672 = vmatpush.bf16.xpose.msra.mxu0 0
    %2673 = vmatpush.bf16.xpose.msra.mxu0 %v2664
    %2674 = vmatmul.bf16.gmra.mxu0 %v2661
    %v2675 = vpop.f32.mrf.mxu0
    %v2676 = vadd.f32 0.0, %v2675
    %v2677 = vpop.f32.mrf.mxu0
    %2678 = vdwg.mxu0
    %v2680 = vsel %vm583, %v2431, 0
    %v2683 = vsel %vm583, %v2447, 0
    %2685 = vmatpush.bf16.xpose.msra.mxu0 0
    %2686 = vmatpush.bf16.xpose.msra.mxu0 0
    %2687 = vmatpush.bf16.xpose.msra.mxu0 0
    %2688 = vmatpush.bf16.xpose.msra.mxu0 0
    %2689 = vmatpush.bf16.xpose.msra.mxu0 0
    %2690 = vmatpush.bf16.xpose.msra.mxu0 0
    %2691 = vmatpush.bf16.xpose.msra.mxu0 0
    %2692 = vmatpush.bf16.xpose.msra.mxu0 %v2683
    %2693 = vmatmul.bf16.gmra.mxu0 %v2680
    %v2694 = vpop.f32.mrf.mxu0
    %v2695 = vadd.f32 0.0, %v2694
    %v2696 = vpop.f32.mrf.mxu0
    %2697 = vdwg.mxu0
    %v2699 = vsel %vm583, %v2432, 0
    %v2702 = vsel %vm583, %v2448, 0
    %2704 = vmatpush.bf16.xpose.msra.mxu0 0
    %2705 = vmatpush.bf16.xpose.msra.mxu0 0
    %2706 = vmatpush.bf16.xpose.msra.mxu0 0
    %2707 = vmatpush.bf16.xpose.msra.mxu0 0
    %2708 = vmatpush.bf16.xpose.msra.mxu0 0
    %2709 = vmatpush.bf16.xpose.msra.mxu0 0
    %2710 = vmatpush.bf16.xpose.msra.mxu0 0
    %2711 = vmatpush.bf16.xpose.msra.mxu0 %v2702
    %2712 = vmatmul.bf16.gmra.mxu0 %v2699
    %v2713 = vpop.f32.mrf.mxu0
    %v2714 = vadd.f32 0.0, %v2713
    %v2715 = vpop.f32.mrf.mxu0
    %2716 = vdwg.mxu0
    %v2718 = vsel %vm583, %v2433, 0
    %v2721 = vsel %vm583, %v2449, 0
    %2723 = vmatpush.bf16.xpose.msra.mxu0 0
    %2724 = vmatpush.bf16.xpose.msra.mxu0 0
    %2725 = vmatpush.bf16.xpose.msra.mxu0 0
    %2726 = vmatpush.bf16.xpose.msra.mxu0 0
    %2727 = vmatpush.bf16.xpose.msra.mxu0 0
    %2728 = vmatpush.bf16.xpose.msra.mxu0 0
    %2729 = vmatpush.bf16.xpose.msra.mxu0 0
    %2730 = vmatpush.bf16.xpose.msra.mxu0 %v2721
    %2731 = vmatmul.bf16.gmra.mxu0 %v2718
    %v2732 = vpop.f32.mrf.mxu0
    %v2733 = vadd.f32 0.0, %v2732
    %v2734 = vpop.f32.mrf.mxu0
    %2735 = vdwg.mxu0
    %v2737 = vsel %vm583, %v2434, 0
    %v2740 = vsel %vm583, %v2450, 0
    %2742 = vmatpush.bf16.xpose.msra.mxu0 0
    %2743 = vmatpush.bf16.xpose.msra.mxu0 0
    %2744 = vmatpush.bf16.xpose.msra.mxu0 0
    %2745 = vmatpush.bf16.xpose.msra.mxu0 0
    %2746 = vmatpush.bf16.xpose.msra.mxu0 0
    %2747 = vmatpush.bf16.xpose.msra.mxu0 0
    %2748 = vmatpush.bf16.xpose.msra.mxu0 0
    %2749 = vmatpush.bf16.xpose.msra.mxu0 %v2740
    %2750 = vmatmul.bf16.gmra.mxu0 %v2737
    %v2751 = vpop.f32.mrf.mxu0
    %v2752 = vadd.f32 0.0, %v2751
    %v2753 = vpop.f32.mrf.mxu0
    %2754 = vdwg.mxu0
    %v2755 = vsel %vm583, %v2467, -inf
    %2756 = vmax.xlane.f32.xlu0 %v2755
    %v2757 = vpop.xlane.xlu0 %2756
    %v2758 = vsel %vm583, %v2486, -inf
    %2759 = vmax.xlane.f32.xlu0 %v2758
    %v2760 = vpop.xlane.xlu0 %2759
    %v2761 = vsel %vm583, %v2505, -inf
    %2762 = vmax.xlane.f32.xlu0 %v2761
    %v2763 = vpop.xlane.xlu0 %2762
    %v2764 = vsel %vm583, %v2524, -inf
    %2765 = vmax.xlane.f32.xlu0 %v2764
    %v2766 = vpop.xlane.xlu0 %2765
    %v2767 = vsel %vm583, %v2543, -inf
    %2768 = vmax.xlane.f32.xlu0 %v2767
    %v2769 = vpop.xlane.xlu0 %2768
    %v2770 = vsel %vm583, %v2562, -inf
    %2771 = vmax.xlane.f32.xlu0 %v2770
    %v2772 = vpop.xlane.xlu0 %2771
    %v2773 = vsel %vm583, %v2581, -inf
    %2774 = vmax.xlane.f32.xlu0 %v2773
    %v2775 = vpop.xlane.xlu0 %2774
    %v2776 = vsel %vm583, %v2600, -inf
    %2777 = vmax.xlane.f32.xlu0 %v2776
    %v2778 = vpop.xlane.xlu0 %2777
    %v2779 = vsel %vm583, %v2619, -inf
    %2780 = vmax.xlane.f32.xlu0 %v2779
    %v2781 = vpop.xlane.xlu0 %2780
    %v2782 = vsel %vm583, %v2638, -inf
    %2783 = vmax.xlane.f32.xlu0 %v2782
    %v2784 = vpop.xlane.xlu0 %2783
    %v2785 = vsel %vm583, %v2657, -inf
    %2786 = vmax.xlane.f32.xlu0 %v2785
    %v2787 = vpop.xlane.xlu0 %2786
    %v2788 = vsel %vm583, %v2676, -inf
    %2789 = vmax.xlane.f32.xlu0 %v2788
    %v2790 = vpop.xlane.xlu0 %2789
    %v2791 = vsel %vm583, %v2695, -inf
    %2792 = vmax.xlane.f32.xlu0 %v2791
    %v2793 = vpop.xlane.xlu0 %2792
    %v2794 = vsel %vm583, %v2714, -inf
    %2795 = vmax.xlane.f32.xlu0 %v2794
    %v2796 = vpop.xlane.xlu0 %2795
    %v2797 = vsel %vm583, %v2733, -inf
    %2798 = vmax.xlane.f32.xlu0 %v2797
    %v2799 = vpop.xlane.xlu0 %2798
    %v2800 = vsel %vm583, %v2752, -inf
    %2801 = vmax.xlane.f32.xlu0 %v2800
    %v2802 = vpop.xlane.xlu0 %2801
    %v2803 = vsub.f32 %v2467, %v2757
    %v2804 = vsub.f32 %v2486, %v2760
    %v2805 = vsub.f32 %v2505, %v2763
    %v2806 = vsub.f32 %v2524, %v2766
    %v2807 = vsub.f32 %v2543, %v2769
    %v2808 = vsub.f32 %v2562, %v2772
    %v2809 = vsub.f32 %v2581, %v2775
    %v2810 = vsub.f32 %v2600, %v2778
    %v2811 = vsub.f32 %v2619, %v2781
    %v2812 = vsub.f32 %v2638, %v2784
    %v2813 = vsub.f32 %v2657, %v2787
    %v2814 = vsub.f32 %v2676, %v2790
    %v2815 = vsub.f32 %v2695, %v2793
    %v2816 = vsub.f32 %v2714, %v2796
    %v2817 = vsub.f32 %v2733, %v2799
    %v2818 = vsub.f32 %v2752, %v2802
    %v2819 = vmul.f32 %v2803, 1.442695
    %v2820 = vpow.pop %v2819
    %v2821 = vmul.f32 %v2804, 1.442695
    %v2822 = vpow.pop %v2821
    %v2823 = vmul.f32 %v2805, 1.442695
    %v2824 = vpow.pop %v2823
    %v2825 = vmul.f32 %v2806, 1.442695
    %v2826 = vpow.pop %v2825
    %v2827 = vmul.f32 %v2807, 1.442695
    %v2828 = vpow.pop %v2827
    %v2829 = vmul.f32 %v2808, 1.442695
    %v2830 = vpow.pop %v2829
    %v2831 = vmul.f32 %v2809, 1.442695
    %v2832 = vpow.pop %v2831
    %v2833 = vmul.f32 %v2810, 1.442695
    %v2834 = vpow.pop %v2833
    %v2835 = vmul.f32 %v2811, 1.442695
    %v2836 = vpow.pop %v2835
    %v2837 = vmul.f32 %v2812, 1.442695
    %v2838 = vpow.pop %v2837
    %v2839 = vmul.f32 %v2813, 1.442695
    %v2840 = vpow.pop %v2839
    %v2841 = vmul.f32 %v2814, 1.442695
    %v2842 = vpow.pop %v2841
    %v2843 = vmul.f32 %v2815, 1.442695
    %v2844 = vpow.pop %v2843
    %v2845 = vmul.f32 %v2816, 1.442695
    %v2846 = vpow.pop %v2845
    %v2847 = vmul.f32 %v2817, 1.442695
    %v2848 = vpow.pop %v2847
    %v2849 = vmul.f32 %v2818, 1.442695
    %v2850 = vpow.pop %v2849
    %v2851 = vsel %vm583, %v2820, 0.0
    %2852 = vadd.xlane.f32.xlu0 %v2851
    %v2853 = vpop.xlane.xlu0 %2852
    %v2854 = vsel %vm583, %v2822, 0.0
    %2855 = vadd.xlane.f32.xlu0 %v2854
    %v2856 = vpop.xlane.xlu0 %2855
    %v2857 = vsel %vm583, %v2824, 0.0
    %2858 = vadd.xlane.f32.xlu0 %v2857
    %v2859 = vpop.xlane.xlu0 %2858
    %v2860 = vsel %vm583, %v2826, 0.0
    %2861 = vadd.xlane.f32.xlu0 %v2860
    %v2862 = vpop.xlane.xlu0 %2861
    %v2863 = vsel %vm583, %v2828, 0.0
    %2864 = vadd.xlane.f32.xlu0 %v2863
    %v2865 = vpop.xlane.xlu0 %2864
    %v2866 = vsel %vm583, %v2830, 0.0
    %2867 = vadd.xlane.f32.xlu0 %v2866
    %v2868 = vpop.xlane.xlu0 %2867
    %v2869 = vsel %vm583, %v2832, 0.0
    %2870 = vadd.xlane.f32.xlu0 %v2869
    %v2871 = vpop.xlane.xlu0 %2870
    %v2872 = vsel %vm583, %v2834, 0.0
    %2873 = vadd.xlane.f32.xlu0 %v2872
    %v2874 = vpop.xlane.xlu0 %2873
    %v2875 = vsel %vm583, %v2836, 0.0
    %2876 = vadd.xlane.f32.xlu0 %v2875
    %v2877 = vpop.xlane.xlu0 %2876
    %v2878 = vsel %vm583, %v2838, 0.0
    %2879 = vadd.xlane.f32.xlu0 %v2878
    %v2880 = vpop.xlane.xlu0 %2879
    %v2881 = vsel %vm583, %v2840, 0.0
    %2882 = vadd.xlane.f32.xlu0 %v2881
    %v2883 = vpop.xlane.xlu0 %2882
    %v2884 = vsel %vm583, %v2842, 0.0
    %2885 = vadd.xlane.f32.xlu0 %v2884
    %v2886 = vpop.xlane.xlu0 %2885
    %v2887 = vsel %vm583, %v2844, 0.0
    %2888 = vadd.xlane.f32.xlu0 %v2887
    %v2889 = vpop.xlane.xlu0 %2888
    %v2890 = vsel %vm583, %v2846, 0.0
    %2891 = vadd.xlane.f32.xlu0 %v2890
    %v2892 = vpop.xlane.xlu0 %2891
    %v2893 = vsel %vm583, %v2848, 0.0
    %2894 = vadd.xlane.f32.xlu0 %v2893
    %v2895 = vpop.xlane.xlu0 %2894
    %v2896 = vsel %vm583, %v2850, 0.0
    %2897 = vadd.xlane.f32.xlu0 %v2896
    %v2898 = vpop.xlane.xlu0 %2897
    %v2899 = vrcp.pop %v2853
    %v2900 = vrcp.pop %v2856
    %v2901 = vrcp.pop %v2859
    %v2902 = vrcp.pop %v2862
    %v2903 = vrcp.pop %v2865
    %v2904 = vrcp.pop %v2868
    %v2905 = vrcp.pop %v2871
    %v2906 = vrcp.pop %v2874
    %v2907 = vrcp.pop %v2877
    %v2908 = vrcp.pop %v2880
    %v2909 = vrcp.pop %v2883
    %v2910 = vrcp.pop %v2886
    %v2911 = vrcp.pop %v2889
    %v2912 = vrcp.pop %v2892
    %v2913 = vrcp.pop %v2895
    %v2914 = vrcp.pop %v2898
    %v2915 = vmul.f32 %v2853, %v2899
    %v2916 = vmul.f32 %v2856, %v2900
    %v2917 = vmul.f32 %v2859, %v2901
    %v2918 = vmul.f32 %v2862, %v2902
    %v2919 = vmul.f32 %v2865, %v2903
    %v2920 = vmul.f32 %v2868, %v2904
    %v2921 = vmul.f32 %v2871, %v2905
    %v2922 = vmul.f32 %v2874, %v2906
    %v2923 = vmul.f32 %v2877, %v2907
    %v2924 = vmul.f32 %v2880, %v2908
    %v2925 = vmul.f32 %v2883, %v2909
    %v2926 = vmul.f32 %v2886, %v2910
    %v2927 = vmul.f32 %v2889, %v2911
    %v2928 = vmul.f32 %v2892, %v2912
    %v2929 = vmul.f32 %v2895, %v2913
    %v2930 = vmul.f32 %v2898, %v2914
    %v2931 = vsub.f32 2.0, %v2915
    %v2932 = vsub.f32 2.0, %v2916
    %v2933 = vsub.f32 2.0, %v2917
    %v2934 = vsub.f32 2.0, %v2918
    %v2935 = vsub.f32 2.0, %v2919
    %v2936 = vsub.f32 2.0, %v2920
    %v2937 = vsub.f32 2.0, %v2921
    %v2938 = vsub.f32 2.0, %v2922
    %v2939 = vsub.f32 2.0, %v2923
    %v2940 = vsub.f32 2.0, %v2924
    %v2941 = vsub.f32 2.0, %v2925
    %v2942 = vsub.f32 2.0, %v2926
    %v2943 = vsub.f32 2.0, %v2927
    %v2944 = vsub.f32 2.0, %v2928
    %v2945 = vsub.f32 2.0, %v2929
    %v2946 = vsub.f32 2.0, %v2930
    %v2947 = vmul.f32 %v2899, %v2931
    %v2948 = vmul.f32 %v2900, %v2932
    %v2949 = vmul.f32 %v2901, %v2933
    %v2950 = vmul.f32 %v2902, %v2934
    %v2951 = vmul.f32 %v2903, %v2935
    %v2952 = vmul.f32 %v2904, %v2936
    %v2953 = vmul.f32 %v2905, %v2937
    %v2954 = vmul.f32 %v2906, %v2938
    %v2955 = vmul.f32 %v2907, %v2939
    %v2956 = vmul.f32 %v2908, %v2940
    %v2957 = vmul.f32 %v2909, %v2941
    %v2958 = vmul.f32 %v2910, %v2942
    %v2959 = vmul.f32 %v2911, %v2943
    %v2960 = vmul.f32 %v2912, %v2944
    %v2961 = vmul.f32 %v2913, %v2945
    %v2962 = vmul.f32 %v2914, %v2946
    %v2963 = vmul.f32 %v2820, %v2947
    %v2964 = vmul.f32 %v2822, %v2948
    %v2965 = vmul.f32 %v2824, %v2949
    %v2966 = vmul.f32 %v2826, %v2950
    %v2967 = vmul.f32 %v2828, %v2951
    %v2968 = vmul.f32 %v2830, %v2952
    %v2969 = vmul.f32 %v2832, %v2953
    %v2970 = vmul.f32 %v2834, %v2954
    %v2971 = vmul.f32 %v2836, %v2955
    %v2972 = vmul.f32 %v2838, %v2956
    %v2973 = vmul.f32 %v2840, %v2957
    %v2974 = vmul.f32 %v2842, %v2958
    %v2975 = vmul.f32 %v2844, %v2959
    %v2976 = vmul.f32 %v2846, %v2960
    %v2977 = vmul.f32 %v2848, %v2961
    %v2978 = vmul.f32 %v2850, %v2962
    %v2979 = vpack.c.bf16 %v2963, %v2963
    %v2980 = vpack.c.bf16 %v2964, %v2964
    %v2981 = vpack.c.bf16 %v2965, %v2965
    %v2982 = vpack.c.bf16 %v2966, %v2966
    %v2983 = vpack.c.bf16 %v2967, %v2967
    %v2984 = vpack.c.bf16 %v2968, %v2968
    %v2985 = vpack.c.bf16 %v2969, %v2969
    %v2986 = vpack.c.bf16 %v2970, %v2970
    %v2987 = vpack.c.bf16 %v2971, %v2971
    %v2988 = vpack.c.bf16 %v2972, %v2972
    %v2989 = vpack.c.bf16 %v2973, %v2973
    %v2990 = vpack.c.bf16 %v2974, %v2974
    %v2991 = vpack.c.bf16 %v2975, %v2975
    %v2992 = vpack.c.bf16 %v2976, %v2976
    %v2993 = vpack.c.bf16 %v2977, %v2977
    %v2994 = vpack.c.bf16 %v2978, %v2978
    %v2995 = vpack.c.bf16 %v2283, %v2283
    %v2996 = vpack.c.bf16 %v2285, %v2285
    %v2997 = vpack.c.bf16 %v2378, %v2378
    %v2998 = vpack.c.bf16 %v2380, %v2380
    %v2999 = vpack.c.bf16 %v2384, %v2384
    %v3000 = vpack.c.bf16 %v2386, %v2386
    %v3001 = vpack.c.bf16 %v2390, %v2390
    %v3002 = vpack.c.bf16 %v2392, %v2392
    %v3003 = vpack.c.bf16 %v2396, %v2396
    %v3004 = vpack.c.bf16 %v2398, %v2398
    %v3005 = vpack.c.bf16 %v2402, %v2402
    %v3006 = vpack.c.bf16 %v2404, %v2404
    %v3007 = vpack.c.bf16 %v2408, %v2408
    %v3008 = vpack.c.bf16 %v2410, %v2410
    %v3009 = vpack.c.bf16 %v2414, %v2414
    %v3010 = vpack.c.bf16 %v2416, %v2416
    %v3012 = vsel %vm583, %v2979, 0
    %v3015 = vsel %vm1147, %v2995, 0
    %3017 = vmatpush.bf16.msra.mxu0 0
    %3018 = vmatpush.bf16.msra.mxu0 0
    %3019 = vmatpush.bf16.msra.mxu0 0
    %3020 = vmatpush.bf16.msra.mxu0 0
    %3021 = vmatpush.bf16.msra.mxu0 0
    %3022 = vmatpush.bf16.msra.mxu0 0
    %3023 = vmatpush.bf16.msra.mxu0 0
    %3024 = vmatpush.bf16.msra.mxu0 %v3015
    %3025 = vmatmul.bf16.gmra.mxu0 %v3012
    %v3026 = vpop.f32.mrf.mxu0
    %v3027 = vadd.f32 0.0, %v3026
    %v3028 = vpop.f32.mrf.mxu0
    %3029 = vdwg.mxu0
    %v3031 = vsel %vm583, %v2980, 0
    %v3034 = vsel %vm1147, %v2996, 0
    %3036 = vmatpush.bf16.msra.mxu0 0
    %3037 = vmatpush.bf16.msra.mxu0 0
    %3038 = vmatpush.bf16.msra.mxu0 0
    %3039 = vmatpush.bf16.msra.mxu0 0
    %3040 = vmatpush.bf16.msra.mxu0 0
    %3041 = vmatpush.bf16.msra.mxu0 0
    %3042 = vmatpush.bf16.msra.mxu0 0
    %3043 = vmatpush.bf16.msra.mxu0 %v3034
    %3044 = vmatmul.bf16.gmra.mxu0 %v3031
    %v3045 = vpop.f32.mrf.mxu0
    %v3046 = vadd.f32 0.0, %v3045
    %v3047 = vpop.f32.mrf.mxu0
    %3048 = vdwg.mxu0
    %v3050 = vsel %vm583, %v2981, 0
    %v3053 = vsel %vm1147, %v2997, 0
    %3055 = vmatpush.bf16.msra.mxu0 0
    %3056 = vmatpush.bf16.msra.mxu0 0
    %3057 = vmatpush.bf16.msra.mxu0 0
    %3058 = vmatpush.bf16.msra.mxu0 0
    %3059 = vmatpush.bf16.msra.mxu0 0
    %3060 = vmatpush.bf16.msra.mxu0 0
    %3061 = vmatpush.bf16.msra.mxu0 0
    %3062 = vmatpush.bf16.msra.mxu0 %v3053
    %3063 = vmatmul.bf16.gmra.mxu0 %v3050
    %v3064 = vpop.f32.mrf.mxu0
    %v3065 = vadd.f32 0.0, %v3064
    %v3066 = vpop.f32.mrf.mxu0
    %3067 = vdwg.mxu0
    %v3069 = vsel %vm583, %v2982, 0
    %v3072 = vsel %vm1147, %v2998, 0
    %3074 = vmatpush.bf16.msra.mxu0 0
    %3075 = vmatpush.bf16.msra.mxu0 0
    %3076 = vmatpush.bf16.msra.mxu0 0
    %3077 = vmatpush.bf16.msra.mxu0 0
    %3078 = vmatpush.bf16.msra.mxu0 0
    %3079 = vmatpush.bf16.msra.mxu0 0
    %3080 = vmatpush.bf16.msra.mxu0 0
    %3081 = vmatpush.bf16.msra.mxu0 %v3072
    %3082 = vmatmul.bf16.gmra.mxu0 %v3069
    %v3083 = vpop.f32.mrf.mxu0
    %v3084 = vadd.f32 0.0, %v3083
    %v3085 = vpop.f32.mrf.mxu0
    %3086 = vdwg.mxu0
    %v3088 = vsel %vm583, %v2983, 0
    %v3091 = vsel %vm1147, %v2999, 0
    %3093 = vmatpush.bf16.msra.mxu0 0
    %3094 = vmatpush.bf16.msra.mxu0 0
    %3095 = vmatpush.bf16.msra.mxu0 0
    %3096 = vmatpush.bf16.msra.mxu0 0
    %3097 = vmatpush.bf16.msra.mxu0 0
    %3098 = vmatpush.bf16.msra.mxu0 0
    %3099 = vmatpush.bf16.msra.mxu0 0
    %3100 = vmatpush.bf16.msra.mxu0 %v3091
    %3101 = vmatmul.bf16.gmra.mxu0 %v3088
    %v3102 = vpop.f32.mrf.mxu0
    %v3103 = vadd.f32 0.0, %v3102
    %v3104 = vpop.f32.mrf.mxu0
    %3105 = vdwg.mxu0
    %v3107 = vsel %vm583, %v2984, 0
    %v3110 = vsel %vm1147, %v3000, 0
    %3112 = vmatpush.bf16.msra.mxu0 0
    %3113 = vmatpush.bf16.msra.mxu0 0
    %3114 = vmatpush.bf16.msra.mxu0 0
    %3115 = vmatpush.bf16.msra.mxu0 0
    %3116 = vmatpush.bf16.msra.mxu0 0
    %3117 = vmatpush.bf16.msra.mxu0 0
    %3118 = vmatpush.bf16.msra.mxu0 0
    %3119 = vmatpush.bf16.msra.mxu0 %v3110
    %3120 = vmatmul.bf16.gmra.mxu0 %v3107
    %v3121 = vpop.f32.mrf.mxu0
    %v3122 = vadd.f32 0.0, %v3121
    %v3123 = vpop.f32.mrf.mxu0
    %3124 = vdwg.mxu0
    %v3126 = vsel %vm583, %v2985, 0
    %v3129 = vsel %vm1147, %v3001, 0
    %3131 = vmatpush.bf16.msra.mxu0 0
    %3132 = vmatpush.bf16.msra.mxu0 0
    %3133 = vmatpush.bf16.msra.mxu0 0
    %3134 = vmatpush.bf16.msra.mxu0 0
    %3135 = vmatpush.bf16.msra.mxu0 0
    %3136 = vmatpush.bf16.msra.mxu0 0
    %3137 = vmatpush.bf16.msra.mxu0 0
    %3138 = vmatpush.bf16.msra.mxu0 %v3129
    %3139 = vmatmul.bf16.gmra.mxu0 %v3126
    %v3140 = vpop.f32.mrf.mxu0
    %v3141 = vadd.f32 0.0, %v3140
    %v3142 = vpop.f32.mrf.mxu0
    %3143 = vdwg.mxu0
    %v3145 = vsel %vm583, %v2986, 0
    %v3148 = vsel %vm1147, %v3002, 0
    %3150 = vmatpush.bf16.msra.mxu0 0
    %3151 = vmatpush.bf16.msra.mxu0 0
    %3152 = vmatpush.bf16.msra.mxu0 0
    %3153 = vmatpush.bf16.msra.mxu0 0
    %3154 = vmatpush.bf16.msra.mxu0 0
    %3155 = vmatpush.bf16.msra.mxu0 0
    %3156 = vmatpush.bf16.msra.mxu0 0
    %3157 = vmatpush.bf16.msra.mxu0 %v3148
    %3158 = vmatmul.bf16.gmra.mxu0 %v3145
    %v3159 = vpop.f32.mrf.mxu0
    %v3160 = vadd.f32 0.0, %v3159
    %v3161 = vpop.f32.mrf.mxu0
    %3162 = vdwg.mxu0
    %v3164 = vsel %vm583, %v2987, 0
    %v3167 = vsel %vm1147, %v3003, 0
    %3169 = vmatpush.bf16.msra.mxu0 0
    %3170 = vmatpush.bf16.msra.mxu0 0
    %3171 = vmatpush.bf16.msra.mxu0 0
    %3172 = vmatpush.bf16.msra.mxu0 0
    %3173 = vmatpush.bf16.msra.mxu0 0
    %3174 = vmatpush.bf16.msra.mxu0 0
    %3175 = vmatpush.bf16.msra.mxu0 0
    %3176 = vmatpush.bf16.msra.mxu0 %v3167
    %3177 = vmatmul.bf16.gmra.mxu0 %v3164
    %v3178 = vpop.f32.mrf.mxu0
    %v3179 = vadd.f32 0.0, %v3178
    %v3180 = vpop.f32.mrf.mxu0
    %3181 = vdwg.mxu0
    %v3183 = vsel %vm583, %v2988, 0
    %v3186 = vsel %vm1147, %v3004, 0
    %3188 = vmatpush.bf16.msra.mxu0 0
    %3189 = vmatpush.bf16.msra.mxu0 0
    %3190 = vmatpush.bf16.msra.mxu0 0
    %3191 = vmatpush.bf16.msra.mxu0 0
    %3192 = vmatpush.bf16.msra.mxu0 0
    %3193 = vmatpush.bf16.msra.mxu0 0
    %3194 = vmatpush.bf16.msra.mxu0 0
    %3195 = vmatpush.bf16.msra.mxu0 %v3186
    %3196 = vmatmul.bf16.gmra.mxu0 %v3183
    %v3197 = vpop.f32.mrf.mxu0
    %v3198 = vadd.f32 0.0, %v3197
    %v3199 = vpop.f32.mrf.mxu0
    %3200 = vdwg.mxu0
    %v3202 = vsel %vm583, %v2989, 0
    %v3205 = vsel %vm1147, %v3005, 0
    %3207 = vmatpush.bf16.msra.mxu0 0
    %3208 = vmatpush.bf16.msra.mxu0 0
    %3209 = vmatpush.bf16.msra.mxu0 0
    %3210 = vmatpush.bf16.msra.mxu0 0
    %3211 = vmatpush.bf16.msra.mxu0 0
    %3212 = vmatpush.bf16.msra.mxu0 0
    %3213 = vmatpush.bf16.msra.mxu0 0
    %3214 = vmatpush.bf16.msra.mxu0 %v3205
    %3215 = vmatmul.bf16.gmra.mxu0 %v3202
    %v3216 = vpop.f32.mrf.mxu0
    %v3217 = vadd.f32 0.0, %v3216
    %v3218 = vpop.f32.mrf.mxu0
    %3219 = vdwg.mxu0
    %v3221 = vsel %vm583, %v2990, 0
    %v3224 = vsel %vm1147, %v3006, 0
    %3226 = vmatpush.bf16.msra.mxu0 0
    %3227 = vmatpush.bf16.msra.mxu0 0
    %3228 = vmatpush.bf16.msra.mxu0 0
    %3229 = vmatpush.bf16.msra.mxu0 0
    %3230 = vmatpush.bf16.msra.mxu0 0
    %3231 = vmatpush.bf16.msra.mxu0 0
    %3232 = vmatpush.bf16.msra.mxu0 0
    %3233 = vmatpush.bf16.msra.mxu0 %v3224
    %3234 = vmatmul.bf16.gmra.mxu0 %v3221
    %v3235 = vpop.f32.mrf.mxu0
    %v3236 = vadd.f32 0.0, %v3235
    %v3237 = vpop.f32.mrf.mxu0
    %3238 = vdwg.mxu0
    %v3240 = vsel %vm583, %v2991, 0
    %v3243 = vsel %vm1147, %v3007, 0
    %3245 = vmatpush.bf16.msra.mxu0 0
    %3246 = vmatpush.bf16.msra.mxu0 0
    %3247 = vmatpush.bf16.msra.mxu0 0
    %3248 = vmatpush.bf16.msra.mxu0 0
    %3249 = vmatpush.bf16.msra.mxu0 0
    %3250 = vmatpush.bf16.msra.mxu0 0
    %3251 = vmatpush.bf16.msra.mxu0 0
    %3252 = vmatpush.bf16.msra.mxu0 %v3243
    %3253 = vmatmul.bf16.gmra.mxu0 %v3240
    %v3254 = vpop.f32.mrf.mxu0
    %v3255 = vadd.f32 0.0, %v3254
    %v3256 = vpop.f32.mrf.mxu0
    %3257 = vdwg.mxu0
    %v3259 = vsel %vm583, %v2992, 0
    %v3262 = vsel %vm1147, %v3008, 0
    %3264 = vmatpush.bf16.msra.mxu0 0
    %3265 = vmatpush.bf16.msra.mxu0 0
    %3266 = vmatpush.bf16.msra.mxu0 0
    %3267 = vmatpush.bf16.msra.mxu0 0
    %3268 = vmatpush.bf16.msra.mxu0 0
    %3269 = vmatpush.bf16.msra.mxu0 0
    %3270 = vmatpush.bf16.msra.mxu0 0
    %3271 = vmatpush.bf16.msra.mxu0 %v3262
    %3272 = vmatmul.bf16.gmra.mxu0 %v3259
    %v3273 = vpop.f32.mrf.mxu0
    %v3274 = vadd.f32 0.0, %v3273
    %v3275 = vpop.f32.mrf.mxu0
    %3276 = vdwg.mxu0
    %v3278 = vsel %vm583, %v2993, 0
    %v3281 = vsel %vm1147, %v3009, 0
    %3283 = vmatpush.bf16.msra.mxu0 0
    %3284 = vmatpush.bf16.msra.mxu0 0
    %3285 = vmatpush.bf16.msra.mxu0 0
    %3286 = vmatpush.bf16.msra.mxu0 0
    %3287 = vmatpush.bf16.msra.mxu0 0
    %3288 = vmatpush.bf16.msra.mxu0 0
    %3289 = vmatpush.bf16.msra.mxu0 0
    %3290 = vmatpush.bf16.msra.mxu0 %v3281
    %3291 = vmatmul.bf16.gmra.mxu0 %v3278
    %v3292 = vpop.f32.mrf.mxu0
    %v3293 = vadd.f32 0.0, %v3292
    %v3294 = vpop.f32.mrf.mxu0
    %3295 = vdwg.mxu0
    %v3297 = vsel %vm583, %v2994, 0
    %v3300 = vsel %vm1147, %v3010, 0
    %3302 = vmatpush.bf16.msra.mxu0 0
    %3303 = vmatpush.bf16.msra.mxu0 0
    %3304 = vmatpush.bf16.msra.mxu0 0
    %3305 = vmatpush.bf16.msra.mxu0 0
    %3306 = vmatpush.bf16.msra.mxu0 0
    %3307 = vmatpush.bf16.msra.mxu0 0
    %3308 = vmatpush.bf16.msra.mxu0 0
    %3309 = vmatpush.bf16.msra.mxu0 %v3300
    %3310 = vmatmul.bf16.gmra.mxu0 %v3297
    %v3311 = vpop.f32.mrf.mxu0
    %v3312 = vadd.f32 0.0, %v3311
    %v3313 = vpop.f32.mrf.mxu0
    %3314 = vdwg.mxu0
    %3317 = vrot.lane.b32.xlu0 %v3065, 8
    %v3318 = vpop.permute.xlu0 %3317
    %3319 = vrot.lane.b32.xlu0 %v3084, 8
    %v3320 = vpop.permute.xlu0 %3319
    %3325 = vrot.lane.b32.xlu0 %v3103, 16
    %v3326 = vpop.permute.xlu0 %3325
    %3327 = vrot.lane.b32.xlu0 %v3122, 16
    %v3328 = vpop.permute.xlu0 %3327
    %3333 = vrot.lane.b32.xlu0 %v3141, 24
    %v3334 = vpop.permute.xlu0 %3333
    %3335 = vrot.lane.b32.xlu0 %v3160, 24
    %v3336 = vpop.permute.xlu0 %3335
    %3341 = vrot.lane.b32.xlu0 %v3179, 32
    %v3342 = vpop.permute.xlu0 %3341
    %3343 = vrot.lane.b32.xlu0 %v3198, 32
    %v3344 = vpop.permute.xlu0 %3343
    %3349 = vrot.lane.b32.xlu0 %v3217, 40
    %v3350 = vpop.permute.xlu0 %3349
    %3351 = vrot.lane.b32.xlu0 %v3236, 40
    %v3352 = vpop.permute.xlu0 %3351
    %3357 = vrot.lane.b32.xlu0 %v3255, 48
    %v3358 = vpop.permute.xlu0 %3357
    %3359 = vrot.lane.b32.xlu0 %v3274, 48
    %v3360 = vpop.permute.xlu0 %3359
    %3365 = vrot.lane.b32.xlu0 %v3293, 56
    %v3366 = vpop.permute.xlu0 %3365
    %3367 = vrot.lane.b32.xlu0 %v3312, 56
    %v3368 = vpop.permute.xlu0 %3367
    %v3371 = vsel %vm583, %v3027, %v3318
    %v3372 = vsel %vm583, %v3046, %v3320
    %v3373 = vsel %vm1507, %v3371, %v3326
    %v3374 = vsel %vm1507, %v3372, %v3328
    %v3375 = vsel %vm1510, %v3373, %v3334
    %v3376 = vsel %vm1510, %v3374, %v3336
    %v3377 = vsel %vm1513, %v3375, %v3342
    %v3378 = vsel %vm1513, %v3376, %v3344
    %v3379 = vsel %vm1516, %v3377, %v3350
    %v3380 = vsel %vm1516, %v3378, %v3352
    %v3381 = vsel %vm1519, %v3379, %v3358
    %v3382 = vsel %vm1519, %v3380, %v3360
    %v3383 = vsel %vm1522, %v3381, %v3366
    %v3384 = vsel %vm1522, %v3382, %v3368
    %s3385 = scalar_lea.vmem %s5, 32
    %v3386 = vld [vmem:[%s3385] sm:$0xf]
    %v3387 = vld [vmem:[%s3385 + $0x4] sm:$0xf]
    %v3388 = vld [vmem:[%s3385 + $0x8] sm:$0xf]
    %v3389 = vld [vmem:[%s3385 + $0xc] sm:$0xf]
    %v3390 = vld [vmem:[%s3385 + $0x10] sm:$0xf]
    %v3391 = vld [vmem:[%s3385 + $0x14] sm:$0xf]
    %v3392 = vld [vmem:[%s3385 + $0x18] sm:$0xf]
    %v3393 = vld [vmem:[%s3385 + $0x1c] sm:$0xf]
    %v3394 = vpack.c.bf16 %v3384, %v3383
    %v3403 = vunpack.c.l.b16 %v3386
    %v3404 = vunpack.c.l.b16 %v3387
    %v3405 = vunpack.c.l.b16 %v3388
    %v3406 = vunpack.c.l.b16 %v3389
    %v3407 = vunpack.c.l.b16 %v3390
    %v3408 = vunpack.c.l.b16 %v3391
    %v3409 = vunpack.c.l.b16 %v3392
    %v3410 = vunpack.c.l.b16 %v3393
    %v3411 = vpack.c.b16 %v3404, %v3403
    %v3412 = vpack.c.b16 %v3406, %v3405
    %v3413 = vpack.c.b16 %v3408, %v3407
    %v3414 = vpack.c.b16 %v3410, %v3409
    %v3420 = vsel %vm199, %v3394, 0
    %3422 = vmatpush.bf16.msra.mxu0 0
    %3423 = vmatpush.bf16.msra.mxu0 0
    %3424 = vmatpush.bf16.msra.mxu0 0
    %3425 = vmatpush.bf16.msra.mxu0 0
    %3426 = vmatpush.bf16.msra.mxu0 %v3414
    %3427 = vmatpush.bf16.msra.mxu0 %v3413
    %3428 = vmatpush.bf16.msra.mxu0 %v3412
    %3429 = vmatpush.bf16.msra.mxu0 %v3411
    %3430 = vmatmul.bf16.gmra.mxu0 %v3420
    %v3431 = vpop.f32.mrf.mxu0
    %v3432 = vadd.f32 0.0, %v3431
    %v3433 = vpop.f32.mrf.mxu0
    %v3434 = vadd.f32 0.0, %v3433
    %3435 = vdwg.mxu0
    %v3436 = vadd.f32 %v2049, %v3432
    %v3437 = vadd.f32 %v2050, %v3434
    %s3438 = scalar_lea.vmem [#allocation10], 1
    %v3439 = vld [vmem:[%s3438] sm:$0x1]
    %v3441 = vperm.slane %v3439, 0
    %v3443 = vadd.f32 %v3436, %v3441
    %v3444 = vadd.f32 %v3437, %v3441
    %s3445 = scalar_lea.vmem [#allocation11], 1
    %v3446 = vld [vmem:[%s3445] sm:$0x1]
    %s3447 = scalar_lea.vmem [#allocation13], 1
    %v3448 = vld [vmem:[%s3447] sm:$0x1]
    %v3449 = vsel %vm199, %v3443, 0.0
    %3450 = vadd.xlane.f32.xlu0 %v3449
    %v3451 = vpop.xlane.xlu0 %3450
    %v3452 = vsel %vm199, %v3444, 0.0
    %3453 = vadd.xlane.f32.xlu0 %v3452
    %v3454 = vpop.xlane.xlu0 %3453
    %v3455 = vmul.f32 %v3451, %v212
    %v3456 = vmul.f32 %v3454, %v212
    %v3457 = vsub.f32 %v3443, %v3455
    %v3458 = vsub.f32 %v3444, %v3456
    %v3459 = vmul.f32 %v3457, %v3457
    %v3460 = vmul.f32 %v3458, %v3458
    %v3461 = vsel %vm199, %v3459, 0.0
    %3462 = vadd.xlane.f32.xlu0 %v3461
    %v3463 = vpop.xlane.xlu0 %3462
    %v3464 = vsel %vm199, %v3460, 0.0
    %3465 = vadd.xlane.f32.xlu0 %v3464
    %v3466 = vpop.xlane.xlu0 %3465
    %v3467 = vmul.f32 %v3463, %v212
    %v3468 = vmul.f32 %v3466, %v212
    %v3469 = vadd.f32 %v3467, 1e-05
    %v3470 = vadd.f32 %v3468, 1e-05
    %v3471 = vrsqrt.pop %v3469
    %v3472 = vmul.f32 %v3471, %v3469
    %v3473 = vmul.f32 %v3472, %v3471
    %v3474 = vmul.f32 0.5, %v3473
    %v3475 = vsub.f32 1.5, %v3474
    %v3476 = vmul.f32 %v3471, %v3475
    %vm3477 = vweird.f32 %v3469
    %vm3478 = vweird.f32 %v3471
    %vm3479 = vmor %vm3477, %vm3478
    %v3480 = vsel %vm3479, %v3471, %v3476
    %v3481 = vrsqrt.pop %v3470
    %v3482 = vmul.f32 %v3481, %v3470
    %v3483 = vmul.f32 %v3482, %v3481
    %v3484 = vmul.f32 0.5, %v3483
    %v3485 = vsub.f32 1.5, %v3484
    %v3486 = vmul.f32 %v3481, %v3485
    %vm3487 = vweird.f32 %v3470
    %vm3488 = vweird.f32 %v3481
    %vm3489 = vmor %vm3487, %vm3488
    %v3490 = vsel %vm3489, %v3481, %v3486
    %v3491 = vmul.f32 %v3457, %v3480
    %v3492 = vmul.f32 %v3458, %v3490
    %v3494 = vperm.slane %v3446, 0
    %v3496 = vmul.f32 %v3491, %v3494
    %v3497 = vmul.f32 %v3492, %v3494
    %v3499 = vperm.slane %v3448, 0
    %v3501 = vadd.f32 %v3496, %v3499
    %v3502 = vadd.f32 %v3497, %v3499
    %s3503 = scalar_lea.vmem %s9, 64
    %v3504 = vld [vmem:[%s3503] sm:$0xff]
    %v3505 = vld [vmem:[%s3503 + $0x8] sm:$0xff]
    %v3506 = vld [vmem:[%s3503 + $0x10] sm:$0xff]
    %v3507 = vld [vmem:[%s3503 + $0x18] sm:$0xff]
    %v3508 = vld [vmem:[%s3503 + $0x20] sm:$0xff]
    %v3509 = vld [vmem:[%s3503 + $0x28] sm:$0xff]
    %v3510 = vld [vmem:[%s3503 + $0x30] sm:$0xff]
    %v3511 = vld [vmem:[%s3503 + $0x38] sm:$0xff]
    %v3512 = vpack.c.bf16 %v3502, %v3501
    %s3513 = scalar_lea.vmem %s10, 2
    %v3514 = vld [vmem:[%s3513] sm:$0x3]
    %v3516 = vperm.slane %v3514, 0
    %v3517 = vperm.slane %v3514, 1
    %v3528 = vunpack.c.l.b16 %v3504
    %v3529 = vunpack.c.h.b16 %v3504
    %v3530 = vunpack.c.l.b16 %v3505
    %v3531 = vunpack.c.h.b16 %v3505
    %v3532 = vunpack.c.l.b16 %v3506
    %v3533 = vunpack.c.h.b16 %v3506
    %v3534 = vunpack.c.l.b16 %v3507
    %v3535 = vunpack.c.h.b16 %v3507
    %v3536 = vunpack.c.l.b16 %v3508
    %v3537 = vunpack.c.h.b16 %v3508
    %v3538 = vunpack.c.l.b16 %v3509
    %v3539 = vunpack.c.h.b16 %v3509
    %v3540 = vunpack.c.l.b16 %v3510
    %v3541 = vunpack.c.h.b16 %v3510
    %v3542 = vunpack.c.l.b16 %v3511
    %v3543 = vunpack.c.h.b16 %v3511
    %v3544 = vpack.c.b16 %v3530, %v3528
    %v3545 = vpack.c.b16 %v3531, %v3529
    %v3546 = vpack.c.b16 %v3534, %v3532
    %v3547 = vpack.c.b16 %v3535, %v3533
    %v3548 = vpack.c.b16 %v3538, %v3536
    %v3549 = vpack.c.b16 %v3539, %v3537
    %v3550 = vpack.c.b16 %v3542, %v3540
    %v3551 = vpack.c.b16 %v3543, %v3541
    %v3561 = vsel %vm199, %v3512, 0
    %3563 = vmatpush.bf16.msra.mxu0 0
    %3564 = vmatpush.bf16.msra.mxu0 0
    %3565 = vmatpush.bf16.msra.mxu0 0
    %3566 = vmatpush.bf16.msra.mxu0 0
    %3567 = vmatpush.bf16.msra.mxu0 %v3550
    %3568 = vmatpush.bf16.msra.mxu0 %v3548
    %3569 = vmatpush.bf16.msra.mxu0 %v3546
    %3570 = vmatpush.bf16.msra.mxu0 %v3544
    %3571 = vmatmul.bf16.gmra.mxu0 %v3561
    %v3572 = vpop.f32.mrf.mxu0
    %v3573 = vadd.f32 %v3516, %v3572
    %v3574 = vpop.f32.mrf.mxu0
    %v3575 = vadd.f32 %v3516, %v3574
    %3576 = vdwg.mxu0
    %3577 = vmatpush.bf16.msra.mxu0 0
    %3578 = vmatpush.bf16.msra.mxu0 0
    %3579 = vmatpush.bf16.msra.mxu0 0
    %3580 = vmatpush.bf16.msra.mxu0 0
    %3581 = vmatpush.bf16.msra.mxu0 %v3551
    %3582 = vmatpush.bf16.msra.mxu0 %v3549
    %3583 = vmatpush.bf16.msra.mxu0 %v3547
    %3584 = vmatpush.bf16.msra.mxu0 %v3545
    %3585 = vmatmul.bf16.gmra.mxu0 %v3561
    %v3586 = vpop.f32.mrf.mxu0
    %v3587 = vadd.f32 %v3517, %v3586
    %v3588 = vpop.f32.mrf.mxu0
    %v3589 = vadd.f32 %v3517, %v3588
    %3590 = vdwg.mxu0
    %v3591 = vmul.f32 %v3573, 0.5
    %v3592 = vmul.f32 %v3587, 0.5
    %v3593 = vmul.f32 %v3575, 0.5
    %v3594 = vmul.f32 %v3589, 0.5
    %v3595 = vmul.f32 %v3573, 0.70710677
    %v3596 = vmul.f32 %v3587, 0.70710677
    %v3597 = vmul.f32 %v3575, 0.70710677
    %v3598 = vmul.f32 %v3589, 0.70710677
    %vm3599 = vcmp.lt.f32.partialorder %v3595, 0.0
    %vm3600 = vcmp.lt.f32.partialorder %v3596, 0.0
    %vm3601 = vcmp.lt.f32.partialorder %v3597, 0.0
    %vm3602 = vcmp.lt.f32.partialorder %v3598, 0.0
    %v3603 = vsel %vm3599, -1.0, 1.0
    %v3604 = vsel %vm3600, -1.0, 1.0
    %v3605 = vsel %vm3601, -1.0, 1.0
    %v3606 = vsel %vm3602, -1.0, 1.0
    %v3607 = vand.u32 2147483647, %v3595
    %v3608 = vand.u32 2147483647, %v3596
    %v3609 = vand.u32 2147483647, %v3597
    %v3610 = vand.u32 2147483647, %v3598
    %v3611 = vmul.f32 %v3607, 0.3275911
    %v3612 = vmul.f32 %v3608, 0.3275911
    %v3613 = vmul.f32 %v3609, 0.3275911
    %v3614 = vmul.f32 %v3610, 0.3275911
    %v3615 = vadd.f32 %v3611, 1.0
    %v3616 = vadd.f32 %v3612, 1.0
    %v3617 = vadd.f32 %v3613, 1.0
    %v3618 = vadd.f32 %v3614, 1.0
    %v3619 = vrcp.pop %v3615
    %v3620 = vmul.f32 %v3615, %v3619
    %v3621 = vsub.f32 1.0, %v3620
    %v3622 = vmul.f32 %v3619, %v3621
    %v3623 = vadd.f32 %v3619, %v3622
    %vm3624 = vweird.f32 %v3615
    %vm3625 = vweird.f32 %v3619
    %vm3626 = vmor %vm3624, %vm3625
    %v3627 = vsel %vm3626, %v3619, %v3623
    %v3628 = vand.u32 2147483647, %v3615
    %vm3629 = vcmp.eq.f32.partialorder %v3628, 8.507059e+37
    %v3630 = vand.u32 %v3615, 2147483648
    %v3631 = vor.u32 1.1754944e-38, %v3630
    %v3632 = vsel %vm3629, %v3631, %v3627
    %v3633 = vmul.f32 1.0, %v3632
    %v3634 = vrcp.pop %v3616
    %v3635 = vmul.f32 %v3616, %v3634
    %v3636 = vsub.f32 1.0, %v3635
    %v3637 = vmul.f32 %v3634, %v3636
    %v3638 = vadd.f32 %v3634, %v3637
    %vm3639 = vweird.f32 %v3616
    %vm3640 = vweird.f32 %v3634
    %vm3641 = vmor %vm3639, %vm3640
    %v3642 = vsel %vm3641, %v3634, %v3638
    %v3643 = vand.u32 2147483647, %v3616
    %vm3644 = vcmp.eq.f32.partialorder %v3643, 8.507059e+37
    %v3645 = vand.u32 %v3616, 2147483648
    %v3646 = vor.u32 1.1754944e-38, %v3645
    %v3647 = vsel %vm3644, %v3646, %v3642
    %v3648 = vmul.f32 1.0, %v3647
    %v3649 = vrcp.pop %v3617
    %v3650 = vmul.f32 %v3617, %v3649
    %v3651 = vsub.f32 1.0, %v3650
    %v3652 = vmul.f32 %v3649, %v3651
    %v3653 = vadd.f32 %v3649, %v3652
    %vm3654 = vweird.f32 %v3617
    %vm3655 = vweird.f32 %v3649
    %vm3656 = vmor %vm3654, %vm3655
    %v3657 = vsel %vm3656, %v3649, %v3653
    %v3658 = vand.u32 2147483647, %v3617
    %vm3659 = vcmp.eq.f32.partialorder %v3658, 8.507059e+37
    %v3660 = vand.u32 %v3617, 2147483648
    %v3661 = vor.u32 1.1754944e-38, %v3660
    %v3662 = vsel %vm3659, %v3661, %v3657
    %v3663 = vmul.f32 1.0, %v3662
    %v3664 = vrcp.pop %v3618
    %v3665 = vmul.f32 %v3618, %v3664
    %v3666 = vsub.f32 1.0, %v3665
    %v3667 = vmul.f32 %v3664, %v3666
    %v3668 = vadd.f32 %v3664, %v3667
    %vm3669 = vweird.f32 %v3618
    %vm3670 = vweird.f32 %v3664
    %vm3671 = vmor %vm3669, %vm3670
    %v3672 = vsel %vm3671, %v3664, %v3668
    %v3673 = vand.u32 2147483647, %v3618
    %vm3674 = vcmp.eq.f32.partialorder %v3673, 8.507059e+37
    %v3675 = vand.u32 %v3618, 2147483648
    %v3676 = vor.u32 1.1754944e-38, %v3675
    %v3677 = vsel %vm3674, %v3676, %v3672
    %v3678 = vmul.f32 1.0, %v3677
    %v3679 = vmul.f32 %v3633, 1.0614054
    %v3680 = vmul.f32 %v3648, 1.0614054
    %v3681 = vmul.f32 %v3663, 1.0614054
    %v3682 = vmul.f32 %v3678, 1.0614054
    %v3683 = vadd.f32 %v3679, -1.4531521
    %v3684 = vadd.f32 %v3680, -1.4531521
    %v3685 = vadd.f32 %v3681, -1.4531521
    %v3686 = vadd.f32 %v3682, -1.4531521
    %v3687 = vmul.f32 %v3683, %v3633
    %v3688 = vmul.f32 %v3684, %v3648
    %v3689 = vmul.f32 %v3685, %v3663
    %v3690 = vmul.f32 %v3686, %v3678
    %v3691 = vadd.f32 %v3687, 1.4214138
    %v3692 = vadd.f32 %v3688, 1.4214138
    %v3693 = vadd.f32 %v3689, 1.4214138
    %v3694 = vadd.f32 %v3690, 1.4214138
    %v3695 = vmul.f32 %v3691, %v3633
    %v3696 = vmul.f32 %v3692, %v3648
    %v3697 = vmul.f32 %v3693, %v3663
    %v3698 = vmul.f32 %v3694, %v3678
    %v3699 = vadd.f32 %v3695, -0.28449672
    %v3700 = vadd.f32 %v3696, -0.28449672
    %v3701 = vadd.f32 %v3697, -0.28449672
    %v3702 = vadd.f32 %v3698, -0.28449672
    %v3703 = vmul.f32 %v3699, %v3633
    %v3704 = vmul.f32 %v3700, %v3648
    %v3705 = vmul.f32 %v3701, %v3663
    %v3706 = vmul.f32 %v3702, %v3678
    %v3707 = vadd.f32 %v3703, 0.2548296
    %v3708 = vadd.f32 %v3704, 0.2548296
    %v3709 = vadd.f32 %v3705, 0.2548296
    %v3710 = vadd.f32 %v3706, 0.2548296
    %v3711 = vmul.f32 %v3707, %v3633
    %v3712 = vmul.f32 %v3708, %v3648
    %v3713 = vmul.f32 %v3709, %v3663
    %v3714 = vmul.f32 %v3710, %v3678
    %v3715 = vsub.f32 0.0, %v3607
    %v3716 = vsub.f32 0.0, %v3608
    %v3717 = vsub.f32 0.0, %v3609
    %v3718 = vsub.f32 0.0, %v3610
    %v3719 = vmul.f32 %v3715, %v3607
    %v3720 = vmul.f32 %v3716, %v3608
    %v3721 = vmul.f32 %v3717, %v3609
    %v3722 = vmul.f32 %v3718, %v3610
    %v3723 = vmul.f32 %v3719, 1.442695
    %v3724 = vpow.pop %v3723
    %v3725 = vmul.f32 %v3720, 1.442695
    %v3726 = vpow.pop %v3725
    %v3727 = vmul.f32 %v3721, 1.442695
    %v3728 = vpow.pop %v3727
    %v3729 = vmul.f32 %v3722, 1.442695
    %v3730 = vpow.pop %v3729
    %v3731 = vmul.f32 %v3711, %v3724
    %v3732 = vmul.f32 %v3712, %v3726
    %v3733 = vmul.f32 %v3713, %v3728
    %v3734 = vmul.f32 %v3714, %v3730
    %v3735 = vsub.f32 1.0, %v3731
    %v3736 = vsub.f32 1.0, %v3732
    %v3737 = vsub.f32 1.0, %v3733
    %v3738 = vsub.f32 1.0, %v3734
    %v3739 = vmul.f32 %v3603, %v3735
    %v3740 = vmul.f32 %v3604, %v3736
    %v3741 = vmul.f32 %v3605, %v3737
    %v3742 = vmul.f32 %v3606, %v3738
    %v3743 = vadd.f32 %v3739, 1.0
    %v3744 = vadd.f32 %v3740, 1.0
    %v3745 = vadd.f32 %v3741, 1.0
    %v3746 = vadd.f32 %v3742, 1.0
    %v3747 = vmul.f32 %v3591, %v3743
    %v3748 = vmul.f32 %v3592, %v3744
    %v3749 = vmul.f32 %v3593, %v3745
    %v3750 = vmul.f32 %v3594, %v3746
    %s3751 = scalar_lea.vmem %s11, 128
    %v3752 = vld [vmem:[%s3751] sm:$0xf]
    %v3753 = vld [vmem:[%s3751 + $0x4] sm:$0xf]
    %v3754 = vld [vmem:[%s3751 + $0x8] sm:$0xf]
    %v3755 = vld [vmem:[%s3751 + $0xc] sm:$0xf]
    %v3756 = vld [vmem:[%s3751 + $0x10] sm:$0xf]
    %v3757 = vld [vmem:[%s3751 + $0x14] sm:$0xf]
    %v3758 = vld [vmem:[%s3751 + $0x18] sm:$0xf]
    %v3759 = vld [vmem:[%s3751 + $0x1c] sm:$0xf]
    %v3760 = vld [vmem:[%s3751 + $0x20] sm:$0xf]
    %v3761 = vld [vmem:[%s3751 + $0x24] sm:$0xf]
    %v3762 = vld [vmem:[%s3751 + $0x28] sm:$0xf]
    %v3763 = vld [vmem:[%s3751 + $0x2c] sm:$0xf]
    %v3764 = vld [vmem:[%s3751 + $0x30] sm:$0xf]
    %v3765 = vld [vmem:[%s3751 + $0x34] sm:$0xf]
    %v3766 = vld [vmem:[%s3751 + $0x38] sm:$0xf]
    %v3767 = vld [vmem:[%s3751 + $0x3c] sm:$0xf]
    %v3768 = vld [vmem:[%s3751 + $0x40] sm:$0xf]
    %v3769 = vld [vmem:[%s3751 + $0x44] sm:$0xf]
    %v3770 = vld [vmem:[%s3751 + $0x48] sm:$0xf]
    %v3771 = vld [vmem:[%s3751 + $0x4c] sm:$0xf]
    %v3772 = vld [vmem:[%s3751 + $0x50] sm:$0xf]
    %v3773 = vld [vmem:[%s3751 + $0x54] sm:$0xf]
    %v3774 = vld [vmem:[%s3751 + $0x58] sm:$0xf]
    %v3775 = vld [vmem:[%s3751 + $0x5c] sm:$0xf]
    %v3776 = vld [vmem:[%s3751 + $0x60] sm:$0xf]
    %v3777 = vld [vmem:[%s3751 + $0x64] sm:$0xf]
    %v3778 = vld [vmem:[%s3751 + $0x68] sm:$0xf]
    %v3779 = vld [vmem:[%s3751 + $0x6c] sm:$0xf]
    %v3780 = vld [vmem:[%s3751 + $0x70] sm:$0xf]
    %v3781 = vld [vmem:[%s3751 + $0x74] sm:$0xf]
    %v3782 = vld [vmem:[%s3751 + $0x78] sm:$0xf]
    %v3783 = vld [vmem:[%s3751 + $0x7c] sm:$0xf]
    %v3784 = vpack.c.bf16 %v3749, %v3747
    %v3785 = vpack.c.bf16 %v3750, %v3748
    %v3818 = vunpack.c.l.b16 %v3752
    %v3819 = vunpack.c.l.b16 %v3753
    %v3820 = vunpack.c.l.b16 %v3754
    %v3821 = vunpack.c.l.b16 %v3755
    %v3822 = vunpack.c.l.b16 %v3756
    %v3823 = vunpack.c.l.b16 %v3757
    %v3824 = vunpack.c.l.b16 %v3758
    %v3825 = vunpack.c.l.b16 %v3759
    %v3826 = vunpack.c.l.b16 %v3760
    %v3827 = vunpack.c.l.b16 %v3761
    %v3828 = vunpack.c.l.b16 %v3762
    %v3829 = vunpack.c.l.b16 %v3763
    %v3830 = vunpack.c.l.b16 %v3764
    %v3831 = vunpack.c.l.b16 %v3765
    %v3832 = vunpack.c.l.b16 %v3766
    %v3833 = vunpack.c.l.b16 %v3767
    %v3834 = vunpack.c.l.b16 %v3768
    %v3835 = vunpack.c.l.b16 %v3769
    %v3836 = vunpack.c.l.b16 %v3770
    %v3837 = vunpack.c.l.b16 %v3771
    %v3838 = vunpack.c.l.b16 %v3772
    %v3839 = vunpack.c.l.b16 %v3773
    %v3840 = vunpack.c.l.b16 %v3774
    %v3841 = vunpack.c.l.b16 %v3775
    %v3842 = vunpack.c.l.b16 %v3776
    %v3843 = vunpack.c.l.b16 %v3777
    %v3844 = vunpack.c.l.b16 %v3778
    %v3845 = vunpack.c.l.b16 %v3779
    %v3846 = vunpack.c.l.b16 %v3780
    %v3847 = vunpack.c.l.b16 %v3781
    %v3848 = vunpack.c.l.b16 %v3782
    %v3849 = vunpack.c.l.b16 %v3783
    %v3850 = vpack.c.b16 %v3819, %v3818
    %v3851 = vpack.c.b16 %v3821, %v3820
    %v3852 = vpack.c.b16 %v3823, %v3822
    %v3853 = vpack.c.b16 %v3825, %v3824
    %v3854 = vpack.c.b16 %v3827, %v3826
    %v3855 = vpack.c.b16 %v3829, %v3828
    %v3856 = vpack.c.b16 %v3831, %v3830
    %v3857 = vpack.c.b16 %v3833, %v3832
    %v3858 = vpack.c.b16 %v3835, %v3834
    %v3859 = vpack.c.b16 %v3837, %v3836
    %v3860 = vpack.c.b16 %v3839, %v3838
    %v3861 = vpack.c.b16 %v3841, %v3840
    %v3862 = vpack.c.b16 %v3843, %v3842
    %v3863 = vpack.c.b16 %v3845, %v3844
    %v3864 = vpack.c.b16 %v3847, %v3846
    %v3865 = vpack.c.b16 %v3849, %v3848
    %3882 = vmatpush.bf16.msra.mxu0 %v3857
    %3883 = vmatpush.bf16.msra.mxu0 %v3856
    %3884 = vmatpush.bf16.msra.mxu0 %v3855
    %3885 = vmatpush.bf16.msra.mxu0 %v3854
    %3886 = vmatpush.bf16.msra.mxu0 %v3853
    %3887 = vmatpush.bf16.msra.mxu0 %v3852
    %3888 = vmatpush.bf16.msra.mxu0 %v3851
    %3889 = vmatpush.bf16.msra.mxu0 %v3850
    %3890 = vmatmul.bf16.gmra.mxu0 %v3784
    %v3891 = vpop.f32.mrf.mxu0
    %v3892 = vadd.f32 0.0, %v3891
    %v3893 = vpop.f32.mrf.mxu0
    %v3894 = vadd.f32 0.0, %v3893
    %3895 = vdwg.mxu0
    %3896 = vmatpush.bf16.msra.mxu0 %v3865
    %3897 = vmatpush.bf16.msra.mxu0 %v3864
    %3898 = vmatpush.bf16.msra.mxu0 %v3863
    %3899 = vmatpush.bf16.msra.mxu0 %v3862
    %3900 = vmatpush.bf16.msra.mxu0 %v3861
    %3901 = vmatpush.bf16.msra.mxu0 %v3860
    %3902 = vmatpush.bf16.msra.mxu0 %v3859
    %3903 = vmatpush.bf16.msra.mxu0 %v3858
    %3904 = vmatmul.bf16.gmra.mxu0 %v3785
    %v3905 = vpop.f32.mrf.mxu0
    %v3906 = vadd.f32 %v3892, %v3905
    %v3907 = vpop.f32.mrf.mxu0
    %v3908 = vadd.f32 %v3894, %v3907
    %3909 = vdwg.mxu0
    %v3910 = vadd.f32 %v3443, %v3906
    %v3911 = vadd.f32 %v3444, %v3908
    %s3912 = scalar_lea.vmem [#allocation14], 1
    %v3913 = vld [vmem:[%s3912] sm:$0x1]
    %v3915 = vperm.slane %v3913, 0
    %v3917 = vadd.f32 %v3910, %v3915
    %v3918 = vadd.f32 %v3911, %v3915
    %v3919 = vadd.f32 %v2963, 0.0
    %v3920 = vadd.f32 %v2964, 0.0
    %v3921 = vadd.f32 %v3919, %v2965
    %v3922 = vadd.f32 %v3920, %v2966
    %v3923 = vadd.f32 %v3921, %v2967
    %v3924 = vadd.f32 %v3922, %v2968
    %v3925 = vadd.f32 %v3923, %v2969
    %v3926 = vadd.f32 %v3924, %v2970
    %v3927 = vadd.f32 %v3925, %v2971
    %v3928 = vadd.f32 %v3926, %v2972
    %v3929 = vadd.f32 %v3927, %v2973
    %v3930 = vadd.f32 %v3928, %v2974
    %v3931 = vadd.f32 %v3929, %v2975
    %v3932 = vadd.f32 %v3930, %v2976
    %v3933 = vadd.f32 %v3931, %v2977
    %v3934 = vadd.f32 %v3932, %v2978
    %v3935 = vmul.f32 %v3933, 0.125
    %v3936 = vmul.f32 %v3934, 0.125
    %3937 = vst.msk [vmem:[#allocation18] sm:$0xff] %vm583, %v2067
    %3938 = vst.msk [vmem:[#allocation18 + $0x8] sm:$0xff] %vm583, %v2068
    %3939 = vst.msk [vmem:[#allocation18 + $0x10] sm:$0xff] %vm583, %v3935
    %3940 = vst.msk [vmem:[#allocation18 + $0x18] sm:$0xff] %vm583, %v3936
    %v3941 = vld [vmem:[#allocation16] sm:$0xff]
    %v3942 = vld [vmem:[#allocation16 + $0x8] sm:$0xff]
    %v3943 = vld [vmem:[#allocation16 + $0x10] sm:$0xff]
    %v3944 = vld [vmem:[#allocation16 + $0x18] sm:$0xff]
    %v3945 = vld [vmem:[#allocation16 + $0x20] sm:$0xff]
    %v3946 = vld [vmem:[#allocation16 + $0x28] sm:$0xff]
    %v3947 = vld [vmem:[#allocation16 + $0x30] sm:$0xff]
    %v3948 = vld [vmem:[#allocation16 + $0x38] sm:$0xff]
    %v3949 = vld [vmem:[#allocation16 + $0x40] sm:$0xff]
    %v3950 = vld [vmem:[#allocation16 + $0x48] sm:$0xff]
    %v3951 = vld [vmem:[#allocation16 + $0x50] sm:$0xff]
    %v3952 = vld [vmem:[#allocation16 + $0x58] sm:$0xff]
    %v3953 = vld [vmem:[#allocation16 + $0x60] sm:$0xff]
    %v3954 = vld [vmem:[#allocation16 + $0x68] sm:$0xff]
    %v3955 = vld [vmem:[#allocation16 + $0x70] sm:$0xff]
    %v3956 = vld [vmem:[#allocation16 + $0x78] sm:$0xff]
    %v3957 = vpack.c.bf16 %v3917, %v3917
    %v3958 = vpack.c.bf16 %v3918, %v3918
    %v3959 = vld [vmem:[%s14] sm:$0xf]
    %v3961 = vperm.slane %v3959, 0
    %v3962 = vperm.slane %v3959, 1
    %v3963 = vperm.slane %v3959, 2
    %v3964 = vperm.slane %v3959, 3
    %v3971 = vunpack.c.l.b16 %v3957
    %v3972 = vunpack.c.l.b16 %v3958
    %v3973 = vrot.slane %v3972, 7
    %vm3974 = vcmask 1041409
    %v3975 = vsel %vm3974, %v3973, %v3971
    %v3976 = vpack.c.b16 %v3975, %v3975
    %v3993 = vunpack.c.l.b16 %v3941
    %v3994 = vunpack.c.h.b16 %v3941
    %v3995 = vunpack.c.l.b16 %v3942
    %v3996 = vunpack.c.h.b16 %v3942
    %v3997 = vunpack.c.l.b16 %v3943
    %v3998 = vunpack.c.h.b16 %v3943
    %v3999 = vunpack.c.l.b16 %v3944
    %v4000 = vunpack.c.h.b16 %v3944
    %v4001 = vunpack.c.l.b16 %v3945
    %v4002 = vunpack.c.h.b16 %v3945
    %v4003 = vunpack.c.l.b16 %v3946
    %v4004 = vunpack.c.h.b16 %v3946
    %v4005 = vunpack.c.l.b16 %v3947
    %v4006 = vunpack.c.h.b16 %v3947
    %v4007 = vunpack.c.l.b16 %v3948
    %v4008 = vunpack.c.h.b16 %v3948
    %v4009 = vunpack.c.l.b16 %v3949
    %v4010 = vunpack.c.h.b16 %v3949
    %v4011 = vunpack.c.l.b16 %v3950
    %v4012 = vunpack.c.h.b16 %v3950
    %v4013 = vunpack.c.l.b16 %v3951
    %v4014 = vunpack.c.h.b16 %v3951
    %v4015 = vunpack.c.l.b16 %v3952
    %v4016 = vunpack.c.h.b16 %v3952
    %v4017 = vunpack.c.l.b16 %v3953
    %v4018 = vunpack.c.h.b16 %v3953
    %v4019 = vunpack.c.l.b16 %v3954
    %v4020 = vunpack.c.h.b16 %v3954
    %v4021 = vunpack.c.l.b16 %v3955
    %v4022 = vunpack.c.h.b16 %v3955
    %v4023 = vunpack.c.l.b16 %v3956
    %v4024 = vunpack.c.h.b16 %v3956
    %v4025 = vpack.c.b16 %v3997, %v3993
    %v4026 = vpack.c.b16 %v3998, %v3994
    %v4027 = vpack.c.b16 %v3999, %v3995
    %v4028 = vpack.c.b16 %v4000, %v3996
    %v4029 = vpack.c.b16 %v4005, %v4001
    %v4030 = vpack.c.b16 %v4006, %v4002
    %v4031 = vpack.c.b16 %v4007, %v4003
    %v4032 = vpack.c.b16 %v4008, %v4004
    %v4033 = vpack.c.b16 %v4013, %v4009
    %v4034 = vpack.c.b16 %v4014, %v4010
    %v4035 = vpack.c.b16 %v4015, %v4011
    %v4036 = vpack.c.b16 %v4016, %v4012
    %v4037 = vpack.c.b16 %v4021, %v4017
    %v4038 = vpack.c.b16 %v4022, %v4018
    %v4039 = vpack.c.b16 %v4023, %v4019
    %v4040 = vpack.c.b16 %v4024, %v4020
    %v4058 = vsel %vm199, %v3976, 0
    %4060 = vmatpush.bf16.msra.mxu0 0
    %4061 = vmatpush.bf16.msra.mxu0 0
    %4062 = vmatpush.bf16.msra.mxu0 0
    %4063 = vmatpush.bf16.msra.mxu0 0
    %4064 = vmatpush.bf16.msra.mxu0 %v4037
    %4065 = vmatpush.bf16.msra.mxu0 %v4033
    %4066 = vmatpush.bf16.msra.mxu0 %v4029
    %4067 = vmatpush.bf16.msra.mxu0 %v4025
    %4068 = vmatmul.bf16.gmra.mxu0 %v4058
    %v4069 = vpop.f32.mrf.mxu0
    %v4070 = vadd.f32 %v3961, %v4069
    %v4071 = vpop.f32.mrf.mxu0
    %4072 = vdwg.mxu0
    %4073 = vmatpush.bf16.msra.mxu0 0
    %4074 = vmatpush.bf16.msra.mxu0 0
    %4075 = vmatpush.bf16.msra.mxu0 0
    %4076 = vmatpush.bf16.msra.mxu0 0
    %4077 = vmatpush.bf16.msra.mxu0 %v4038
    %4078 = vmatpush.bf16.msra.mxu0 %v4034
    %4079 = vmatpush.bf16.msra.mxu0 %v4030
    %4080 = vmatpush.bf16.msra.mxu0 %v4026
    %4081 = vmatmul.bf16.gmra.mxu0 %v4058
    %v4082 = vpop.f32.mrf.mxu0
    %v4083 = vadd.f32 %v3962, %v4082
    %v4084 = vpop.f32.mrf.mxu0
    %4085 = vdwg.mxu0
    %4086 = vmatpush.bf16.msra.mxu0 0
    %4087 = vmatpush.bf16.msra.mxu0 0
    %4088 = vmatpush.bf16.msra.mxu0 0
    %4089 = vmatpush.bf16.msra.mxu0 0
    %4090 = vmatpush.bf16.msra.mxu0 %v4039
    %4091 = vmatpush.bf16.msra.mxu0 %v4035
    %4092 = vmatpush.bf16.msra.mxu0 %v4031
    %4093 = vmatpush.bf16.msra.mxu0 %v4027
    %4094 = vmatmul.bf16.gmra.mxu0 %v4058
    %v4095 = vpop.f32.mrf.mxu0
    %v4096 = vadd.f32 %v3963, %v4095
    %v4097 = vpop.f32.mrf.mxu0
    %4098 = vdwg.mxu0
    %4099 = vmatpush.bf16.msra.mxu0 0
    %4100 = vmatpush.bf16.msra.mxu0 0
    %4101 = vmatpush.bf16.msra.mxu0 0
    %4102 = vmatpush.bf16.msra.mxu0 0
    %4103 = vmatpush.bf16.msra.mxu0 %v4040
    %4104 = vmatpush.bf16.msra.mxu0 %v4036
    %4105 = vmatpush.bf16.msra.mxu0 %v4032
    %4106 = vmatpush.bf16.msra.mxu0 %v4028
    %4107 = vmatmul.bf16.gmra.mxu0 %v4058
    %v4108 = vpop.f32.mrf.mxu0
    %v4109 = vadd.f32 %v3964, %v4108
    %v4110 = vpop.f32.mrf.mxu0
    %4111 = vdwg.mxu0
    %v4116 = vrot.slane %v4083, 6
    %v4117 = vrot.slane %v4096, 4
    %v4118 = vrot.slane %v4109, 2
    %vm4119 = vcmask 1041408
    %v4120 = vsel %vm4119, %v4070, %v4116
    %vm4121 = vcmask 1045508
    %v4122 = vsel %vm4121, %v4117, %v4118
    %v4123 = vsel %vm1147, %v4120, %v4122
    %4125 = vst [vmem:[#allocation17] sm:$0xff] %v4123
    // Predicated region
    $region98: #{tpu_custom_call.1} parent=1 // pred_check
      _
    $region99: #{tpu_custom_call.1} parent=1 // pred_check_branch
      %4127 = sbr.rel (0) target = $region101
    $region100: #{tpu_custom_call.1} parent=1 // pred_region
      %4129 = vsyncadd [#allocation4], 0
      %s4131 = sshll.u32 [#allocation17], 4
      %s4132 = int_to_ptr.vmem [resolvable:$true] %s4131
      %s4133 = sshll.u32 %s15, 4
      %s4134 = int_to_ptr.hbm [resolvable:$true] %s4133
      %4136 = dma.vmem_to_hbm [thread:$0]  %s4132, 128, %s4134, [#allocation4]
    $region101: #{tpu_custom_call.1} parent=1 // pred_fallthru
      _
    // Predicated region
    $region102: #{tpu_custom_call.1} parent=1 // pred_check
      _
    $region103: #{tpu_custom_call.1} parent=1 // pred_check_branch
      %4138 = sbr.rel (0) target = $region105
    $region104: #{tpu_custom_call.1} parent=1 // pred_region
      %4140 = vsyncadd [#allocation19], 0
      %s4141 = sshll.u32 [#allocation18], 4
      %s4142 = int_to_ptr.vmem [resolvable:$true] %s4141
      %s4143 = sshll.u32 %s16, 4
      %s4144 = int_to_ptr.hbm [resolvable:$true] %s4143
      %4149 = dma.vmem_to_hbm [thread:$0]  %s4142, 512, %s4144, [#allocation19], 128, 128, 8
    $region105: #{tpu_custom_call.1} parent=1 // pred_fallthru
      _
    // Predicated region
    $region106: #{tpu_custom_call.1} parent=1 // pred_check
      _
    $region107: #{tpu_custom_call.1} parent=1 // pred_check_branch
      %4151 = sbr.rel (0) target = $region109
    $region108: #{tpu_custom_call.1} parent=1 // pred_region
      %4153 = dma.done [#allocation4], 128
    $region109: #{tpu_custom_call.1} parent=1 // pred_fallthru
      _
    // Predicated region
    $region110: #{tpu_custom_call.1} parent=1 // pred_check
      _
    $region111: #{tpu_custom_call.1} parent=1 // pred_check_branch
      %4155 = sbr.rel (0) target = $region113
    $region112: #{tpu_custom_call.1} parent=1 // pred_region
      %4157 = dma.done [#allocation19], 512
    $region113: #{tpu_custom_call.1} parent=1 // pred_fallthru
      _
    %4158 = vsyncpa [#allocation3], 1
    %4159 = vsyncpa [#allocation6], 1
    %4160 = vsyncpa [#allocation9], 1
    %4161 = vsyncpa [#allocation12], 1
    %4162 = vsyncpa [#allocation15], 1
    %4163 = vsyncpa [#allocation4], 1
    %4164 = vsyncpa [#allocation19], 1

</llo_original>
